<compile_context>
chip_gen: v7x
topology: tpu7x:2x2x1
jax: 0.10.0
libtpu: 0.0.40
codegen_flags: <defaults>
</compile_context>

<pallas_src>
import jax
import jax.numpy as jnp
from jax.experimental import pallas as pl
from jax.experimental.pallas import tpu as pltpu


def _round_up(x, m):
    return ((x + m - 1) // m) * m


# ----------------------------- Pallas kernels ------------------------------

def _matmul_affine_relu_kernel(x_ref, w_ref, scale_ref, bias_ref, o_ref, acc_ref):
    # Tiled (tm,tk)@(tk,tn) on the MXU with f32 VMEM accumulator over the K grid
    # axis; epilogue applies folded BN affine + ReLU in f32 and stores bf16.
    @pl.when(pl.program_id(2) == 0)
    def _init():
        acc_ref[...] = jnp.zeros_like(acc_ref)

    acc_ref[...] += jnp.dot(x_ref[...], w_ref[...],
                            preferred_element_type=jnp.float32)

    @pl.when(pl.program_id(2) == pl.num_programs(2) - 1)
    def _finalize():
        y = acc_ref[...] * scale_ref[...] + bias_ref[...]
        o_ref[...] = jnp.maximum(y, 0.0).astype(o_ref.dtype)


def _fused_block_kernel(x_ref, w1_ref, s1_ref, b1_ref, w2_ref, s2_ref, b2_ref,
                        o_ref):
    # Two 1x1 conv + BN + ReLU fused: the intermediate never touches HBM.
    h = jnp.dot(x_ref[...], w1_ref[...], preferred_element_type=jnp.float32)
    h = jnp.maximum(h * s1_ref[...] + b1_ref[...], 0.0)
    y = jnp.dot(h.astype(w2_ref.dtype), w2_ref[...],
                preferred_element_type=jnp.float32)
    y = jnp.maximum(y * s2_ref[...] + b2_ref[...], 0.0)
    o_ref[...] = y.astype(o_ref.dtype)


def _maxpool_kernel(x_ref, o_ref):
    # Running max over the 3x3 tap axis (grid axis 1); output block resident.
    t = pl.program_id(1)

    @pl.when(t == 0)
    def _init():
        o_ref[...] = jnp.full_like(o_ref, -jnp.inf)

    o_ref[...] = jnp.maximum(o_ref[...], x_ref[0])


def _avgpool_fc_kernel(x_ref, w_ref, b_ref, o_ref):
    # Adaptive avg pool to (1,1) == mean over HW (f32), then FC on the MXU.
    xm = jnp.mean(x_ref[...].astype(jnp.float32), axis=1)
    out = jnp.dot(xm.astype(w_ref.dtype), w_ref[...],
                  preferred_element_type=jnp.float32) + b_ref[...]
    o_ref[...] = out.astype(o_ref.dtype)


# ----------------------------- kernel wrappers ------------------------------

def matmul_affine_relu(x, w, scale, bias):
    """(M,Kx) @ (Kw,Nc) with folded BN affine + ReLU. Pads M/K/N to tile
    multiples (K,N lane-dense) and returns (M, Np) bf16 with Np=round_up(Nc,128)
    channel padding kept (padded channels are exact zeros)."""
    M, Kx = x.shape
    Kw, Nc = w.shape
    K = max(Kx, Kw)
    tm = min(512, _round_up(M, 16))
    tn = min(512, _round_up(Nc, 128))
    tk = min(512, _round_up(K, 128))
    Mp, Np, Kp = _round_up(M, tm), _round_up(Nc, tn), _round_up(K, tk)

    xp = jnp.pad(x.astype(jnp.bfloat16), ((0, Mp - M), (0, Kp - Kx)))
    wp = jnp.pad(w.astype(jnp.bfloat16), ((0, Kp - Kw), (0, Np - Nc)))
    sp = jnp.pad(scale.astype(jnp.float32), (0, Np - Nc)).reshape(1, Np)
    bp = jnp.pad(bias.astype(jnp.float32), (0, Np - Nc)).reshape(1, Np)

    out = pl.pallas_call(
        _matmul_affine_relu_kernel,
        out_shape=jax.ShapeDtypeStruct((Mp, Np), jnp.bfloat16),
        grid=(Mp // tm, Np // tn, Kp // tk),
        in_specs=[pl.BlockSpec((tm, tk), lambda i, j, k: (i, k)),
                  pl.BlockSpec((tk, tn), lambda i, j, k: (k, j)),
                  pl.BlockSpec((1, tn), lambda i, j, k: (0, j)),
                  pl.BlockSpec((1, tn), lambda i, j, k: (0, j))],
        out_specs=pl.BlockSpec((tm, tn), lambda i, j, k: (i, j)),
        scratch_shapes=[pltpu.VMEM((tm, tn), jnp.float32)],
        compiler_params=pltpu.CompilerParams(
            dimension_semantics=("parallel", "parallel", "arbitrary")),
    )(xp, wp, sp, bp)
    return out[:M]


def fused_block(x, w1, sc1, bi1, w2, sc2, bi2, stride):
    """One ResNet 'block' (two 1x1 conv+BN+ReLU, both with `stride`) as a
    single pallas_call. x is NHWC bf16 with channels padded to 128-multiple."""
    ss = stride * stride
    # TODO(synk): fold this spatial subsample into the kernel index_map instead
    # of an XLA strided slice (extra HBM pass for strided layers).
    xs = x[:, ::ss, ::ss, :]
    N, OH, OW, Cp = xs.shape
    M = N * OH * OW

    cin, cmid = w1.shape
    cout = w2.shape[1]
    Cmid_p = _round_up(cmid, 128)
    Cout_p = _round_up(cout, 128)

    w1p = jnp.pad(w1.astype(jnp.bfloat16), ((0, Cp - cin), (0, Cmid_p - cmid)))
    w2p = jnp.pad(w2.astype(jnp.bfloat16), ((0, Cmid_p - cmid), (0, Cout_p - cout)))
    s1p = jnp.pad(sc1.astype(jnp.float32), (0, Cmid_p - cmid)).reshape(1, Cmid_p)
    b1p = jnp.pad(bi1.astype(jnp.float32), (0, Cmid_p - cmid)).reshape(1, Cmid_p)
    s2p = jnp.pad(sc2.astype(jnp.float32), (0, Cout_p - cout)).reshape(1, Cout_p)
    b2p = jnp.pad(bi2.astype(jnp.float32), (0, Cout_p - cout)).reshape(1, Cout_p)

    tm = min(512, _round_up(M, 16))
    Mp = _round_up(M, tm)
    xr = jnp.pad(xs.reshape(M, Cp), ((0, Mp - M), (0, 0)))

    out = pl.pallas_call(
        _fused_block_kernel,
        out_shape=jax.ShapeDtypeStruct((Mp, Cout_p), jnp.bfloat16),
        grid=(Mp // tm,),
        in_specs=[pl.BlockSpec((tm, Cp), lambda i: (i, 0)),
                  pl.BlockSpec((Cp, Cmid_p), lambda i: (0, 0)),
                  pl.BlockSpec((1, Cmid_p), lambda i: (0, 0)),
                  pl.BlockSpec((1, Cmid_p), lambda i: (0, 0)),
                  pl.BlockSpec((Cmid_p, Cout_p), lambda i: (0, 0)),
                  pl.BlockSpec((1, Cout_p), lambda i: (0, 0)),
                  pl.BlockSpec((1, Cout_p), lambda i: (0, 0))],
        out_specs=pl.BlockSpec((tm, Cout_p), lambda i: (i, 0)),
        compiler_params=pltpu.CompilerParams(
            dimension_semantics=("parallel",)),
    )(xr, w1p, s1p, b1p, w2p, s2p, b2p)
    return out[:M].reshape(N, OH, OW, Cout_p)


def maxpool_3x3_s2_p1(x):
    """3x3 stride-2 pad-1 max pool on NHWC (channels already lane-dense)."""
    N, H, W, C = x.shape
    xp = jnp.pad(x, ((0, 0), (1, 1), (1, 1), (0, 0)),
                 constant_values=-jnp.inf)
    OH = (H + 2 - 3) // 2 + 1
    OW = (W + 2 - 3) // 2 + 1
    # TODO(synk): the 9 taps are still materialized in HBM; a strided-window
    # index_map would let the kernel read the padded input directly.
    wins = []
    for ki in range(3):
        for kj in range(3):
            wins.append(jax.lax.slice(
                xp, (0, ki, kj, 0),
                (N, ki + 2 * (OH - 1) + 1, kj + 2 * (OW - 1) + 1, C),
                (1, 2, 2, 1)))
    M = N * OH * OW
    stacked = jnp.stack(wins, axis=0).reshape(9, M, C)

    tm = min(512, _round_up(M, 16))
    Mp = _round_up(M, tm)
    stacked = jnp.pad(stacked, ((0, 0), (0, Mp - M), (0, 0)))

    out = pl.pallas_call(
        _maxpool_kernel,
        out_shape=jax.ShapeDtypeStruct((Mp, C), x.dtype),
        grid=(Mp // tm, 9),
        in_specs=[pl.BlockSpec((1, tm, C), lambda i, t: (t, i, 0))],
        out_specs=pl.BlockSpec((tm, C), lambda i, t: (i, 0)),
        compiler_params=pltpu.CompilerParams(
            dimension_semantics=("parallel", "arbitrary")),
    )(stacked)
    return out[:M].reshape(N, OH, OW, C)


def avgpool_fc(x, w, b):
    """x: (N, HW, C) bf16 -> mean over HW -> FC. Output f32, lane-dense then
    sliced back to the real class count."""
    N, HW, C = x.shape
    Cw, NC = w.shape
    NCp = _round_up(NC, 128)
    wp = jnp.pad(w.astype(jnp.bfloat16), ((0, C - Cw), (0, NCp - NC)))
    bp = jnp.pad(b.astype(jnp.float32), (0, NCp - NC)).reshape(1, NCp)

    out = pl.pallas_call(
        _avgpool_fc_kernel,
        out_shape=jax.ShapeDtypeStruct((N, NCp), jnp.float32),
        grid=(1,),
        in_specs=[pl.BlockSpec((N, HW, C), lambda i: (0, 0, 0)),
                  pl.BlockSpec((C, NCp), lambda i: (0, 0)),
                  pl.BlockSpec((1, NCp), lambda i: (0, 0))],
        out_specs=pl.BlockSpec((N, NCp), lambda i: (0, 0)),
    )(x, wp, bp)
    return out[:, :NC]


# ------------------------------- JAX glue -----------------------------------

def _im2col(x, kernel, stride, pad):
    # x: NHWC bf16; returns (N*OH*OW, k*k*C) with (ki, kj, c) fast-axis order.
    # TODO(synk): conv1 still materializes the k*k im2col patches in HBM; a
    # per-tap reduction grid with strided index maps would keep it virtual.
    N, H, W, C = x.shape
    xp = jnp.pad(x, ((0, 0), (pad, pad), (pad, pad), (0, 0)))
    Hp, Wp = H + 2 * pad, W + 2 * pad
    OH = (Hp - kernel) // stride + 1
    OW = (Wp - kernel) // stride + 1
    cols = []
    for ki in range(kernel):
        for kj in range(kernel):
            cols.append(jax.lax.slice(
                xp, (0, ki, kj, 0),
                (N, ki + stride * (OH - 1) + 1, kj + stride * (OW - 1) + 1, C),
                (1, stride, stride, 1)))
    patches = jnp.stack(cols, axis=3)                    # (N, OH, OW, k*k, C)
    return patches.reshape(N * OH * OW, kernel * kernel * C), (N, OH, OW)


def conv2d_bn_relu(x, w, scale, bias, kernel, stride, pad):
    cols, (N, OH, OW) = _im2col(x, kernel, stride, pad)
    y = matmul_affine_relu(cols, w, scale, bias)         # (M, Cout_p) bf16
    return y.reshape(N, OH, OW, -1)


# ----------------------------- parameter init -------------------------------

def make_params(key, num_classes=1000, eps=1e-5):
    # BatchNorm is eval-mode only: running stats + conv bias folded into a
    # per-channel affine (scale, bias).
    keys = iter(jax.random.split(key, 64))

    def conv_bn(cin, cout, k):
        w = jax.random.normal(next(keys), (k, k, cin, cout), jnp.float32) * 0.05
        cb = jax.random.normal(next(keys), (cout,), jnp.float32) * 0.05
        gamma = 1.0 + 0.1 * jax.random.normal(next(keys), (cout,), jnp.float32)
        beta = 0.1 * jax.random.normal(next(keys), (cout,), jnp.float32)
        rmean = 0.1 * jax.random.normal(next(keys), (cout,), jnp.float32)
        rvar = 1.0 + 0.1 * jnp.abs(jax.random.normal(next(keys), (cout,), jnp.float32))
        scale = gamma / jnp.sqrt(rvar + eps)
        bias = beta + (cb - rmean) * scale
        return w.reshape(k * k * cin, cout), scale, bias

    def block(cin, cout, stride):
        w1, s1, b1 = conv_bn(cin, cout, 1)
        w2, s2, b2 = conv_bn(cout, cout, 1)
        return {'w1': w1, 's1': s1, 'b1': b1,
                'w2': w2, 's2': s2, 'b2': b2, 'stride': stride}

    c1w, c1s, c1b = conv_bn(3, 64, 7)
    params = {
        'conv1': {'w': c1w, 'scale': c1s, 'bias': c1b},
        'layer1': block(64, 64, 1),
        'layer2': block(64, 128, 2),
        'layer3': block(128, 256, 2),
        'layer4': block(256, 512, 2),
        'fc': {
            'w': jax.random.normal(next(keys), (512, num_classes), jnp.float32) * 0.02,
            'b': jax.random.normal(next(keys), (num_classes,), jnp.float32) * 0.02,
        },
    }
    return params


# ------------------------------- forward ------------------------------------

def resnet_forward(x_nchw, params):
    x = jnp.transpose(x_nchw, (0, 2, 3, 1)).astype(jnp.bfloat16)   # NCHW -> NHWC
    # conv1 + bn1 + relu (output channels kept padded 64 -> 128, zeros in pad)
    p = params['conv1']
    x = conv2d_bn_relu(x, p['w'], p['scale'], p['bias'], kernel=7, stride=3, pad=2)
    # maxpool 3x3 s2 p1
    x = maxpool_3x3_s2_p1(x)
    # layer1..layer4: each block = two 1x1 conv+BN+ReLU fused in one kernel
    for name in ('layer1', 'layer2', 'layer3', 'layer4'):
        p = params[name]
        x = fused_block(x, p['w1'], p['s1'], p['b1'],
                        p['w2'], p['s2'], p['b2'], p['stride'])
    # adaptive avgpool to (1,1) + flatten + fc  (C == 512 real == padded)
    N, H, W, C = x.shape
    return avgpool_fc(x.reshape(N, H * W, C), params['fc']['w'], params['fc']['b'])


if __name__ == "__main__":
    key = jax.random.PRNGKey(0)
    pkey, xkey = jax.random.split(key)
    params = make_params(pkey, num_classes=1000)
    x = jax.random.normal(xkey, (2, 3, 16, 16), jnp.float32)   # NCHW, like PyTorch
    fwd = jax.jit(lambda inp: resnet_forward(inp, params))
    out = jax.block_until_ready(fwd(x))
    assert out.shape == (2, 1000) and out.dtype == jnp.float32
    print("KERNEL_OK")
</pallas_src>

<mosaic_0001>
module attributes {stable_mosaic.version = 11 : i64} {
  func.func @_matmul_affine_relu_kernel(%arg0: i32, %arg1: i32, %arg2: i32, %arg3: memref<64x256xbf16, #tpu.memory_space<vmem>>, %arg4: memref<256x128xbf16, #tpu.memory_space<vmem>>, %arg5: memref<1x128xf32, #tpu.memory_space<vmem>>, %arg6: memref<1x128xf32, #tpu.memory_space<vmem>>, %arg7: memref<64x128xbf16, #tpu.memory_space<vmem>>, %arg8: memref<64x128xf32, #tpu.memory_space<vmem>>) attributes {dimension_semantics = [#tpu.dimension_semantics<parallel>, #tpu.dimension_semantics<parallel>, #tpu.dimension_semantics<arbitrary>], iteration_bounds = array<i64: 1, 1, 1>, scalar_prefetch = 0 : i64, scratch_operands = 1 : i64, tpu.core_type = #tpu.core_type<tc>, window_params = [{transform_indices = @transform_0, window_bounds = array<i64: 64, 256>}, {transform_indices = @transform_1, window_bounds = array<i64: 256, 128>}, {transform_indices = @transform_2, window_bounds = array<i64: 1, 128>}, {transform_indices = @transform_3, window_bounds = array<i64: 1, 128>}, {transform_indices = @transform_4, window_bounds = array<i64: 64, 128>}]} {
    %c0_i32 = arith.constant 0 : i32
    %0 = arith.cmpi eq, %arg2, %c0_i32 : i32
    %1 = arith.extui %0 : i1 to i32
    %c0_i32_0 = arith.constant 0 : i32
    %2 = arith.cmpi ne, %1, %c0_i32_0 : i32
    scf.if %2 {
      %cst_10 = arith.constant 0.000000e+00 : f32
      %12 = vector.broadcast %cst_10 : f32 to vector<64x128xf32>
      %c0_11 = arith.constant 0 : index
      %c0_12 = arith.constant 0 : index
      %13 = vector.load %arg8[%c0_11, %c0_12] : memref<64x128xf32, #tpu.memory_space<vmem>>, vector<64x128xf32>
      tpu.vector_store %arg8[%c0_11, %c0_12], %12 {strides = array<i32>} : memref<64x128xf32, #tpu.memory_space<vmem>>, vector<64x128xf32>,
    } else {
    }
    %c0 = arith.constant 0 : index
    %c0_1 = arith.constant 0 : index
    %3 = vector.load %arg8[%c0, %c0_1] : memref<64x128xf32, #tpu.memory_space<vmem>>, vector<64x128xf32>
    %c0_2 = arith.constant 0 : index
    %c0_3 = arith.constant 0 : index
    %4 = vector.load %arg3[%c0_2, %c0_3] : memref<64x256xbf16, #tpu.memory_space<vmem>>, vector<64x256xbf16>
    %c0_4 = arith.constant 0 : index
    %c0_5 = arith.constant 0 : index
    %5 = vector.load %arg4[%c0_4, %c0_5] : memref<256x128xbf16, #tpu.memory_space<vmem>>, vector<256x128xbf16>
    %cst = arith.constant dense<0.000000e+00> : vector<64x128xf32>
    %6 = tpu.matmul %4, %5, %cst {dimension_numbers = #tpu.dot_dimension_numbers<[1], [0], [0], [1], [0, 0, 1, 1], [], []>} : vector<64x256xbf16>, vector<256x128xbf16>, vector<64x128xf32> -> vector<64x128xf32>
    %7 = arith.addf %3, %6 : vector<64x128xf32>
    %c0_6 = arith.constant 0 : index
    %c0_7 = arith.constant 0 : index
    %8 = vector.load %arg8[%c0_6, %c0_7] : memref<64x128xf32, #tpu.memory_space<vmem>>, vector<64x128xf32>
    tpu.vector_store %arg8[%c0_6, %c0_7], %7 {strides = array<i32>} : memref<64x128xf32, #tpu.memory_space<vmem>>, vector<64x128xf32>,
    %c0_i32_8 = arith.constant 0 : i32
    %9 = arith.cmpi eq, %arg2, %c0_i32_8 : i32
    %10 = arith.extui %9 : i1 to i32
    %c0_i32_9 = arith.constant 0 : i32
    %11 = arith.cmpi ne, %10, %c0_i32_9 : i32
    scf.if %11 {
      %c0_10 = arith.constant 0 : index
      %c0_11 = arith.constant 0 : index
      %12 = vector.load %arg8[%c0_10, %c0_11] : memref<64x128xf32, #tpu.memory_space<vmem>>, vector<64x128xf32>
      %c0_12 = arith.constant 0 : index
      %c0_13 = arith.constant 0 : index
      %13 = vector.load %arg5[%c0_12, %c0_13] : memref<1x128xf32, #tpu.memory_space<vmem>>, vector<1x128xf32>
      %14 = vector.broadcast %13 : vector<1x128xf32> to vector<64x128xf32>
      %15 = arith.mulf %12, %14 : vector<64x128xf32>
      %c0_14 = arith.constant 0 : index
      %c0_15 = arith.constant 0 : index
      %16 = vector.load %arg6[%c0_14, %c0_15] : memref<1x128xf32, #tpu.memory_space<vmem>>, vector<1x128xf32>
      %17 = vector.broadcast %16 : vector<1x128xf32> to vector<64x128xf32>
      %18 = arith.addf %15, %17 : vector<64x128xf32>
      %cst_16 = arith.constant 0.000000e+00 : f32
      %19 = vector.broadcast %cst_16 : f32 to vector<64x128xf32>
      %20 = arith.maximumf %18, %19 : vector<64x128xf32>
      %21 = arith.truncf %20 : vector<64x128xf32> to vector<64x128xbf16>
      %c0_17 = arith.constant 0 : index
      %c0_18 = arith.constant 0 : index
      %22 = vector.load %arg7[%c0_17, %c0_18] : memref<64x128xbf16, #tpu.memory_space<vmem>>, vector<64x128xbf16>
      tpu.vector_store %arg7[%c0_17, %c0_18], %21 {strides = array<i32>} : memref<64x128xbf16, #tpu.memory_space<vmem>>, vector<64x128xbf16>,
    } else {
    }
    return
  }
  func.func @transform_0(%arg0: i32, %arg1: i32, %arg2: i32) -> (i32, i32) {
    %c0_i32 = arith.constant 0 : i32
    return %arg0, %arg2 : i32, i32
  }
  func.func @transform_1(%arg0: i32, %arg1: i32, %arg2: i32) -> (i32, i32) {
    %c0_i32 = arith.constant 0 : i32
    return %arg2, %arg1 : i32, i32
  }
  func.func @transform_2(%arg0: i32, %arg1: i32, %arg2: i32) -> (i32, i32) {
    %c0_i32 = arith.constant 0 : i32
    %c0_i32_0 = arith.constant 0 : i32
    return %c0_i32, %arg1 : i32, i32
  }
  func.func @transform_3(%arg0: i32, %arg1: i32, %arg2: i32) -> (i32, i32) {
    %c0_i32 = arith.constant 0 : i32
    %c0_i32_0 = arith.constant 0 : i32
    return %c0_i32, %arg1 : i32, i32
  }
  func.func @transform_4(%arg0: i32, %arg1: i32, %arg2: i32) -> (i32, i32) {
    %c0_i32 = arith.constant 0 : i32
    return %arg0, %arg1 : i32, i32
  }
}

module attributes {stable_mosaic.version = 11 : i64} {
  func.func @_maxpool_kernel(%arg0: i32, %arg1: i32, %arg2: memref<1x32x128xbf16, #tpu.memory_space<vmem>>, %arg3: memref<32x128xbf16, #tpu.memory_space<vmem>>) attributes {dimension_semantics = [#tpu.dimension_semantics<parallel>, #tpu.dimension_semantics<arbitrary>], iteration_bounds = array<i64: 1, 9>, scalar_prefetch = 0 : i64, scratch_operands = 0 : i64, tpu.core_type = #tpu.core_type<tc>, window_params = [{transform_indices = @transform_0, window_bounds = array<i64: 1, 32, 128>}, {transform_indices = @transform_1, window_bounds = array<i64: 32, 128>}]} {
    %c0_i32 = arith.constant 0 : i32
    %0 = arith.cmpi eq, %arg1, %c0_i32 : i32
    %1 = arith.extui %0 : i1 to i32
    %c0_i32_0 = arith.constant 0 : i32
    %2 = arith.cmpi ne, %1, %c0_i32_0 : i32
    scf.if %2 {
      %cst = arith.constant 0xFF80 : bf16
      %8 = vector.broadcast %cst : bf16 to vector<32x128xbf16>
      %c0_7 = arith.constant 0 : index
      %c0_8 = arith.constant 0 : index
      %9 = vector.load %arg3[%c0_7, %c0_8] : memref<32x128xbf16, #tpu.memory_space<vmem>>, vector<32x128xbf16>
      tpu.vector_store %arg3[%c0_7, %c0_8], %8 {strides = array<i32>} : memref<32x128xbf16, #tpu.memory_space<vmem>>, vector<32x128xbf16>,
    } else {
    }
    %c0 = arith.constant 0 : index
    %c0_1 = arith.constant 0 : index
    %3 = vector.load %arg3[%c0, %c0_1] : memref<32x128xbf16, #tpu.memory_space<vmem>>, vector<32x128xbf16>
    %c0_2 = arith.constant 0 : index
    %c0_3 = arith.constant 0 : index
    %c0_4 = arith.constant 0 : index
    %4 = vector.load %arg2[%c0_2, %c0_3, %c0_4] : memref<1x32x128xbf16, #tpu.memory_space<vmem>>, vector<1x32x128xbf16>
    %5 = vector.shape_cast %4 : vector<1x32x128xbf16> to vector<32x128xbf16>
    %6 = arith.maximumf %3, %5 : vector<32x128xbf16>
    %c0_5 = arith.constant 0 : index
    %c0_6 = arith.constant 0 : index
    %7 = vector.load %arg3[%c0_5, %c0_6] : memref<32x128xbf16, #tpu.memory_space<vmem>>, vector<32x128xbf16>
    tpu.vector_store %arg3[%c0_5, %c0_6], %6 {strides = array<i32>} : memref<32x128xbf16, #tpu.memory_space<vmem>>, vector<32x128xbf16>,
    return
  }
  func.func @transform_0(%arg0: i32, %arg1: i32) -> (i32, i32, i32) {
    %c0_i32 = arith.constant 0 : i32
    %c0_i32_0 = arith.constant 0 : i32
    return %arg1, %arg0, %c0_i32 : i32, i32, i32
  }
  func.func @transform_1(%arg0: i32, %arg1: i32) -> (i32, i32) {
    %c0_i32 = arith.constant 0 : i32
    %c0_i32_0 = arith.constant 0 : i32
    return %arg0, %c0_i32 : i32, i32
  }
}

module attributes {stable_mosaic.version = 11 : i64} {
  func.func @_fused_block_kernel(%arg0: i32, %arg1: memref<32x128xbf16, #tpu.memory_space<vmem>>, %arg2: memref<128x128xbf16, #tpu.memory_space<vmem>>, %arg3: memref<1x128xf32, #tpu.memory_space<vmem>>, %arg4: memref<1x128xf32, #tpu.memory_space<vmem>>, %arg5: memref<128x128xbf16, #tpu.memory_space<vmem>>, %arg6: memref<1x128xf32, #tpu.memory_space<vmem>>, %arg7: memref<1x128xf32, #tpu.memory_space<vmem>>, %arg8: memref<32x128xbf16, #tpu.memory_space<vmem>>) attributes {dimension_semantics = [#tpu.dimension_semantics<parallel>], iteration_bounds = array<i64: 1>, scalar_prefetch = 0 : i64, scratch_operands = 0 : i64, tpu.core_type = #tpu.core_type<tc>, window_params = [{transform_indices = @transform_0, window_bounds = array<i64: 32, 128>}, {pipeline_mode = #tpu.pipeline_mode<synchronous>, transform_indices = @transform_1, window_bounds = array<i64: 128, 128>}, {pipeline_mode = #tpu.pipeline_mode<synchronous>, transform_indices = @transform_2, window_bounds = array<i64: 1, 128>}, {pipeline_mode = #tpu.pipeline_mode<synchronous>, transform_indices = @transform_3, window_bounds = array<i64: 1, 128>}, {pipeline_mode = #tpu.pipeline_mode<synchronous>, transform_indices = @transform_4, window_bounds = array<i64: 128, 128>}, {pipeline_mode = #tpu.pipeline_mode<synchronous>, transform_indices = @transform_5, window_bounds = array<i64: 1, 128>}, {pipeline_mode = #tpu.pipeline_mode<synchronous>, transform_indices = @transform_6, window_bounds = array<i64: 1, 128>}, {transform_indices = @transform_7, window_bounds = array<i64: 32, 128>}]} {
    %c0 = arith.constant 0 : index
    %c0_0 = arith.constant 0 : index
    %0 = vector.load %arg1[%c0, %c0_0] : memref<32x128xbf16, #tpu.memory_space<vmem>>, vector<32x128xbf16>
    %c0_1 = arith.constant 0 : index
    %c0_2 = arith.constant 0 : index
    %1 = vector.load %arg2[%c0_1, %c0_2] : memref<128x128xbf16, #tpu.memory_space<vmem>>, vector<128x128xbf16>
    %cst = arith.constant dense<0.000000e+00> : vector<32x128xf32>
    %2 = tpu.matmul %0, %1, %cst {dimension_numbers = #tpu.dot_dimension_numbers<[1], [0], [0], [1], [0, 0, 1, 1], [], []>} : vector<32x128xbf16>, vector<128x128xbf16>, vector<32x128xf32> -> vector<32x128xf32>
    %c0_3 = arith.constant 0 : index
    %c0_4 = arith.constant 0 : index
    %3 = vector.load %arg3[%c0_3, %c0_4] : memref<1x128xf32, #tpu.memory_space<vmem>>, vector<1x128xf32>
    %4 = vector.broadcast %3 : vector<1x128xf32> to vector<32x128xf32>
    %5 = arith.mulf %2, %4 : vector<32x128xf32>
    %c0_5 = arith.constant 0 : index
    %c0_6 = arith.constant 0 : index
    %6 = vector.load %arg4[%c0_5, %c0_6] : memref<1x128xf32, #tpu.memory_space<vmem>>, vector<1x128xf32>
    %7 = vector.broadcast %6 : vector<1x128xf32> to vector<32x128xf32>
    %8 = arith.addf %5, %7 : vector<32x128xf32>
    %cst_7 = arith.constant 0.000000e+00 : f32
    %9 = vector.broadcast %cst_7 : f32 to vector<32x128xf32>
    %10 = arith.maximumf %8, %9 : vector<32x128xf32>
    %11 = arith.truncf %10 : vector<32x128xf32> to vector<32x128xbf16>
    %c0_8 = arith.constant 0 : index
    %c0_9 = arith.constant 0 : index
    %12 = vector.load %arg5[%c0_8, %c0_9] : memref<128x128xbf16, #tpu.memory_space<vmem>>, vector<128x128xbf16>
    %cst_10 = arith.constant dense<0.000000e+00> : vector<32x128xf32>
    %13 = tpu.matmul %11, %12, %cst_10 {dimension_numbers = #tpu.dot_dimension_numbers<[1], [0], [0], [1], [0, 0, 1, 1], [], []>} : vector<32x128xbf16>, vector<128x128xbf16>, vector<32x128xf32> -> vector<32x128xf32>
    %c0_11 = arith.constant 0 : index
    %c0_12 = arith.constant 0 : index
    %14 = vector.load %arg6[%c0_11, %c0_12] : memref<1x128xf32, #tpu.memory_space<vmem>>, vector<1x128xf32>
    %15 = vector.broadcast %14 : vector<1x128xf32> to vector<32x128xf32>
    %16 = arith.mulf %13, %15 : vector<32x128xf32>
    %c0_13 = arith.constant 0 : index
    %c0_14 = arith.constant 0 : index
    %17 = vector.load %arg7[%c0_13, %c0_14] : memref<1x128xf32, #tpu.memory_space<vmem>>, vector<1x128xf32>
    %18 = vector.broadcast %17 : vector<1x128xf32> to vector<32x128xf32>
    %19 = arith.addf %16, %18 : vector<32x128xf32>
    %cst_15 = arith.constant 0.000000e+00 : f32
    %20 = vector.broadcast %cst_15 : f32 to vector<32x128xf32>
    %21 = arith.maximumf %19, %20 : vector<32x128xf32>
    %22 = arith.truncf %21 : vector<32x128xf32> to vector<32x128xbf16>
    %c0_16 = arith.constant 0 : index
    %c0_17 = arith.constant 0 : index
    %23 = vector.load %arg8[%c0_16, %c0_17] : memref<32x128xbf16, #tpu.memory_space<vmem>>, vector<32x128xbf16>
    tpu.vector_store %arg8[%c0_16, %c0_17], %22 {strides = array<i32>} : memref<32x128xbf16, #tpu.memory_space<vmem>>, vector<32x128xbf16>,
    return
  }
  func.func @transform_0(%arg0: i32) -> (i32, i32) {
    %c0_i32 = arith.constant 0 : i32
    %c0_i32_0 = arith.constant 0 : i32
    return %arg0, %c0_i32 : i32, i32
  }
  func.func @transform_1(%arg0: i32) -> (i32, i32) {
    %c0_i32 = arith.constant 0 : i32
    %c0_i32_0 = arith.constant 0 : i32
    %c0_i32_1 = arith.constant 0 : i32
    return %c0_i32, %c0_i32_0 : i32, i32
  }
  func.func @transform_2(%arg0: i32) -> (i32, i32) {
    %c0_i32 = arith.constant 0 : i32
    %c0_i32_0 = arith.constant 0 : i32
    %c0_i32_1 = arith.constant 0 : i32
    return %c0_i32, %c0_i32_0 : i32, i32
  }
  func.func @transform_3(%arg0: i32) -> (i32, i32) {
    %c0_i32 = arith.constant 0 : i32
    %c0_i32_0 = arith.constant 0 : i32
    %c0_i32_1 = arith.constant 0 : i32
    return %c0_i32, %c0_i32_0 : i32, i32
  }
  func.func @transform_4(%arg0: i32) -> (i32, i32) {
    %c0_i32 = arith.constant 0 : i32
    %c0_i32_0 = arith.constant 0 : i32
    %c0_i32_1 = arith.constant 0 : i32
    return %c0_i32, %c0_i32_0 : i32, i32
  }
  func.func @transform_5(%arg0: i32) -> (i32, i32) {
    %c0_i32 = arith.constant 0 : i32
    %c0_i32_0 = arith.constant 0 : i32
    %c0_i32_1 = arith.constant 0 : i32
    return %c0_i32, %c0_i32_0 : i32, i32
  }
  func.func @transform_6(%arg0: i32) -> (i32, i32) {
    %c0_i32 = arith.constant 0 : i32
    %c0_i32_0 = arith.constant 0 : i32
    %c0_i32_1 = arith.constant 0 : i32
    return %c0_i32, %c0_i32_0 : i32, i32
  }
  func.func @transform_7(%arg0: i32) -> (i32, i32) {
    %c0_i32 = arith.constant 0 : i32
    %c0_i32_0 = arith.constant 0 : i32
    return %arg0, %c0_i32 : i32, i32
  }
}

module attributes {stable_mosaic.version = 11 : i64} {
  func.func @_fused_block_kernel(%arg0: i32, %arg1: memref<16x128xbf16, #tpu.memory_space<vmem>>, %arg2: memref<128x128xbf16, #tpu.memory_space<vmem>>, %arg3: memref<1x128xf32, #tpu.memory_space<vmem>>, %arg4: memref<1x128xf32, #tpu.memory_space<vmem>>, %arg5: memref<128x128xbf16, #tpu.memory_space<vmem>>, %arg6: memref<1x128xf32, #tpu.memory_space<vmem>>, %arg7: memref<1x128xf32, #tpu.memory_space<vmem>>, %arg8: memref<16x128xbf16, #tpu.memory_space<vmem>>) attributes {dimension_semantics = [#tpu.dimension_semantics<parallel>], iteration_bounds = array<i64: 1>, scalar_prefetch = 0 : i64, scratch_operands = 0 : i64, tpu.core_type = #tpu.core_type<tc>, window_params = [{transform_indices = @transform_0, window_bounds = array<i64: 16, 128>}, {pipeline_mode = #tpu.pipeline_mode<synchronous>, transform_indices = @transform_1, window_bounds = array<i64: 128, 128>}, {pipeline_mode = #tpu.pipeline_mode<synchronous>, transform_indices = @transform_2, window_bounds = array<i64: 1, 128>}, {pipeline_mode = #tpu.pipeline_mode<synchronous>, transform_indices = @transform_3, window_bounds = array<i64: 1, 128>}, {pipeline_mode = #tpu.pipeline_mode<synchronous>, transform_indices = @transform_4, window_bounds = array<i64: 128, 128>}, {pipeline_mode = #tpu.pipeline_mode<synchronous>, transform_indices = @transform_5, window_bounds = array<i64: 1, 128>}, {pipeline_mode = #tpu.pipeline_mode<synchronous>, transform_indices = @transform_6, window_bounds = array<i64: 1, 128>}, {transform_indices = @transform_7, window_bounds = array<i64: 16, 128>}]} {
    %c0 = arith.constant 0 : index
    %c0_0 = arith.constant 0 : index
    %0 = vector.load %arg1[%c0, %c0_0] : memref<16x128xbf16, #tpu.memory_space<vmem>>, vector<16x128xbf16>
    %c0_1 = arith.constant 0 : index
    %c0_2 = arith.constant 0 : index
    %1 = vector.load %arg2[%c0_1, %c0_2] : memref<128x128xbf16, #tpu.memory_space<vmem>>, vector<128x128xbf16>
    %cst = arith.constant dense<0.000000e+00> : vector<16x128xf32>
    %2 = tpu.matmul %0, %1, %cst {dimension_numbers = #tpu.dot_dimension_numbers<[1], [0], [0], [1], [0, 0, 1, 1], [], []>} : vector<16x128xbf16>, vector<128x128xbf16>, vector<16x128xf32> -> vector<16x128xf32>
    %c0_3 = arith.constant 0 : index
    %c0_4 = arith.constant 0 : index
    %3 = vector.load %arg3[%c0_3, %c0_4] : memref<1x128xf32, #tpu.memory_space<vmem>>, vector<1x128xf32>
    %4 = vector.broadcast %3 : vector<1x128xf32> to vector<16x128xf32>
    %5 = arith.mulf %2, %4 : vector<16x128xf32>
    %c0_5 = arith.constant 0 : index
    %c0_6 = arith.constant 0 : index
    %6 = vector.load %arg4[%c0_5, %c0_6] : memref<1x128xf32, #tpu.memory_space<vmem>>, vector<1x128xf32>
    %7 = vector.broadcast %6 : vector<1x128xf32> to vector<16x128xf32>
    %8 = arith.addf %5, %7 : vector<16x128xf32>
    %cst_7 = arith.constant 0.000000e+00 : f32
    %9 = vector.broadcast %cst_7 : f32 to vector<16x128xf32>
    %10 = arith.maximumf %8, %9 : vector<16x128xf32>
    %11 = arith.truncf %10 : vector<16x128xf32> to vector<16x128xbf16>
    %c0_8 = arith.constant 0 : index
    %c0_9 = arith.constant 0 : index
    %12 = vector.load %arg5[%c0_8, %c0_9] : memref<128x128xbf16, #tpu.memory_space<vmem>>, vector<128x128xbf16>
    %cst_10 = arith.constant dense<0.000000e+00> : vector<16x128xf32>
    %13 = tpu.matmul %11, %12, %cst_10 {dimension_numbers = #tpu.dot_dimension_numbers<[1], [0], [0], [1], [0, 0, 1, 1], [], []>} : vector<16x128xbf16>, vector<128x128xbf16>, vector<16x128xf32> -> vector<16x128xf32>
    %c0_11 = arith.constant 0 : index
    %c0_12 = arith.constant 0 : index
    %14 = vector.load %arg6[%c0_11, %c0_12] : memref<1x128xf32, #tpu.memory_space<vmem>>, vector<1x128xf32>
    %15 = vector.broadcast %14 : vector<1x128xf32> to vector<16x128xf32>
    %16 = arith.mulf %13, %15 : vector<16x128xf32>
    %c0_13 = arith.constant 0 : index
    %c0_14 = arith.constant 0 : index
    %17 = vector.load %arg7[%c0_13, %c0_14] : memref<1x128xf32, #tpu.memory_space<vmem>>, vector<1x128xf32>
    %18 = vector.broadcast %17 : vector<1x128xf32> to vector<16x128xf32>
    %19 = arith.addf %16, %18 : vector<16x128xf32>
    %cst_15 = arith.constant 0.000000e+00 : f32
    %20 = vector.broadcast %cst_15 : f32 to vector<16x128xf32>
    %21 = arith.maximumf %19, %20 : vector<16x128xf32>
    %22 = arith.truncf %21 : vector<16x128xf32> to vector<16x128xbf16>
    %c0_16 = arith.constant 0 : index
    %c0_17 = arith.constant 0 : index
    %23 = vector.load %arg8[%c0_16, %c0_17] : memref<16x128xbf16, #tpu.memory_space<vmem>>, vector<16x128xbf16>
    tpu.vector_store %arg8[%c0_16, %c0_17], %22 {strides = array<i32>} : memref<16x128xbf16, #tpu.memory_space<vmem>>, vector<16x128xbf16>,
    return
  }
  func.func @transform_0(%arg0: i32) -> (i32, i32) {
    %c0_i32 = arith.constant 0 : i32
    %c0_i32_0 = arith.constant 0 : i32
    return %arg0, %c0_i32 : i32, i32
  }
  func.func @transform_1(%arg0: i32) -> (i32, i32) {
    %c0_i32 = arith.constant 0 : i32
    %c0_i32_0 = arith.constant 0 : i32
    %c0_i32_1 = arith.constant 0 : i32
    return %c0_i32, %c0_i32_0 : i32, i32
  }
  func.func @transform_2(%arg0: i32) -> (i32, i32) {
    %c0_i32 = arith.constant 0 : i32
    %c0_i32_0 = arith.constant 0 : i32
    %c0_i32_1 = arith.constant 0 : i32
    return %c0_i32, %c0_i32_0 : i32, i32
  }
  func.func @transform_3(%arg0: i32) -> (i32, i32) {
    %c0_i32 = arith.constant 0 : i32
    %c0_i32_0 = arith.constant 0 : i32
    %c0_i32_1 = arith.constant 0 : i32
    return %c0_i32, %c0_i32_0 : i32, i32
  }
  func.func @transform_4(%arg0: i32) -> (i32, i32) {
    %c0_i32 = arith.constant 0 : i32
    %c0_i32_0 = arith.constant 0 : i32
    %c0_i32_1 = arith.constant 0 : i32
    return %c0_i32, %c0_i32_0 : i32, i32
  }
  func.func @transform_5(%arg0: i32) -> (i32, i32) {
    %c0_i32 = arith.constant 0 : i32
    %c0_i32_0 = arith.constant 0 : i32
    %c0_i32_1 = arith.constant 0 : i32
    return %c0_i32, %c0_i32_0 : i32, i32
  }
  func.func @transform_6(%arg0: i32) -> (i32, i32) {
    %c0_i32 = arith.constant 0 : i32
    %c0_i32_0 = arith.constant 0 : i32
    %c0_i32_1 = arith.constant 0 : i32
    return %c0_i32, %c0_i32_0 : i32, i32
  }
  func.func @transform_7(%arg0: i32) -> (i32, i32) {
    %c0_i32 = arith.constant 0 : i32
    %c0_i32_0 = arith.constant 0 : i32
    return %arg0, %c0_i32 : i32, i32
  }
}

module attributes {stable_mosaic.version = 11 : i64} {
  func.func @_fused_block_kernel(%arg0: i32, %arg1: memref<16x128xbf16, #tpu.memory_space<vmem>>, %arg2: memref<128x256xbf16, #tpu.memory_space<vmem>>, %arg3: memref<1x256xf32, #tpu.memory_space<vmem>>, %arg4: memref<1x256xf32, #tpu.memory_space<vmem>>, %arg5: memref<256x256xbf16, #tpu.memory_space<vmem>>, %arg6: memref<1x256xf32, #tpu.memory_space<vmem>>, %arg7: memref<1x256xf32, #tpu.memory_space<vmem>>, %arg8: memref<16x256xbf16, #tpu.memory_space<vmem>>) attributes {dimension_semantics = [#tpu.dimension_semantics<parallel>], iteration_bounds = array<i64: 1>, scalar_prefetch = 0 : i64, scratch_operands = 0 : i64, tpu.core_type = #tpu.core_type<tc>, window_params = [{transform_indices = @transform_0, window_bounds = array<i64: 16, 128>}, {pipeline_mode = #tpu.pipeline_mode<synchronous>, transform_indices = @transform_1, window_bounds = array<i64: 128, 256>}, {pipeline_mode = #tpu.pipeline_mode<synchronous>, transform_indices = @transform_2, window_bounds = array<i64: 1, 256>}, {pipeline_mode = #tpu.pipeline_mode<synchronous>, transform_indices = @transform_3, window_bounds = array<i64: 1, 256>}, {pipeline_mode = #tpu.pipeline_mode<synchronous>, transform_indices = @transform_4, window_bounds = array<i64: 256, 256>}, {pipeline_mode = #tpu.pipeline_mode<synchronous>, transform_indices = @transform_5, window_bounds = array<i64: 1, 256>}, {pipeline_mode = #tpu.pipeline_mode<synchronous>, transform_indices = @transform_6, window_bounds = array<i64: 1, 256>}, {transform_indices = @transform_7, window_bounds = array<i64: 16, 256>}]} {
    %c0 = arith.constant 0 : index
    %c0_0 = arith.constant 0 : index
    %0 = vector.load %arg1[%c0, %c0_0] : memref<16x128xbf16, #tpu.memory_space<vmem>>, vector<16x128xbf16>
    %c0_1 = arith.constant 0 : index
    %c0_2 = arith.constant 0 : index
    %1 = vector.load %arg2[%c0_1, %c0_2] : memref<128x256xbf16, #tpu.memory_space<vmem>>, vector<128x256xbf16>
    %cst = arith.constant dense<0.000000e+00> : vector<16x256xf32>
    %2 = tpu.matmul %0, %1, %cst {dimension_numbers = #tpu.dot_dimension_numbers<[1], [0], [0], [1], [0, 0, 1, 1], [], []>} : vector<16x128xbf16>, vector<128x256xbf16>, vector<16x256xf32> -> vector<16x256xf32>
    %c0_3 = arith.constant 0 : index
    %c0_4 = arith.constant 0 : index
    %3 = vector.load %arg3[%c0_3, %c0_4] : memref<1x256xf32, #tpu.memory_space<vmem>>, vector<1x256xf32>
    %4 = vector.broadcast %3 : vector<1x256xf32> to vector<16x256xf32>
    %5 = arith.mulf %2, %4 : vector<16x256xf32>
    %c0_5 = arith.constant 0 : index
    %c0_6 = arith.constant 0 : index
    %6 = vector.load %arg4[%c0_5, %c0_6] : memref<1x256xf32, #tpu.memory_space<vmem>>, vector<1x256xf32>
    %7 = vector.broadcast %6 : vector<1x256xf32> to vector<16x256xf32>
    %8 = arith.addf %5, %7 : vector<16x256xf32>
    %cst_7 = arith.constant 0.000000e+00 : f32
    %9 = vector.broadcast %cst_7 : f32 to vector<16x256xf32>
    %10 = arith.maximumf %8, %9 : vector<16x256xf32>
    %11 = arith.truncf %10 : vector<16x256xf32> to vector<16x256xbf16>
    %c0_8 = arith.constant 0 : index
    %c0_9 = arith.constant 0 : index
    %12 = vector.load %arg5[%c0_8, %c0_9] : memref<256x256xbf16, #tpu.memory_space<vmem>>, vector<256x256xbf16>
    %cst_10 = arith.constant dense<0.000000e+00> : vector<16x256xf32>
    %13 = tpu.matmul %11, %12, %cst_10 {dimension_numbers = #tpu.dot_dimension_numbers<[1], [0], [0], [1], [0, 0, 1, 1], [], []>} : vector<16x256xbf16>, vector<256x256xbf16>, vector<16x256xf32> -> vector<16x256xf32>
    %c0_11 = arith.constant 0 : index
    %c0_12 = arith.constant 0 : index
    %14 = vector.load %arg6[%c0_11, %c0_12] : memref<1x256xf32, #tpu.memory_space<vmem>>, vector<1x256xf32>
    %15 = vector.broadcast %14 : vector<1x256xf32> to vector<16x256xf32>
    %16 = arith.mulf %13, %15 : vector<16x256xf32>
    %c0_13 = arith.constant 0 : index
    %c0_14 = arith.constant 0 : index
    %17 = vector.load %arg7[%c0_13, %c0_14] : memref<1x256xf32, #tpu.memory_space<vmem>>, vector<1x256xf32>
    %18 = vector.broadcast %17 : vector<1x256xf32> to vector<16x256xf32>
    %19 = arith.addf %16, %18 : vector<16x256xf32>
    %cst_15 = arith.constant 0.000000e+00 : f32
    %20 = vector.broadcast %cst_15 : f32 to vector<16x256xf32>
    %21 = arith.maximumf %19, %20 : vector<16x256xf32>
    %22 = arith.truncf %21 : vector<16x256xf32> to vector<16x256xbf16>
    %c0_16 = arith.constant 0 : index
    %c0_17 = arith.constant 0 : index
    %23 = vector.load %arg8[%c0_16, %c0_17] : memref<16x256xbf16, #tpu.memory_space<vmem>>, vector<16x256xbf16>
    tpu.vector_store %arg8[%c0_16, %c0_17], %22 {strides = array<i32>} : memref<16x256xbf16, #tpu.memory_space<vmem>>, vector<16x256xbf16>,
    return
  }
  func.func @transform_0(%arg0: i32) -> (i32, i32) {
    %c0_i32 = arith.constant 0 : i32
    %c0_i32_0 = arith.constant 0 : i32
    return %arg0, %c0_i32 : i32, i32
  }
  func.func @transform_1(%arg0: i32) -> (i32, i32) {
    %c0_i32 = arith.constant 0 : i32
    %c0_i32_0 = arith.constant 0 : i32
    %c0_i32_1 = arith.constant 0 : i32
    return %c0_i32, %c0_i32_0 : i32, i32
  }
  func.func @transform_2(%arg0: i32) -> (i32, i32) {
    %c0_i32 = arith.constant 0 : i32
    %c0_i32_0 = arith.constant 0 : i32
    %c0_i32_1 = arith.constant 0 : i32
    return %c0_i32, %c0_i32_0 : i32, i32
  }
  func.func @transform_3(%arg0: i32) -> (i32, i32) {
    %c0_i32 = arith.constant 0 : i32
    %c0_i32_0 = arith.constant 0 : i32
    %c0_i32_1 = arith.constant 0 : i32
    return %c0_i32, %c0_i32_0 : i32, i32
  }
  func.func @transform_4(%arg0: i32) -> (i32, i32) {
    %c0_i32 = arith.constant 0 : i32
    %c0_i32_0 = arith.constant 0 : i32
    %c0_i32_1 = arith.constant 0 : i32
    return %c0_i32, %c0_i32_0 : i32, i32
  }
  func.func @transform_5(%arg0: i32) -> (i32, i32) {
    %c0_i32 = arith.constant 0 : i32
    %c0_i32_0 = arith.constant 0 : i32
    %c0_i32_1 = arith.constant 0 : i32
    return %c0_i32, %c0_i32_0 : i32, i32
  }
  func.func @transform_6(%arg0: i32) -> (i32, i32) {
    %c0_i32 = arith.constant 0 : i32
    %c0_i32_0 = arith.constant 0 : i32
    %c0_i32_1 = arith.constant 0 : i32
    return %c0_i32, %c0_i32_0 : i32, i32
  }
  func.func @transform_7(%arg0: i32) -> (i32, i32) {
    %c0_i32 = arith.constant 0 : i32
    %c0_i32_0 = arith.constant 0 : i32
    return %arg0, %c0_i32 : i32, i32
  }
}

module attributes {stable_mosaic.version = 11 : i64} {
  func.func @_fused_block_kernel(%arg0: i32, %arg1: memref<16x256xbf16, #tpu.memory_space<vmem>>, %arg2: memref<256x512xbf16, #tpu.memory_space<vmem>>, %arg3: memref<1x512xf32, #tpu.memory_space<vmem>>, %arg4: memref<1x512xf32, #tpu.memory_space<vmem>>, %arg5: memref<512x512xbf16, #tpu.memory_space<vmem>>, %arg6: memref<1x512xf32, #tpu.memory_space<vmem>>, %arg7: memref<1x512xf32, #tpu.memory_space<vmem>>, %arg8: memref<16x512xbf16, #tpu.memory_space<vmem>>) attributes {dimension_semantics = [#tpu.dimension_semantics<parallel>], iteration_bounds = array<i64: 1>, scalar_prefetch = 0 : i64, scratch_operands = 0 : i64, tpu.core_type = #tpu.core_type<tc>, window_params = [{transform_indices = @transform_0, window_bounds = array<i64: 16, 256>}, {pipeline_mode = #tpu.pipeline_mode<synchronous>, transform_indices = @transform_1, window_bounds = array<i64: 256, 512>}, {pipeline_mode = #tpu.pipeline_mode<synchronous>, transform_indices = @transform_2, window_bounds = array<i64: 1, 512>}, {pipeline_mode = #tpu.pipeline_mode<synchronous>, transform_indices = @transform_3, window_bounds = array<i64: 1, 512>}, {pipeline_mode = #tpu.pipeline_mode<synchronous>, transform_indices = @transform_4, window_bounds = array<i64: 512, 512>}, {pipeline_mode = #tpu.pipeline_mode<synchronous>, transform_indices = @transform_5, window_bounds = array<i64: 1, 512>}, {pipeline_mode = #tpu.pipeline_mode<synchronous>, transform_indices = @transform_6, window_bounds = array<i64: 1, 512>}, {transform_indices = @transform_7, window_bounds = array<i64: 16, 512>}]} {
    %c0 = arith.constant 0 : index
    %c0_0 = arith.constant 0 : index
    %0 = vector.load %arg1[%c0, %c0_0] : memref<16x256xbf16, #tpu.memory_space<vmem>>, vector<16x256xbf16>
    %c0_1 = arith.constant 0 : index
    %c0_2 = arith.constant 0 : index
    %1 = vector.load %arg2[%c0_1, %c0_2] : memref<256x512xbf16, #tpu.memory_space<vmem>>, vector<256x512xbf16>
    %cst = arith.constant dense<0.000000e+00> : vector<16x512xf32>
    %2 = tpu.matmul %0, %1, %cst {dimension_numbers = #tpu.dot_dimension_numbers<[1], [0], [0], [1], [0, 0, 1, 1], [], []>} : vector<16x256xbf16>, vector<256x512xbf16>, vector<16x512xf32> -> vector<16x512xf32>
    %c0_3 = arith.constant 0 : index
    %c0_4 = arith.constant 0 : index
    %3 = vector.load %arg3[%c0_3, %c0_4] : memref<1x512xf32, #tpu.memory_space<vmem>>, vector<1x512xf32>
    %4 = vector.broadcast %3 : vector<1x512xf32> to vector<16x512xf32>
    %5 = arith.mulf %2, %4 : vector<16x512xf32>
    %c0_5 = arith.constant 0 : index
    %c0_6 = arith.constant 0 : index
    %6 = vector.load %arg4[%c0_5, %c0_6] : memref<1x512xf32, #tpu.memory_space<vmem>>, vector<1x512xf32>
    %7 = vector.broadcast %6 : vector<1x512xf32> to vector<16x512xf32>
    %8 = arith.addf %5, %7 : vector<16x512xf32>
    %cst_7 = arith.constant 0.000000e+00 : f32
    %9 = vector.broadcast %cst_7 : f32 to vector<16x512xf32>
    %10 = arith.maximumf %8, %9 : vector<16x512xf32>
    %11 = arith.truncf %10 : vector<16x512xf32> to vector<16x512xbf16>
    %c0_8 = arith.constant 0 : index
    %c0_9 = arith.constant 0 : index
    %12 = vector.load %arg5[%c0_8, %c0_9] : memref<512x512xbf16, #tpu.memory_space<vmem>>, vector<512x512xbf16>
    %cst_10 = arith.constant dense<0.000000e+00> : vector<16x512xf32>
    %13 = tpu.matmul %11, %12, %cst_10 {dimension_numbers = #tpu.dot_dimension_numbers<[1], [0], [0], [1], [0, 0, 1, 1], [], []>} : vector<16x512xbf16>, vector<512x512xbf16>, vector<16x512xf32> -> vector<16x512xf32>
    %c0_11 = arith.constant 0 : index
    %c0_12 = arith.constant 0 : index
    %14 = vector.load %arg6[%c0_11, %c0_12] : memref<1x512xf32, #tpu.memory_space<vmem>>, vector<1x512xf32>
    %15 = vector.broadcast %14 : vector<1x512xf32> to vector<16x512xf32>
    %16 = arith.mulf %13, %15 : vector<16x512xf32>
    %c0_13 = arith.constant 0 : index
    %c0_14 = arith.constant 0 : index
    %17 = vector.load %arg7[%c0_13, %c0_14] : memref<1x512xf32, #tpu.memory_space<vmem>>, vector<1x512xf32>
    %18 = vector.broadcast %17 : vector<1x512xf32> to vector<16x512xf32>
    %19 = arith.addf %16, %18 : vector<16x512xf32>
    %cst_15 = arith.constant 0.000000e+00 : f32
    %20 = vector.broadcast %cst_15 : f32 to vector<16x512xf32>
    %21 = arith.maximumf %19, %20 : vector<16x512xf32>
    %22 = arith.truncf %21 : vector<16x512xf32> to vector<16x512xbf16>
    %c0_16 = arith.constant 0 : index
    %c0_17 = arith.constant 0 : index
    %23 = vector.load %arg8[%c0_16, %c0_17] : memref<16x512xbf16, #tpu.memory_space<vmem>>, vector<16x512xbf16>
    tpu.vector_store %arg8[%c0_16, %c0_17], %22 {strides = array<i32>} : memref<16x512xbf16, #tpu.memory_space<vmem>>, vector<16x512xbf16>,
    return
  }
  func.func @transform_0(%arg0: i32) -> (i32, i32) {
    %c0_i32 = arith.constant 0 : i32
    %c0_i32_0 = arith.constant 0 : i32
    return %arg0, %c0_i32 : i32, i32
  }
  func.func @transform_1(%arg0: i32) -> (i32, i32) {
    %c0_i32 = arith.constant 0 : i32
    %c0_i32_0 = arith.constant 0 : i32
    %c0_i32_1 = arith.constant 0 : i32
    return %c0_i32, %c0_i32_0 : i32, i32
  }
  func.func @transform_2(%arg0: i32) -> (i32, i32) {
    %c0_i32 = arith.constant 0 : i32
    %c0_i32_0 = arith.constant 0 : i32
    %c0_i32_1 = arith.constant 0 : i32
    return %c0_i32, %c0_i32_0 : i32, i32
  }
  func.func @transform_3(%arg0: i32) -> (i32, i32) {
    %c0_i32 = arith.constant 0 : i32
    %c0_i32_0 = arith.constant 0 : i32
    %c0_i32_1 = arith.constant 0 : i32
    return %c0_i32, %c0_i32_0 : i32, i32
  }
  func.func @transform_4(%arg0: i32) -> (i32, i32) {
    %c0_i32 = arith.constant 0 : i32
    %c0_i32_0 = arith.constant 0 : i32
    %c0_i32_1 = arith.constant 0 : i32
    return %c0_i32, %c0_i32_0 : i32, i32
  }
  func.func @transform_5(%arg0: i32) -> (i32, i32) {
    %c0_i32 = arith.constant 0 : i32
    %c0_i32_0 = arith.constant 0 : i32
    %c0_i32_1 = arith.constant 0 : i32
    return %c0_i32, %c0_i32_0 : i32, i32
  }
  func.func @transform_6(%arg0: i32) -> (i32, i32) {
    %c0_i32 = arith.constant 0 : i32
    %c0_i32_0 = arith.constant 0 : i32
    %c0_i32_1 = arith.constant 0 : i32
    return %c0_i32, %c0_i32_0 : i32, i32
  }
  func.func @transform_7(%arg0: i32) -> (i32, i32) {
    %c0_i32 = arith.constant 0 : i32
    %c0_i32_0 = arith.constant 0 : i32
    return %arg0, %c0_i32 : i32, i32
  }
}

module attributes {stable_mosaic.version = 11 : i64} {
  func.func @_avgpool_fc_kernel(%arg0: i32, %arg1: memref<2x1x512xbf16, #tpu.memory_space<vmem>>, %arg2: memref<512x1024xbf16, #tpu.memory_space<vmem>>, %arg3: memref<1x1024xf32, #tpu.memory_space<vmem>>, %arg4: memref<2x1024xf32, #tpu.memory_space<vmem>>) attributes {dimension_semantics = [#tpu.dimension_semantics<arbitrary>], iteration_bounds = array<i64: 1>, scalar_prefetch = 0 : i64, scratch_operands = 0 : i64, tpu.core_type = #tpu.core_type<tc>, window_params = [{pipeline_mode = #tpu.pipeline_mode<synchronous>, transform_indices = @transform_0, window_bounds = array<i64: 2, 1, 512>}, {pipeline_mode = #tpu.pipeline_mode<synchronous>, transform_indices = @transform_1, window_bounds = array<i64: 512, 1024>}, {pipeline_mode = #tpu.pipeline_mode<synchronous>, transform_indices = @transform_2, window_bounds = array<i64: 1, 1024>}, {pipeline_mode = #tpu.pipeline_mode<synchronous>, transform_indices = @transform_3, window_bounds = array<i64: 2, 1024>}]} {
    %c0 = arith.constant 0 : index
    %c0_0 = arith.constant 0 : index
    %c0_1 = arith.constant 0 : index
    %0 = vector.load %arg1[%c0, %c0_0, %c0_1] : memref<2x1x512xbf16, #tpu.memory_space<vmem>>, vector<2x1x512xbf16>
    %1 = arith.extf %0 : vector<2x1x512xbf16> to vector<2x1x512xf32>
    %cst = arith.constant dense<0.000000e+00> : vector<2x512xf32>
    %2 = vector.multi_reduction <add>, %1, %cst [1] : vector<2x1x512xf32> to vector<2x512xf32>
    %cst_2 = arith.constant 1.000000e+00 : f32
    %3 = vector.broadcast %cst_2 : f32 to vector<2x512xf32>
    %4 = arith.divf %2, %3 : vector<2x512xf32>
    %5 = arith.truncf %4 : vector<2x512xf32> to vector<2x512xbf16>
    %c0_3 = arith.constant 0 : index
    %c0_4 = arith.constant 0 : index
    %6 = vector.load %arg2[%c0_3, %c0_4] : memref<512x1024xbf16, #tpu.memory_space<vmem>>, vector<512x1024xbf16>
    %cst_5 = arith.constant dense<0.000000e+00> : vector<2x1024xf32>
    %7 = tpu.matmul %5, %6, %cst_5 {dimension_numbers = #tpu.dot_dimension_numbers<[1], [0], [0], [1], [0, 0, 1, 1], [], []>} : vector<2x512xbf16>, vector<512x1024xbf16>, vector<2x1024xf32> -> vector<2x1024xf32>
    %c0_6 = arith.constant 0 : index
    %c0_7 = arith.constant 0 : index
    %8 = vector.load %arg3[%c0_6, %c0_7] : memref<1x1024xf32, #tpu.memory_space<vmem>>, vector<1x1024xf32>
    %9 = vector.broadcast %8 : vector<1x1024xf32> to vector<2x1024xf32>
    %10 = arith.addf %7, %9 : vector<2x1024xf32>
    %c0_8 = arith.constant 0 : index
    %c0_9 = arith.constant 0 : index
    %11 = vector.load %arg4[%c0_8, %c0_9] : memref<2x1024xf32, #tpu.memory_space<vmem>>, vector<2x1024xf32>
    tpu.vector_store %arg4[%c0_8, %c0_9], %10 {strides = array<i32>} : memref<2x1024xf32, #tpu.memory_space<vmem>>, vector<2x1024xf32>,
    return
  }
  func.func @transform_0(%arg0: i32) -> (i32, i32, i32) {
    %c0_i32 = arith.constant 0 : i32
    %c0_i32_0 = arith.constant 0 : i32
    %c0_i32_1 = arith.constant 0 : i32
    %c0_i32_2 = arith.constant 0 : i32
    return %c0_i32, %c0_i32_0, %c0_i32_1 : i32, i32, i32
  }
  func.func @transform_1(%arg0: i32) -> (i32, i32) {
    %c0_i32 = arith.constant 0 : i32
    %c0_i32_0 = arith.constant 0 : i32
    %c0_i32_1 = arith.constant 0 : i32
    return %c0_i32, %c0_i32_0 : i32, i32
  }
  func.func @transform_2(%arg0: i32) -> (i32, i32) {
    %c0_i32 = arith.constant 0 : i32
    %c0_i32_0 = arith.constant 0 : i32
    %c0_i32_1 = arith.constant 0 : i32
    return %c0_i32, %c0_i32_0 : i32, i32
  }
  func.func @transform_3(%arg0: i32) -> (i32, i32) {
    %c0_i32 = arith.constant 0 : i32
    %c0_i32_0 = arith.constant 0 : i32
    %c0_i32_1 = arith.constant 0 : i32
    return %c0_i32, %c0_i32_0 : i32, i32
  }
}

</mosaic_0001>

<llo_original>
// kernel: _lambda_.7
$region0: #{_lambda_.7}
  #allocation0 [shape = 'u32[]', space=smem, size = 0x4, offset = 0x4, fixed_abs, tag = 'smem constant byte address 0x4 - core index']
  #allocation1 [shape = 'u32[144,128]{1,0:T(1,128)}', space=vmem, size = 0x12000, scoped, tag = 'internal scratch']
  #allocation2 [shape = 'f32[64,128]{1,0:T(8,128)}', space=vmem, size = 0x8000, scoped, tag = 'scratch operand']
  %s0 = inlined_call_operand.vmem [shape: bf16[64,256], index: 0, kind: input, shape index: {}]
  %s1 = inlined_call_operand.vmem [shape: bf16[256,128], index: 1, kind: input, shape index: {}]
  %s2 = inlined_call_operand.vmem [shape: f32[1,128], index: 2, kind: input, shape index: {}]
  %s3 = inlined_call_operand.vmem [shape: f32[1,128], index: 3, kind: input, shape index: {}]
  %s4 = inlined_call_operand.vmem [shape: bf16[64,128], index: 4, kind: output, shape index: {}]
  %s5 = sld [smem:[#allocation0]]
  $region34: #{_lambda_.7} parent=0
    _
  %s7 = ssub.s32 1, %s5
  %s8 = scalar_select 0, %s7, %s5
  // Predicated region
  $region2: #{_lambda_.7} parent=0 // pred_check
    _
  $region3: #{_lambda_.7} parent=0 // pred_check_branch
    %10 = sbr.rel (0) target = $region5
  $region4: #{_lambda_.7} parent=0 // pred_region
    _
  $region5: #{_lambda_.7} parent=0 // pred_fallthru
    _
  // Predicated region
  $region6: #{_lambda_.7} parent=0 // pred_check
    _
  $region7: #{_lambda_.7} parent=0 // pred_check_branch
    %12 = sbr.rel (0) target = $region9
  $region8: #{_lambda_.7} parent=0 // pred_region
    _
  $region9: #{_lambda_.7} parent=0 // pred_fallthru
    _
  // Predicated region
  $region10: #{_lambda_.7} parent=0 // pred_check
    _
  $region11: #{_lambda_.7} parent=0 // pred_check_branch
    %14 = sbr.rel (0) target = $region13
  $region12: #{_lambda_.7} parent=0 // pred_region
    _
  $region13: #{_lambda_.7} parent=0 // pred_fallthru
    _
  // Predicated region
  $region14: #{_lambda_.7} parent=0 // pred_check
    _
  $region15: #{_lambda_.7} parent=0 // pred_check_branch
    %16 = sbr.rel (0) target = $region17
  $region16: #{_lambda_.7} parent=0 // pred_region
    _
  $region17: #{_lambda_.7} parent=0 // pred_fallthru
    _
  %p18 = scmp.eq.s32.totalorder 0, 0
  // Predicated region
  $region18: #{_lambda_.7} parent=0 // pred_check
    %p19 = pneg %p18
  $region19: #{_lambda_.7} parent=0 // pred_check_branch
    %21 = sbr.rel (%p19) target = $region21
  $region20: #{_lambda_.7} parent=0 // pred_region
    %22 = vst [vmem:[#allocation2] sm:$0xff] 0.0
    %23 = vst [vmem:[#allocation2 + $0x8] sm:$0xff] 0.0
    %24 = vst [vmem:[#allocation2 + $0x10] sm:$0xff] 0.0
    %25 = vst [vmem:[#allocation2 + $0x18] sm:$0xff] 0.0
    %26 = vst [vmem:[#allocation2 + $0x20] sm:$0xff] 0.0
    %27 = vst [vmem:[#allocation2 + $0x28] sm:$0xff] 0.0
    %28 = vst [vmem:[#allocation2 + $0x30] sm:$0xff] 0.0
    %29 = vst [vmem:[#allocation2 + $0x38] sm:$0xff] 0.0
  $region21: #{_lambda_.7} parent=0 // pred_fallthru
    _
  %v30 = vld [vmem:[#allocation2] sm:$0xff]
  %v31 = vld [vmem:[#allocation2 + $0x8] sm:$0xff]
  %v32 = vld [vmem:[#allocation2 + $0x10] sm:$0xff]
  %v33 = vld [vmem:[#allocation2 + $0x18] sm:$0xff]
  %v34 = vld [vmem:[#allocation2 + $0x20] sm:$0xff]
  %v35 = vld [vmem:[#allocation2 + $0x28] sm:$0xff]
  %v36 = vld [vmem:[#allocation2 + $0x30] sm:$0xff]
  %v37 = vld [vmem:[#allocation2 + $0x38] sm:$0xff]
  %v38 = vld [vmem:[%s0] sm:$0xff]
  %v39 = vld [vmem:[%s0 + $0x8] sm:$0xff]
  %v40 = vld [vmem:[%s0 + $0x10] sm:$0xff]
  %v41 = vld [vmem:[%s0 + $0x18] sm:$0xff]
  %v42 = vld [vmem:[%s0 + $0x20] sm:$0xff]
  %v43 = vld [vmem:[%s0 + $0x28] sm:$0xff]
  %v44 = vld [vmem:[%s0 + $0x30] sm:$0xff]
  %v45 = vld [vmem:[%s0 + $0x38] sm:$0xff]
  %v46 = vld [vmem:[%s1] sm:$0xf]
  %v47 = vld [vmem:[%s1 + $0x4] sm:$0xf]
  %v48 = vld [vmem:[%s1 + $0x8] sm:$0xf]
  %v49 = vld [vmem:[%s1 + $0xc] sm:$0xf]
  %v50 = vld [vmem:[%s1 + $0x10] sm:$0xf]
  %v51 = vld [vmem:[%s1 + $0x14] sm:$0xf]
  %v52 = vld [vmem:[%s1 + $0x18] sm:$0xf]
  %v53 = vld [vmem:[%s1 + $0x1c] sm:$0xf]
  %v54 = vld [vmem:[%s1 + $0x20] sm:$0xf]
  %v55 = vld [vmem:[%s1 + $0x24] sm:$0xf]
  %v56 = vld [vmem:[%s1 + $0x28] sm:$0xf]
  %v57 = vld [vmem:[%s1 + $0x2c] sm:$0xf]
  %v58 = vld [vmem:[%s1 + $0x30] sm:$0xf]
  %v59 = vld [vmem:[%s1 + $0x34] sm:$0xf]
  %v60 = vld [vmem:[%s1 + $0x38] sm:$0xf]
  %v61 = vld [vmem:[%s1 + $0x3c] sm:$0xf]
  %v62 = vld [vmem:[%s1 + $0x40] sm:$0xf]
  %v63 = vld [vmem:[%s1 + $0x44] sm:$0xf]
  %v64 = vld [vmem:[%s1 + $0x48] sm:$0xf]
  %v65 = vld [vmem:[%s1 + $0x4c] sm:$0xf]
  %v66 = vld [vmem:[%s1 + $0x50] sm:$0xf]
  %v67 = vld [vmem:[%s1 + $0x54] sm:$0xf]
  %v68 = vld [vmem:[%s1 + $0x58] sm:$0xf]
  %v69 = vld [vmem:[%s1 + $0x5c] sm:$0xf]
  %v70 = vld [vmem:[%s1 + $0x60] sm:$0xf]
  %v71 = vld [vmem:[%s1 + $0x64] sm:$0xf]
  %v72 = vld [vmem:[%s1 + $0x68] sm:$0xf]
  %v73 = vld [vmem:[%s1 + $0x6c] sm:$0xf]
  %v74 = vld [vmem:[%s1 + $0x70] sm:$0xf]
  %v75 = vld [vmem:[%s1 + $0x74] sm:$0xf]
  %v76 = vld [vmem:[%s1 + $0x78] sm:$0xf]
  %v77 = vld [vmem:[%s1 + $0x7c] sm:$0xf]
  %v86 = vunpack.c.l.b16 %v38
  %v87 = vunpack.c.h.b16 %v38
  %v88 = vunpack.c.l.b16 %v39
  %v89 = vunpack.c.h.b16 %v39
  %v90 = vunpack.c.l.b16 %v40
  %v91 = vunpack.c.h.b16 %v40
  %v92 = vunpack.c.l.b16 %v41
  %v93 = vunpack.c.h.b16 %v41
  %v94 = vunpack.c.l.b16 %v42
  %v95 = vunpack.c.h.b16 %v42
  %v96 = vunpack.c.l.b16 %v43
  %v97 = vunpack.c.h.b16 %v43
  %v98 = vunpack.c.l.b16 %v44
  %v99 = vunpack.c.h.b16 %v44
  %v100 = vunpack.c.l.b16 %v45
  %v101 = vunpack.c.h.b16 %v45
  %v102 = vpack.c.b16 %v88, %v86
  %v103 = vpack.c.b16 %v89, %v87
  %v104 = vpack.c.b16 %v92, %v90
  %v105 = vpack.c.b16 %v93, %v91
  %v106 = vpack.c.b16 %v96, %v94
  %v107 = vpack.c.b16 %v97, %v95
  %v108 = vpack.c.b16 %v100, %v98
  %v109 = vpack.c.b16 %v101, %v99
  %v150 = vunpack.c.l.b16 %v46
  %v151 = vunpack.c.l.b16 %v47
  %v152 = vunpack.c.l.b16 %v48
  %v153 = vunpack.c.l.b16 %v49
  %v154 = vunpack.c.l.b16 %v50
  %v155 = vunpack.c.l.b16 %v51
  %v156 = vunpack.c.l.b16 %v52
  %v157 = vunpack.c.l.b16 %v53
  %v158 = vunpack.c.l.b16 %v54
  %v159 = vunpack.c.l.b16 %v55
  %v160 = vunpack.c.l.b16 %v56
  %v161 = vunpack.c.l.b16 %v57
  %v162 = vunpack.c.l.b16 %v58
  %v163 = vunpack.c.l.b16 %v59
  %v164 = vunpack.c.l.b16 %v60
  %v165 = vunpack.c.l.b16 %v61
  %v166 = vunpack.c.l.b16 %v62
  %v167 = vunpack.c.l.b16 %v63
  %v168 = vunpack.c.l.b16 %v64
  %v169 = vunpack.c.l.b16 %v65
  %v170 = vunpack.c.l.b16 %v66
  %v171 = vunpack.c.l.b16 %v67
  %v172 = vunpack.c.l.b16 %v68
  %v173 = vunpack.c.l.b16 %v69
  %v174 = vunpack.c.l.b16 %v70
  %v175 = vunpack.c.l.b16 %v71
  %v176 = vunpack.c.l.b16 %v72
  %v177 = vunpack.c.l.b16 %v73
  %v178 = vunpack.c.l.b16 %v74
  %v179 = vunpack.c.l.b16 %v75
  %v180 = vunpack.c.l.b16 %v76
  %v181 = vunpack.c.l.b16 %v77
  %v182 = vpack.c.b16 %v151, %v150
  %v183 = vpack.c.b16 %v153, %v152
  %v184 = vpack.c.b16 %v155, %v154
  %v185 = vpack.c.b16 %v157, %v156
  %v186 = vpack.c.b16 %v159, %v158
  %v187 = vpack.c.b16 %v161, %v160
  %v188 = vpack.c.b16 %v163, %v162
  %v189 = vpack.c.b16 %v165, %v164
  %v190 = vpack.c.b16 %v167, %v166
  %v191 = vpack.c.b16 %v169, %v168
  %v192 = vpack.c.b16 %v171, %v170
  %v193 = vpack.c.b16 %v173, %v172
  %v194 = vpack.c.b16 %v175, %v174
  %v195 = vpack.c.b16 %v177, %v176
  %v196 = vpack.c.b16 %v179, %v178
  %v197 = vpack.c.b16 %v181, %v180
  %214 = vmatprep.subr.bf16.mxu0 0
  %215 = vmatpush1.bf16.msra.mxu0 %v182
  %216 = vmatprep.subr.bf16.mxu0 0
  %217 = vmatpush1.bf16.msra.mxu0 %v183
  %218 = vmatprep.subr.bf16.mxu0 0
  %219 = vmatpush1.bf16.msra.mxu0 %v184
  %220 = vmatprep.subr.bf16.mxu0 0
  %221 = vmatpush1.bf16.msra.mxu0 %v185
  %222 = vmatprep.subr.bf16.mxu0 0
  %223 = vmatpush1.bf16.msra.mxu0 %v186
  %224 = vmatprep.subr.bf16.mxu0 0
  %225 = vmatpush1.bf16.msra.mxu0 %v187
  %226 = vmatprep.subr.bf16.mxu0 0
  %227 = vmatpush1.bf16.msra.mxu0 %v188
  %228 = vmatprep.subr.bf16.mxu0 0
  %229 = vmatpush1.bf16.msra.mxu0 %v189
  %230 = vmatprep.subr.bf16.mxu0 0
  %231 = vmatpush1.bf16.msra.mxu0 %v190
  %232 = vmatprep.subr.bf16.mxu0 0
  %233 = vmatpush1.bf16.msra.mxu0 %v191
  %234 = vmatprep.subr.bf16.mxu0 0
  %235 = vmatpush1.bf16.msra.mxu0 %v192
  %236 = vmatprep.subr.bf16.mxu0 0
  %237 = vmatpush1.bf16.msra.mxu0 %v193
  %238 = vmatprep.subr.bf16.mxu0 0
  %239 = vmatpush1.bf16.msra.mxu0 %v194
  %240 = vmatprep.subr.bf16.mxu0 0
  %241 = vmatpush1.bf16.msra.mxu0 %v195
  %242 = vmatprep.subr.bf16.mxu0 0
  %243 = vmatpush1.bf16.msra.mxu0 %v196
  %244 = vmatprep.subr.bf16.mxu0 0
  %245 = vmatpush1.bf16.msra.mxu0 %v197
  %246 = vmatprep.mubr.bf16.mxu0 %v103
  %247 = vmatmul.mubr.bf16.gmra.mrb[0].mxu0 %v102
  %v248 = vpop.f32.mrb[0].mxu0
  %v249 = vadd.f32 0.0, %v248
  %v250 = vpop.f32.mrb[0].mxu0
  %v251 = vpop.f32.mrb[0].mxu0
  %v252 = vadd.f32 0.0, %v251
  %v253 = vpop.f32.mrb[0].mxu0
  %254 = vmatprep.mubr.bf16.mxu0 %v105
  %255 = vmatmul.mubr.bf16.gmra.mrb[0].mxu0 %v104
  %v256 = vpop.f32.mrb[0].mxu0
  %v257 = vadd.f32 0.0, %v256
  %v258 = vpop.f32.mrb[0].mxu0
  %v259 = vpop.f32.mrb[0].mxu0
  %v260 = vadd.f32 0.0, %v259
  %v261 = vpop.f32.mrb[0].mxu0
  %262 = vmatprep.mubr.bf16.mxu0 %v107
  %263 = vmatmul.mubr.bf16.gmra.mrb[0].mxu0 %v106
  %v264 = vpop.f32.mrb[0].mxu0
  %v265 = vadd.f32 0.0, %v264
  %v266 = vpop.f32.mrb[0].mxu0
  %v267 = vpop.f32.mrb[0].mxu0
  %v268 = vadd.f32 0.0, %v267
  %v269 = vpop.f32.mrb[0].mxu0
  %270 = vmatprep.mubr.bf16.mxu0 %v109
  %271 = vmatmul.mubr.bf16.gmra.mrb[0].mxu0 %v108
  %v272 = vpop.f32.mrb[0].mxu0
  %v273 = vadd.f32 0.0, %v272
  %v274 = vpop.f32.mrb[0].mxu0
  %v275 = vpop.f32.mrb[0].mxu0
  %v276 = vadd.f32 0.0, %v275
  %v277 = vpop.f32.mrb[0].mxu0
  %278 = vdwg.mxu0
  %v279 = vadd.f32 %v30, %v249
  %v280 = vadd.f32 %v31, %v252
  %v281 = vadd.f32 %v32, %v257
  %v282 = vadd.f32 %v33, %v260
  %v283 = vadd.f32 %v34, %v265
  %v284 = vadd.f32 %v35, %v268
  %v285 = vadd.f32 %v36, %v273
  %v286 = vadd.f32 %v37, %v276
  %287 = vst [vmem:[#allocation2] sm:$0xff] %v279
  %288 = vst [vmem:[#allocation2 + $0x8] sm:$0xff] %v280
  %289 = vst [vmem:[#allocation2 + $0x10] sm:$0xff] %v281
  %290 = vst [vmem:[#allocation2 + $0x18] sm:$0xff] %v282
  %291 = vst [vmem:[#allocation2 + $0x20] sm:$0xff] %v283
  %292 = vst [vmem:[#allocation2 + $0x28] sm:$0xff] %v284
  %293 = vst [vmem:[#allocation2 + $0x30] sm:$0xff] %v285
  %294 = vst [vmem:[#allocation2 + $0x38] sm:$0xff] %v286
  // Predicated region
  $region22: #{_lambda_.7} parent=0 // pred_check
    %p295 = pneg %p18
  $region23: #{_lambda_.7} parent=0 // pred_check_branch
    %297 = sbr.rel (%p295) target = $region25
  $region24: #{_lambda_.7} parent=0 // pred_region
    %v298 = vld [vmem:[#allocation2] sm:$0xff]
    %v299 = vld [vmem:[#allocation2 + $0x8] sm:$0xff]
    %v300 = vld [vmem:[#allocation2 + $0x10] sm:$0xff]
    %v301 = vld [vmem:[#allocation2 + $0x18] sm:$0xff]
    %v302 = vld [vmem:[#allocation2 + $0x20] sm:$0xff]
    %v303 = vld [vmem:[#allocation2 + $0x28] sm:$0xff]
    %v304 = vld [vmem:[#allocation2 + $0x30] sm:$0xff]
    %v305 = vld [vmem:[#allocation2 + $0x38] sm:$0xff]
    %v306 = vld [vmem:[%s2] sm:$0x1]
    %v308 = vlaneseq
    %v309 = vshrl.u32 %v308, 7
    %v310 = vsub.s32 0, %v309
    %v311 = vrot.slane %v306, %v310
    %v313 = vmul.f32 %v298, %v311
    %v314 = vmul.f32 %v299, %v311
    %v315 = vmul.f32 %v300, %v311
    %v316 = vmul.f32 %v301, %v311
    %v317 = vmul.f32 %v302, %v311
    %v318 = vmul.f32 %v303, %v311
    %v319 = vmul.f32 %v304, %v311
    %v320 = vmul.f32 %v305, %v311
    %v321 = vld [vmem:[%s3] sm:$0x1]
    %v323 = vlaneseq
    %v324 = vshrl.u32 %v323, 7
    %v325 = vsub.s32 0, %v324
    %v326 = vrot.slane %v321, %v325
    %v328 = vadd.f32 %v313, %v326
    %v329 = vadd.f32 %v314, %v326
    %v330 = vadd.f32 %v315, %v326
    %v331 = vadd.f32 %v316, %v326
    %v332 = vadd.f32 %v317, %v326
    %v333 = vadd.f32 %v318, %v326
    %v334 = vadd.f32 %v319, %v326
    %v335 = vadd.f32 %v320, %v326
    %v336 = vmax.f32 %v328, 0.0
    %v337 = vmax.f32 %v329, 0.0
    %v338 = vmax.f32 %v330, 0.0
    %v339 = vmax.f32 %v331, 0.0
    %v340 = vmax.f32 %v332, 0.0
    %v341 = vmax.f32 %v333, 0.0
    %v342 = vmax.f32 %v334, 0.0
    %v343 = vmax.f32 %v335, 0.0
    %v344 = vpack.c.bf16 %v337, %v336
    %v345 = vpack.c.bf16 %v339, %v338
    %v346 = vpack.c.bf16 %v341, %v340
    %v347 = vpack.c.bf16 %v343, %v342
    %v352 = vunpack.c.l.b16 %v344
    %v353 = vunpack.c.h.b16 %v344
    %v354 = vunpack.c.l.b16 %v345
    %v355 = vunpack.c.h.b16 %v345
    %v356 = vunpack.c.l.b16 %v346
    %v357 = vunpack.c.h.b16 %v346
    %v358 = vunpack.c.l.b16 %v347
    %v359 = vunpack.c.h.b16 %v347
    %v360 = vpack.c.b16 %v352, %v352
    %v361 = vpack.c.b16 %v353, %v353
    %v362 = vpack.c.b16 %v354, %v354
    %v363 = vpack.c.b16 %v355, %v355
    %v364 = vpack.c.b16 %v356, %v356
    %v365 = vpack.c.b16 %v357, %v357
    %v366 = vpack.c.b16 %v358, %v358
    %v367 = vpack.c.b16 %v359, %v359
    %376 = vst [vmem:[%s4] sm:$0xf] %v360
    %377 = vst [vmem:[%s4 + $0x4] sm:$0xf] %v361
    %378 = vst [vmem:[%s4 + $0x8] sm:$0xf] %v362
    %379 = vst [vmem:[%s4 + $0xc] sm:$0xf] %v363
    %380 = vst [vmem:[%s4 + $0x10] sm:$0xf] %v364
    %381 = vst [vmem:[%s4 + $0x14] sm:$0xf] %v365
    %382 = vst [vmem:[%s4 + $0x18] sm:$0xf] %v366
    %383 = vst [vmem:[%s4 + $0x1c] sm:$0xf] %v367
  $region25: #{_lambda_.7} parent=0 // pred_fallthru
    _
  // Predicated region
  $region26: #{_lambda_.7} parent=0 // pred_check
    _
  $region27: #{_lambda_.7} parent=0 // pred_check_branch
    %385 = sbr.rel (0) target = $region29
  $region28: #{_lambda_.7} parent=0 // pred_region
    _
  $region29: #{_lambda_.7} parent=0 // pred_fallthru
    _
  // Predicated region
  $region30: #{_lambda_.7} parent=0 // pred_check
    _
  $region31: #{_lambda_.7} parent=0 // pred_check_branch
    %387 = sbr.rel (0) target = $region33
  $region32: #{_lambda_.7} parent=0 // pred_region
    _
  $region33: #{_lambda_.7} parent=0 // pred_fallthru
    _

// kernel: _lambda_.8
$region0: #{_lambda_.8}
  #allocation0 [shape = 'u32[]', space=smem, size = 0x4, offset = 0x4, fixed_abs, tag = 'smem constant byte address 0x4 - core index']
  #allocation1 [shape = 'u32[144,128]{1,0:T(1,128)}', space=vmem, size = 0x12000, scoped, tag = 'internal scratch']
  %s0 = inlined_call_operand.vmem [shape: bf16[9,32,128], index: 0, kind: input, shape index: {}]
  %s1 = inlined_call_operand.vmem [shape: bf16[32,128], index: 1, kind: output, shape index: {}]
  %s2 = sld [smem:[#allocation0]]
  $region41: #{_lambda_.8} parent=0
    _
  %s4 = ssub.s32 1, %s2
  %s5 = scalar_select 0, %s4, %s2
  loop: start=0, step=1, limit=11
  $region2: #{_lambda_.8} parent=0 // loop_pre_header
    _
  $region3: #{_lambda_.8} parent=0 // loop_header
    %s7 = sphi 0, %s11
    %p8 = scmp.ge.s32.totalorder %s7, 11
    %s14 = sphi 0, %s26
    %s15 = sphi 0, %s22
    %s16 = sphi 0, %s14
    %s17 = sphi 0, %s15
    %s18 = sphi 0, %s16
    %s19 = sphi 0, %s17
    %s31 = sphi 0, %s33
    %s34 = sphi 0, %s31
    %s35 = sphi 0, %s34
    %s51 = sphi 0, %s35
    %s57 = sphi 0, %s59
    %s60 = sphi 0, %s57
    %s61 = sphi 0, %s60
    %s77 = sphi 0, %s61
  $region4: #{_lambda_.8} parent=0 // loop_header_branch
    %10 = sbr.rel (%p8) target = $region8
  $region5: #{_lambda_.8} parent=0 // loop_body
    %s12 = ssub.s32 %s7, 1
    %s13 = ssub.s32 %s7, 2
    %s20 = sadd.s32 1, %s15
    %p21 = scmp.ge.s32.totalorder %s20, 9
    %s22 = scalar_select %p21, 0, %s20
    %s23 = sadd.s32 1, %s14
    %s24 = scalar_select %p21, %s23, %s14
    %p25 = scmp.ge.s32.totalorder %s24, 1
    %s26 = scalar_select %p25, 0, %s24
    %s27 = ssub.s32 %s15, %s22
    %s28 = ssub.s32 %s14, %s26
    %s29 = sor.u32 %s27, %s28
    %p30 = scmp.eq.s32.totalorder %s29, 0
    %s32 = sadd.s32 %s31, 1
    %s33 = scalar_select %p30, %s31, %s32
    %p36 = pneg %p30
    %p37 = scmp.eq.s32.totalorder %s7, 8
    %p38 = por %p36, %p37
    %p39 = scmp.ne.s32.totalorder %s31, %s34
    %p40 = scmp.eq.s32.totalorder %s7, 0
    %p41 = por %p39, %p40
    %p42 = scmp.ne.s32.totalorder %s31, %s34
    %p43 = scmp.eq.s32.totalorder %s12, 8
    %p44 = por %p42, %p43
    %p45 = scmp.ne.s32.totalorder %s34, %s35
    %p46 = scmp.eq.s32.totalorder %s12, 0
    %p47 = por %p45, %p46
    %p48 = scmp.ne.s32.totalorder %s34, %s35
    %p49 = scmp.eq.s32.totalorder %s13, 8
    %p50 = por %p48, %p49
    %p52 = scmp.ne.s32.totalorder %s35, %s51
    %p53 = scmp.eq.s32.totalorder %s13, 0
    %p54 = por %p52, %p53
    %s55 = ssub.s32 %s14, %s26
    %p56 = scmp.eq.s32.totalorder %s55, 0
    %s58 = sadd.s32 %s57, 1
    %s59 = scalar_select %p56, %s57, %s58
    %p62 = pneg %p56
    %p63 = scmp.eq.s32.totalorder %s7, 8
    %p64 = por %p62, %p63
    %p65 = scmp.ne.s32.totalorder %s57, %s60
    %p66 = scmp.eq.s32.totalorder %s7, 0
    %p67 = por %p65, %p66
    %p68 = scmp.ne.s32.totalorder %s57, %s60
    %p69 = scmp.eq.s32.totalorder %s12, 8
    %p70 = por %p68, %p69
    %p71 = scmp.ne.s32.totalorder %s60, %s61
    %p72 = scmp.eq.s32.totalorder %s12, 0
    %p73 = por %p71, %p72
    %p74 = scmp.ne.s32.totalorder %s60, %s61
    %p75 = scmp.eq.s32.totalorder %s13, 8
    %p76 = por %p74, %p75
    %p78 = scmp.ne.s32.totalorder %s61, %s77
    %p79 = scmp.eq.s32.totalorder %s13, 0
    %p80 = por %p78, %p79
    %p81 = scmp.le.s32.totalorder 1, %s7
    %p82 = scmp.lt.s32.totalorder %s7, 10
    %p83 = pnand %p81, %p82
    %p84 = pneg %p83
    // Predicated region
    $region9: #{_lambda_.8} parent=5 // pred_check
      _
    $region10: #{_lambda_.8} parent=5 // pred_check_branch
      %86 = sbr.rel (%p83) target = $region12
    $region11: #{_lambda_.8} parent=5 // pred_region
      %s87 = ssub.s32 %s7, 1
    $region12: #{_lambda_.8} parent=5 // pred_fallthru
      _
    %p88 = scmp.lt.s32.totalorder %s7, 9
    // Predicated region
    $region13: #{_lambda_.8} parent=5 // pred_check
      %p89 = pneg %p88
    $region14: #{_lambda_.8} parent=5 // pred_check_branch
      %91 = sbr.rel (%p89) target = $region16
    $region15: #{_lambda_.8} parent=5 // pred_region
      // Predicated region
      $region17: #{_lambda_.8} parent=15 // pred_check
        %p92 = pneg %p41
      $region18: #{_lambda_.8} parent=15 // pred_check_branch
        %94 = sbr.rel (%p92) target = $region20
      $region19: #{_lambda_.8} parent=15 // pred_region
        %s95 = smul.u32 4, %s14
        %p96 = scmp.lt.s32.totalorder %s15, 8
        %s97 = scalar_select %p96, %s15, 8
        %p98 = scmp.lt.s32.totalorder %s95, 3
        %s99 = scalar_select %p98, %s95, 3
        %s100 = smul.addr %s97, 4
        %s101 = sadd.s32 %s99, %s100
        %s102 = smul.addr %s101, 4
        %s103 = scalar_lea.vmem %s0, %s102
        %s104 = smul.u32 4, %s14
      $region20: #{_lambda_.8} parent=15 // pred_fallthru
        _
    $region16: #{_lambda_.8} parent=5 // pred_fallthru
      _
    %p105 = scmp.le.s32.totalorder 1, %s7
    %p106 = scmp.lt.s32.totalorder %s7, 10
    %p107 = pnand %p105, %p106
    %p108 = pneg %p107
    // Predicated region
    $region21: #{_lambda_.8} parent=5 // pred_check
      _
    $region22: #{_lambda_.8} parent=5 // pred_check_branch
      %110 = sbr.rel (%p107) target = $region24
    $region23: #{_lambda_.8} parent=5 // pred_region
      %s111 = ssub.s32 %s7, 1
      %s112 = smul.u32 4, %s16
      %p113 = scmp.lt.s32.totalorder %s17, 8
      %s114 = scalar_select %p113, %s17, 8
      %p115 = scmp.lt.s32.totalorder %s112, 3
      %s116 = scalar_select %p115, %s112, 3
      %s117 = smul.addr %s114, 4
      %s118 = sadd.s32 %s116, %s117
      %s119 = smul.addr %s118, 4
      %s120 = scalar_lea.vmem %s0, %s119
      %p121 = pneg %p47
      %p122 = pneg %p44
      %p123 = pneg %p73
      %p124 = pneg %p70
      %s125 = smul.u32 4, %s16
      %p126 = scmp.lt.s32.totalorder %s125, 3
      %s127 = scalar_select %p126, %s125, 3
      %s128 = smul.addr %s127, 4
      %s129 = scalar_lea.vmem %s1, %s128
      %s130 = smul.u32 4, %s16
      %p131 = scmp.lt.s32.totalorder %s17, 8
      %s132 = scalar_select %p131, %s17, 8
      %p133 = scmp.lt.s32.totalorder %s130, 3
      %s134 = scalar_select %p133, %s130, 3
      %s135 = smul.addr %s132, 4
      %s136 = sadd.s32 %s134, %s135
      %s137 = smul.addr %s136, 4
      %s138 = scalar_lea.vmem %s0, %s137
      %s139 = smul.u32 4, %s16
      %s140 = smul.u32 4, %s16
      %p141 = scmp.lt.s32.totalorder %s140, 3
      %s142 = scalar_select %p141, %s140, 3
      %s143 = smul.addr %s142, 4
      %s144 = scalar_lea.vmem %s1, %s143
      %s145 = smul.u32 4, %s16
      %p147 = scmp.eq.s32.totalorder %s17, 0
      // Predicated region
      $region25: #{_lambda_.8} parent=23 // pred_check
        %p148 = pneg %p147
      $region26: #{_lambda_.8} parent=23 // pred_check_branch
        %150 = sbr.rel (%p148) target = $region28
      $region27: #{_lambda_.8} parent=23 // pred_region
        %151 = vst [vmem:[%s144] sm:$0xf] 4286644096
        %152 = vst [vmem:[%s144 + $0x4] sm:$0xf] 4286644096
        %153 = vst [vmem:[%s144 + $0x8] sm:$0xf] 4286644096
        %154 = vst [vmem:[%s144 + $0xc] sm:$0xf] 4286644096
      $region28: #{_lambda_.8} parent=23 // pred_fallthru
        _
      %v155 = vld [vmem:[%s144] sm:$0xf]
      %v156 = vld [vmem:[%s144 + $0x4] sm:$0xf]
      %v157 = vld [vmem:[%s144 + $0x8] sm:$0xf]
      %v158 = vld [vmem:[%s144 + $0xc] sm:$0xf]
      %v159 = vld [vmem:[%s138] sm:$0xf]
      %v160 = vld [vmem:[%s138 + $0x4] sm:$0xf]
      %v161 = vld [vmem:[%s138 + $0x8] sm:$0xf]
      %v162 = vld [vmem:[%s138 + $0xc] sm:$0xf]
      %v163 = vmax.bf16 %v155, %v159
      %v164 = vmax.bf16 %v156, %v160
      %v165 = vmax.bf16 %v157, %v161
      %v166 = vmax.bf16 %v158, %v162
      %167 = vst [vmem:[%s144] sm:$0xf] %v163
      %168 = vst [vmem:[%s144 + $0x4] sm:$0xf] %v164
      %169 = vst [vmem:[%s144 + $0x8] sm:$0xf] %v165
      %170 = vst [vmem:[%s144 + $0xc] sm:$0xf] %v166
      %s171 = smul.u32 4, %s16
      %p172 = scmp.lt.s32.totalorder %s171, 3
      %s173 = scalar_select %p172, %s171, 3
      %s174 = smul.addr %s173, 4
      %s175 = scalar_lea.vmem %s1, %s174
      // Predicated region
      $region29: #{_lambda_.8} parent=23 // pred_check
        %p176 = pneg %p70
      $region30: #{_lambda_.8} parent=23 // pred_check_branch
        %178 = sbr.rel (%p176) target = $region32
      $region31: #{_lambda_.8} parent=23 // pred_region
        %s179 = smul.u32 4, %s16
      $region32: #{_lambda_.8} parent=23 // pred_fallthru
        _
      // Predicated region
      $region33: #{_lambda_.8} parent=23 // pred_check
        %p180 = pneg %p70
      $region34: #{_lambda_.8} parent=23 // pred_check_branch
        %182 = sbr.rel (%p180) target = $region36
      $region35: #{_lambda_.8} parent=23 // pred_region
        %s183 = smul.u32 4, %s16
        %p184 = scmp.lt.s32.totalorder %s183, 3
        %s185 = scalar_select %p184, %s183, 3
        %s186 = smul.addr %s185, 4
        %s187 = scalar_lea.vmem %s1, %s186
      $region36: #{_lambda_.8} parent=23 // pred_fallthru
        _
    $region24: #{_lambda_.8} parent=5 // pred_fallthru
      _
    %p188 = scmp.le.s32.totalorder 2, %s7
    // Predicated region
    $region37: #{_lambda_.8} parent=5 // pred_check
      %p189 = pneg %p188
    $region38: #{_lambda_.8} parent=5 // pred_check_branch
      %191 = sbr.rel (%p189) target = $region40
    $region39: #{_lambda_.8} parent=5 // pred_region
      %s192 = ssub.s32 %s7, 2
    $region40: #{_lambda_.8} parent=5 // pred_fallthru
      _
  $region6: #{_lambda_.8} parent=0 // loop_footer
    %s11 = sadd.s32 1, %s7
  $region7: #{_lambda_.8} parent=0 // loop_footer_branch
    %6 = sbr.rel target = $region3
  $region8: #{_lambda_.8} parent=0 // loop_exit
    _

// kernel: _lambda_.9
$region0: #{_lambda_.9}
  #allocation0 [shape = 'u32[]', space=smem, size = 0x4, offset = 0x4, fixed_abs, tag = 'smem constant byte address 0x4 - core index']
  #allocation1 [shape = 'u32[144,128]{1,0:T(1,128)}', space=vmem, size = 0x12000, scoped, tag = 'internal scratch']
  %s0 = inlined_call_operand.vmem [shape: bf16[32,128], index: 0, kind: input, shape index: {}]
  %s1 = inlined_call_operand.vmem [shape: bf16[128,128], index: 1, kind: input, shape index: {}]
  %s2 = inlined_call_operand.vmem [shape: f32[1,128], index: 2, kind: input, shape index: {}]
  %s3 = inlined_call_operand.vmem [shape: f32[1,128], index: 3, kind: input, shape index: {}]
  %s4 = inlined_call_operand.vmem [shape: bf16[128,128], index: 4, kind: input, shape index: {}]
  %s5 = inlined_call_operand.vmem [shape: f32[1,128], index: 5, kind: input, shape index: {}]
  %s6 = inlined_call_operand.vmem [shape: f32[1,128], index: 6, kind: input, shape index: {}]
  %s7 = inlined_call_operand.vmem [shape: bf16[32,128], index: 7, kind: output, shape index: {}]
  %s8 = sld [smem:[#allocation0]]
  $region38: #{_lambda_.9} parent=0
    _
  %s10 = ssub.s32 1, %s8
  %s11 = scalar_select 0, %s10, %s8
  // Predicated region
  $region2: #{_lambda_.9} parent=0 // pred_check
    _
  $region3: #{_lambda_.9} parent=0 // pred_check_branch
    %13 = sbr.rel (0) target = $region5
  $region4: #{_lambda_.9} parent=0 // pred_region
    _
  $region5: #{_lambda_.9} parent=0 // pred_fallthru
    _
  // Predicated region
  $region6: #{_lambda_.9} parent=0 // pred_check
    _
  $region7: #{_lambda_.9} parent=0 // pred_check_branch
    %15 = sbr.rel (0) target = $region9
  $region8: #{_lambda_.9} parent=0 // pred_region
    _
  $region9: #{_lambda_.9} parent=0 // pred_fallthru
    _
  // Predicated region
  $region10: #{_lambda_.9} parent=0 // pred_check
    _
  $region11: #{_lambda_.9} parent=0 // pred_check_branch
    %17 = sbr.rel (0) target = $region13
  $region12: #{_lambda_.9} parent=0 // pred_region
    _
  $region13: #{_lambda_.9} parent=0 // pred_fallthru
    _
  // Predicated region
  $region14: #{_lambda_.9} parent=0 // pred_check
    _
  $region15: #{_lambda_.9} parent=0 // pred_check_branch
    %19 = sbr.rel (0) target = $region17
  $region16: #{_lambda_.9} parent=0 // pred_region
    _
  $region17: #{_lambda_.9} parent=0 // pred_fallthru
    _
  // Predicated region
  $region18: #{_lambda_.9} parent=0 // pred_check
    _
  $region19: #{_lambda_.9} parent=0 // pred_check_branch
    %21 = sbr.rel (0) target = $region21
  $region20: #{_lambda_.9} parent=0 // pred_region
    _
  $region21: #{_lambda_.9} parent=0 // pred_fallthru
    _
  // Predicated region
  $region22: #{_lambda_.9} parent=0 // pred_check
    _
  $region23: #{_lambda_.9} parent=0 // pred_check_branch
    %23 = sbr.rel (0) target = $region25
  $region24: #{_lambda_.9} parent=0 // pred_region
    _
  $region25: #{_lambda_.9} parent=0 // pred_fallthru
    _
  // Predicated region
  $region26: #{_lambda_.9} parent=0 // pred_check
    _
  $region27: #{_lambda_.9} parent=0 // pred_check_branch
    %25 = sbr.rel (0) target = $region29
  $region28: #{_lambda_.9} parent=0 // pred_region
    _
  $region29: #{_lambda_.9} parent=0 // pred_fallthru
    _
  %v27 = vld [vmem:[%s0] sm:$0xf]
  %v28 = vld [vmem:[%s0 + $0x4] sm:$0xf]
  %v29 = vld [vmem:[%s0 + $0x8] sm:$0xf]
  %v30 = vld [vmem:[%s0 + $0xc] sm:$0xf]
  %v31 = vld [vmem:[%s1] sm:$0xf]
  %v32 = vld [vmem:[%s1 + $0x4] sm:$0xf]
  %v33 = vld [vmem:[%s1 + $0x8] sm:$0xf]
  %v34 = vld [vmem:[%s1 + $0xc] sm:$0xf]
  %v35 = vld [vmem:[%s1 + $0x10] sm:$0xf]
  %v36 = vld [vmem:[%s1 + $0x14] sm:$0xf]
  %v37 = vld [vmem:[%s1 + $0x18] sm:$0xf]
  %v38 = vld [vmem:[%s1 + $0x1c] sm:$0xf]
  %v39 = vld [vmem:[%s1 + $0x20] sm:$0xf]
  %v40 = vld [vmem:[%s1 + $0x24] sm:$0xf]
  %v41 = vld [vmem:[%s1 + $0x28] sm:$0xf]
  %v42 = vld [vmem:[%s1 + $0x2c] sm:$0xf]
  %v43 = vld [vmem:[%s1 + $0x30] sm:$0xf]
  %v44 = vld [vmem:[%s1 + $0x34] sm:$0xf]
  %v45 = vld [vmem:[%s1 + $0x38] sm:$0xf]
  %v46 = vld [vmem:[%s1 + $0x3c] sm:$0xf]
  %v51 = vunpack.c.l.b16 %v27
  %v52 = vunpack.c.l.b16 %v28
  %v53 = vunpack.c.l.b16 %v29
  %v54 = vunpack.c.l.b16 %v30
  %v55 = vpack.c.b16 %v52, %v51
  %v56 = vpack.c.b16 %v54, %v53
  %v75 = vunpack.c.l.b16 %v31
  %v76 = vunpack.c.l.b16 %v32
  %v77 = vunpack.c.l.b16 %v33
  %v78 = vunpack.c.l.b16 %v34
  %v79 = vunpack.c.l.b16 %v35
  %v80 = vunpack.c.l.b16 %v36
  %v81 = vunpack.c.l.b16 %v37
  %v82 = vunpack.c.l.b16 %v38
  %v83 = vunpack.c.l.b16 %v39
  %v84 = vunpack.c.l.b16 %v40
  %v85 = vunpack.c.l.b16 %v41
  %v86 = vunpack.c.l.b16 %v42
  %v87 = vunpack.c.l.b16 %v43
  %v88 = vunpack.c.l.b16 %v44
  %v89 = vunpack.c.l.b16 %v45
  %v90 = vunpack.c.l.b16 %v46
  %v91 = vpack.c.b16 %v76, %v75
  %v92 = vpack.c.b16 %v78, %v77
  %v93 = vpack.c.b16 %v80, %v79
  %v94 = vpack.c.b16 %v82, %v81
  %v95 = vpack.c.b16 %v84, %v83
  %v96 = vpack.c.b16 %v86, %v85
  %v97 = vpack.c.b16 %v88, %v87
  %v98 = vpack.c.b16 %v90, %v89
  %107 = vmatprep.subr.bf16.mxu0 0
  %108 = vmatpush1.bf16.msra.mxu0 %v91
  %109 = vmatprep.subr.bf16.mxu0 0
  %110 = vmatpush1.bf16.msra.mxu0 %v92
  %111 = vmatprep.subr.bf16.mxu0 0
  %112 = vmatpush1.bf16.msra.mxu0 %v93
  %113 = vmatprep.subr.bf16.mxu0 0
  %114 = vmatpush1.bf16.msra.mxu0 %v94
  %115 = vmatprep.subr.bf16.mxu0 0
  %116 = vmatpush1.bf16.msra.mxu0 %v95
  %117 = vmatprep.subr.bf16.mxu0 0
  %118 = vmatpush1.bf16.msra.mxu0 %v96
  %119 = vmatprep.subr.bf16.mxu0 0
  %120 = vmatpush1.bf16.msra.mxu0 %v97
  %121 = vmatprep.subr.bf16.mxu0 0
  %122 = vmatpush1.bf16.msra.mxu0 %v98
  %123 = vmatprep.subr.bf16.mxu0 0
  %124 = vmatpush1.bf16.msra.mxu0 0
  %125 = vmatprep.subr.bf16.mxu0 0
  %126 = vmatpush1.bf16.msra.mxu0 0
  %127 = vmatprep.subr.bf16.mxu0 0
  %128 = vmatpush1.bf16.msra.mxu0 0
  %129 = vmatprep.subr.bf16.mxu0 0
  %130 = vmatpush1.bf16.msra.mxu0 0
  %131 = vmatprep.subr.bf16.mxu0 0
  %132 = vmatpush1.bf16.msra.mxu0 0
  %133 = vmatprep.subr.bf16.mxu0 0
  %134 = vmatpush1.bf16.msra.mxu0 0
  %135 = vmatprep.subr.bf16.mxu0 0
  %136 = vmatpush1.bf16.msra.mxu0 0
  %137 = vmatprep.subr.bf16.mxu0 0
  %138 = vmatpush1.bf16.msra.mxu0 0
  %139 = vmatprep.mubr.bf16.mxu0 0
  %140 = vmatmul.mubr.bf16.gmra.mrb[0].mxu0 %v55
  %v141 = vpop.f32.mrb[0].mxu0
  %v142 = vadd.f32 0.0, %v141
  %v143 = vpop.f32.mrb[0].mxu0
  %v144 = vpop.f32.mrb[0].mxu0
  %v145 = vadd.f32 0.0, %v144
  %v146 = vpop.f32.mrb[0].mxu0
  %147 = vmatprep.mubr.bf16.mxu0 0
  %148 = vmatmul.mubr.bf16.gmra.mrb[0].mxu0 %v56
  %v149 = vpop.f32.mrb[0].mxu0
  %v150 = vadd.f32 0.0, %v149
  %v151 = vpop.f32.mrb[0].mxu0
  %v152 = vpop.f32.mrb[0].mxu0
  %v153 = vadd.f32 0.0, %v152
  %v154 = vpop.f32.mrb[0].mxu0
  %155 = vdwg.mxu0
  %v156 = vld [vmem:[%s2] sm:$0x1]
  %v158 = vlaneseq
  %v159 = vshrl.u32 %v158, 7
  %v160 = vsub.s32 0, %v159
  %v161 = vrot.slane %v156, %v160
  %v163 = vmul.f32 %v142, %v161
  %v164 = vmul.f32 %v145, %v161
  %v165 = vmul.f32 %v150, %v161
  %v166 = vmul.f32 %v153, %v161
  %v167 = vld [vmem:[%s3] sm:$0x1]
  %v169 = vlaneseq
  %v170 = vshrl.u32 %v169, 7
  %v171 = vsub.s32 0, %v170
  %v172 = vrot.slane %v167, %v171
  %v174 = vadd.f32 %v163, %v172
  %v175 = vadd.f32 %v164, %v172
  %v176 = vadd.f32 %v165, %v172
  %v177 = vadd.f32 %v166, %v172
  %v178 = vmax.f32 %v174, 0.0
  %v179 = vmax.f32 %v175, 0.0
  %v180 = vmax.f32 %v176, 0.0
  %v181 = vmax.f32 %v177, 0.0
  %v182 = vpack.c.bf16 %v179, %v178
  %v183 = vpack.c.bf16 %v181, %v180
  %v184 = vld [vmem:[%s4] sm:$0xf]
  %v185 = vld [vmem:[%s4 + $0x4] sm:$0xf]
  %v186 = vld [vmem:[%s4 + $0x8] sm:$0xf]
  %v187 = vld [vmem:[%s4 + $0xc] sm:$0xf]
  %v188 = vld [vmem:[%s4 + $0x10] sm:$0xf]
  %v189 = vld [vmem:[%s4 + $0x14] sm:$0xf]
  %v190 = vld [vmem:[%s4 + $0x18] sm:$0xf]
  %v191 = vld [vmem:[%s4 + $0x1c] sm:$0xf]
  %v192 = vld [vmem:[%s4 + $0x20] sm:$0xf]
  %v193 = vld [vmem:[%s4 + $0x24] sm:$0xf]
  %v194 = vld [vmem:[%s4 + $0x28] sm:$0xf]
  %v195 = vld [vmem:[%s4 + $0x2c] sm:$0xf]
  %v196 = vld [vmem:[%s4 + $0x30] sm:$0xf]
  %v197 = vld [vmem:[%s4 + $0x34] sm:$0xf]
  %v198 = vld [vmem:[%s4 + $0x38] sm:$0xf]
  %v199 = vld [vmem:[%s4 + $0x3c] sm:$0xf]
  %v216 = vunpack.c.l.b16 %v184
  %v217 = vunpack.c.l.b16 %v185
  %v218 = vunpack.c.l.b16 %v186
  %v219 = vunpack.c.l.b16 %v187
  %v220 = vunpack.c.l.b16 %v188
  %v221 = vunpack.c.l.b16 %v189
  %v222 = vunpack.c.l.b16 %v190
  %v223 = vunpack.c.l.b16 %v191
  %v224 = vunpack.c.l.b16 %v192
  %v225 = vunpack.c.l.b16 %v193
  %v226 = vunpack.c.l.b16 %v194
  %v227 = vunpack.c.l.b16 %v195
  %v228 = vunpack.c.l.b16 %v196
  %v229 = vunpack.c.l.b16 %v197
  %v230 = vunpack.c.l.b16 %v198
  %v231 = vunpack.c.l.b16 %v199
  %v232 = vpack.c.b16 %v217, %v216
  %v233 = vpack.c.b16 %v219, %v218
  %v234 = vpack.c.b16 %v221, %v220
  %v235 = vpack.c.b16 %v223, %v222
  %v236 = vpack.c.b16 %v225, %v224
  %v237 = vpack.c.b16 %v227, %v226
  %v238 = vpack.c.b16 %v229, %v228
  %v239 = vpack.c.b16 %v231, %v230
  %248 = vmatprep.subr.bf16.mxu0 0
  %249 = vmatpush1.bf16.msra.mxu0 %v232
  %250 = vmatprep.subr.bf16.mxu0 0
  %251 = vmatpush1.bf16.msra.mxu0 %v233
  %252 = vmatprep.subr.bf16.mxu0 0
  %253 = vmatpush1.bf16.msra.mxu0 %v234
  %254 = vmatprep.subr.bf16.mxu0 0
  %255 = vmatpush1.bf16.msra.mxu0 %v235
  %256 = vmatprep.subr.bf16.mxu0 0
  %257 = vmatpush1.bf16.msra.mxu0 %v236
  %258 = vmatprep.subr.bf16.mxu0 0
  %259 = vmatpush1.bf16.msra.mxu0 %v237
  %260 = vmatprep.subr.bf16.mxu0 0
  %261 = vmatpush1.bf16.msra.mxu0 %v238
  %262 = vmatprep.subr.bf16.mxu0 0
  %263 = vmatpush1.bf16.msra.mxu0 %v239
  %264 = vmatprep.subr.bf16.mxu0 0
  %265 = vmatpush1.bf16.msra.mxu0 0
  %266 = vmatprep.subr.bf16.mxu0 0
  %267 = vmatpush1.bf16.msra.mxu0 0
  %268 = vmatprep.subr.bf16.mxu0 0
  %269 = vmatpush1.bf16.msra.mxu0 0
  %270 = vmatprep.subr.bf16.mxu0 0
  %271 = vmatpush1.bf16.msra.mxu0 0
  %272 = vmatprep.subr.bf16.mxu0 0
  %273 = vmatpush1.bf16.msra.mxu0 0
  %274 = vmatprep.subr.bf16.mxu0 0
  %275 = vmatpush1.bf16.msra.mxu0 0
  %276 = vmatprep.subr.bf16.mxu0 0
  %277 = vmatpush1.bf16.msra.mxu0 0
  %278 = vmatprep.subr.bf16.mxu0 0
  %279 = vmatpush1.bf16.msra.mxu0 0
  %280 = vmatprep.mubr.bf16.mxu0 0
  %281 = vmatmul.mubr.bf16.gmra.mrb[0].mxu0 %v182
  %v282 = vpop.f32.mrb[0].mxu0
  %v283 = vadd.f32 0.0, %v282
  %v284 = vpop.f32.mrb[0].mxu0
  %v285 = vpop.f32.mrb[0].mxu0
  %v286 = vadd.f32 0.0, %v285
  %v287 = vpop.f32.mrb[0].mxu0
  %288 = vmatprep.mubr.bf16.mxu0 0
  %289 = vmatmul.mubr.bf16.gmra.mrb[0].mxu0 %v183
  %v290 = vpop.f32.mrb[0].mxu0
  %v291 = vadd.f32 0.0, %v290
  %v292 = vpop.f32.mrb[0].mxu0
  %v293 = vpop.f32.mrb[0].mxu0
  %v294 = vadd.f32 0.0, %v293
  %v295 = vpop.f32.mrb[0].mxu0
  %296 = vdwg.mxu0
  %v297 = vld [vmem:[%s5] sm:$0x1]
  %v299 = vlaneseq
  %v300 = vshrl.u32 %v299, 7
  %v301 = vsub.s32 0, %v300
  %v302 = vrot.slane %v297, %v301
  %v304 = vmul.f32 %v283, %v302
  %v305 = vmul.f32 %v286, %v302
  %v306 = vmul.f32 %v291, %v302
  %v307 = vmul.f32 %v294, %v302
  %v308 = vld [vmem:[%s6] sm:$0x1]
  %v310 = vlaneseq
  %v311 = vshrl.u32 %v310, 7
  %v312 = vsub.s32 0, %v311
  %v313 = vrot.slane %v308, %v312
  %v315 = vadd.f32 %v304, %v313
  %v316 = vadd.f32 %v305, %v313
  %v317 = vadd.f32 %v306, %v313
  %v318 = vadd.f32 %v307, %v313
  %v319 = vmax.f32 %v315, 0.0
  %v320 = vmax.f32 %v316, 0.0
  %v321 = vmax.f32 %v317, 0.0
  %v322 = vmax.f32 %v318, 0.0
  %v323 = vpack.c.bf16 %v320, %v319
  %v324 = vpack.c.bf16 %v322, %v321
  %v327 = vunpack.c.l.b16 %v323
  %v328 = vunpack.c.h.b16 %v323
  %v329 = vunpack.c.l.b16 %v324
  %v330 = vunpack.c.h.b16 %v324
  %v331 = vpack.c.b16 %v327, %v327
  %v332 = vpack.c.b16 %v328, %v328
  %v333 = vpack.c.b16 %v329, %v329
  %v334 = vpack.c.b16 %v330, %v330
  %339 = vst [vmem:[%s7] sm:$0xf] %v331
  %340 = vst [vmem:[%s7 + $0x4] sm:$0xf] %v332
  %341 = vst [vmem:[%s7 + $0x8] sm:$0xf] %v333
  %342 = vst [vmem:[%s7 + $0xc] sm:$0xf] %v334
  // Predicated region
  $region30: #{_lambda_.9} parent=0 // pred_check
    _
  $region31: #{_lambda_.9} parent=0 // pred_check_branch
    %344 = sbr.rel (0) target = $region33
  $region32: #{_lambda_.9} parent=0 // pred_region
    _
  $region33: #{_lambda_.9} parent=0 // pred_fallthru
    _
  // Predicated region
  $region34: #{_lambda_.9} parent=0 // pred_check
    _
  $region35: #{_lambda_.9} parent=0 // pred_check_branch
    %346 = sbr.rel (0) target = $region37
  $region36: #{_lambda_.9} parent=0 // pred_region
    _
  $region37: #{_lambda_.9} parent=0 // pred_fallthru
    _

// kernel: _lambda_.10
$region0: #{_lambda_.10}
  #allocation0 [shape = 'u32[]', space=smem, size = 0x4, offset = 0x4, fixed_abs, tag = 'smem constant byte address 0x4 - core index']
  #allocation1 [shape = 'u32[144,128]{1,0:T(1,128)}', space=vmem, size = 0x12000, scoped, tag = 'internal scratch']
  %s0 = inlined_call_operand.vmem [shape: bf16[16,128], index: 0, kind: input, shape index: {}]
  %s1 = inlined_call_operand.vmem [shape: bf16[128,128], index: 1, kind: input, shape index: {}]
  %s2 = inlined_call_operand.vmem [shape: f32[1,128], index: 2, kind: input, shape index: {}]
  %s3 = inlined_call_operand.vmem [shape: f32[1,128], index: 3, kind: input, shape index: {}]
  %s4 = inlined_call_operand.vmem [shape: bf16[128,128], index: 4, kind: input, shape index: {}]
  %s5 = inlined_call_operand.vmem [shape: f32[1,128], index: 5, kind: input, shape index: {}]
  %s6 = inlined_call_operand.vmem [shape: f32[1,128], index: 6, kind: input, shape index: {}]
  %s7 = inlined_call_operand.vmem [shape: bf16[16,128], index: 7, kind: output, shape index: {}]
  %s8 = sld [smem:[#allocation0]]
  $region38: #{_lambda_.10} parent=0
    _
  %s10 = ssub.s32 1, %s8
  %s11 = scalar_select 0, %s10, %s8
  // Predicated region
  $region2: #{_lambda_.10} parent=0 // pred_check
    _
  $region3: #{_lambda_.10} parent=0 // pred_check_branch
    %13 = sbr.rel (0) target = $region5
  $region4: #{_lambda_.10} parent=0 // pred_region
    _
  $region5: #{_lambda_.10} parent=0 // pred_fallthru
    _
  // Predicated region
  $region6: #{_lambda_.10} parent=0 // pred_check
    _
  $region7: #{_lambda_.10} parent=0 // pred_check_branch
    %15 = sbr.rel (0) target = $region9
  $region8: #{_lambda_.10} parent=0 // pred_region
    _
  $region9: #{_lambda_.10} parent=0 // pred_fallthru
    _
  // Predicated region
  $region10: #{_lambda_.10} parent=0 // pred_check
    _
  $region11: #{_lambda_.10} parent=0 // pred_check_branch
    %17 = sbr.rel (0) target = $region13
  $region12: #{_lambda_.10} parent=0 // pred_region
    _
  $region13: #{_lambda_.10} parent=0 // pred_fallthru
    _
  // Predicated region
  $region14: #{_lambda_.10} parent=0 // pred_check
    _
  $region15: #{_lambda_.10} parent=0 // pred_check_branch
    %19 = sbr.rel (0) target = $region17
  $region16: #{_lambda_.10} parent=0 // pred_region
    _
  $region17: #{_lambda_.10} parent=0 // pred_fallthru
    _
  // Predicated region
  $region18: #{_lambda_.10} parent=0 // pred_check
    _
  $region19: #{_lambda_.10} parent=0 // pred_check_branch
    %21 = sbr.rel (0) target = $region21
  $region20: #{_lambda_.10} parent=0 // pred_region
    _
  $region21: #{_lambda_.10} parent=0 // pred_fallthru
    _
  // Predicated region
  $region22: #{_lambda_.10} parent=0 // pred_check
    _
  $region23: #{_lambda_.10} parent=0 // pred_check_branch
    %23 = sbr.rel (0) target = $region25
  $region24: #{_lambda_.10} parent=0 // pred_region
    _
  $region25: #{_lambda_.10} parent=0 // pred_fallthru
    _
  // Predicated region
  $region26: #{_lambda_.10} parent=0 // pred_check
    _
  $region27: #{_lambda_.10} parent=0 // pred_check_branch
    %25 = sbr.rel (0) target = $region29
  $region28: #{_lambda_.10} parent=0 // pred_region
    _
  $region29: #{_lambda_.10} parent=0 // pred_fallthru
    _
  %v27 = vld [vmem:[%s0] sm:$0xf]
  %v28 = vld [vmem:[%s0 + $0x4] sm:$0xf]
  %v29 = vld [vmem:[%s1] sm:$0xf]
  %v30 = vld [vmem:[%s1 + $0x4] sm:$0xf]
  %v31 = vld [vmem:[%s1 + $0x8] sm:$0xf]
  %v32 = vld [vmem:[%s1 + $0xc] sm:$0xf]
  %v33 = vld [vmem:[%s1 + $0x10] sm:$0xf]
  %v34 = vld [vmem:[%s1 + $0x14] sm:$0xf]
  %v35 = vld [vmem:[%s1 + $0x18] sm:$0xf]
  %v36 = vld [vmem:[%s1 + $0x1c] sm:$0xf]
  %v37 = vld [vmem:[%s1 + $0x20] sm:$0xf]
  %v38 = vld [vmem:[%s1 + $0x24] sm:$0xf]
  %v39 = vld [vmem:[%s1 + $0x28] sm:$0xf]
  %v40 = vld [vmem:[%s1 + $0x2c] sm:$0xf]
  %v41 = vld [vmem:[%s1 + $0x30] sm:$0xf]
  %v42 = vld [vmem:[%s1 + $0x34] sm:$0xf]
  %v43 = vld [vmem:[%s1 + $0x38] sm:$0xf]
  %v44 = vld [vmem:[%s1 + $0x3c] sm:$0xf]
  %v47 = vunpack.c.l.b16 %v27
  %v48 = vunpack.c.l.b16 %v28
  %v49 = vpack.c.b16 %v48, %v47
  %v67 = vunpack.c.l.b16 %v29
  %v68 = vunpack.c.l.b16 %v30
  %v69 = vunpack.c.l.b16 %v31
  %v70 = vunpack.c.l.b16 %v32
  %v71 = vunpack.c.l.b16 %v33
  %v72 = vunpack.c.l.b16 %v34
  %v73 = vunpack.c.l.b16 %v35
  %v74 = vunpack.c.l.b16 %v36
  %v75 = vunpack.c.l.b16 %v37
  %v76 = vunpack.c.l.b16 %v38
  %v77 = vunpack.c.l.b16 %v39
  %v78 = vunpack.c.l.b16 %v40
  %v79 = vunpack.c.l.b16 %v41
  %v80 = vunpack.c.l.b16 %v42
  %v81 = vunpack.c.l.b16 %v43
  %v82 = vunpack.c.l.b16 %v44
  %v83 = vpack.c.b16 %v68, %v67
  %v84 = vpack.c.b16 %v70, %v69
  %v85 = vpack.c.b16 %v72, %v71
  %v86 = vpack.c.b16 %v74, %v73
  %v87 = vpack.c.b16 %v76, %v75
  %v88 = vpack.c.b16 %v78, %v77
  %v89 = vpack.c.b16 %v80, %v79
  %v90 = vpack.c.b16 %v82, %v81
  %99 = vmatprep.subr.bf16.mxu0 0
  %100 = vmatpush1.bf16.msra.mxu0 %v83
  %101 = vmatprep.subr.bf16.mxu0 0
  %102 = vmatpush1.bf16.msra.mxu0 %v84
  %103 = vmatprep.subr.bf16.mxu0 0
  %104 = vmatpush1.bf16.msra.mxu0 %v85
  %105 = vmatprep.subr.bf16.mxu0 0
  %106 = vmatpush1.bf16.msra.mxu0 %v86
  %107 = vmatprep.subr.bf16.mxu0 0
  %108 = vmatpush1.bf16.msra.mxu0 %v87
  %109 = vmatprep.subr.bf16.mxu0 0
  %110 = vmatpush1.bf16.msra.mxu0 %v88
  %111 = vmatprep.subr.bf16.mxu0 0
  %112 = vmatpush1.bf16.msra.mxu0 %v89
  %113 = vmatprep.subr.bf16.mxu0 0
  %114 = vmatpush1.bf16.msra.mxu0 %v90
  %115 = vmatprep.subr.bf16.mxu0 0
  %116 = vmatpush1.bf16.msra.mxu0 0
  %117 = vmatprep.subr.bf16.mxu0 0
  %118 = vmatpush1.bf16.msra.mxu0 0
  %119 = vmatprep.subr.bf16.mxu0 0
  %120 = vmatpush1.bf16.msra.mxu0 0
  %121 = vmatprep.subr.bf16.mxu0 0
  %122 = vmatpush1.bf16.msra.mxu0 0
  %123 = vmatprep.subr.bf16.mxu0 0
  %124 = vmatpush1.bf16.msra.mxu0 0
  %125 = vmatprep.subr.bf16.mxu0 0
  %126 = vmatpush1.bf16.msra.mxu0 0
  %127 = vmatprep.subr.bf16.mxu0 0
  %128 = vmatpush1.bf16.msra.mxu0 0
  %129 = vmatprep.subr.bf16.mxu0 0
  %130 = vmatpush1.bf16.msra.mxu0 0
  %131 = vmatprep.mubr.bf16.mxu0 0
  %132 = vmatmul.mubr.bf16.gmra.mrb[0].mxu0 %v49
  %v133 = vpop.f32.mrb[0].mxu0
  %v134 = vadd.f32 0.0, %v133
  %v135 = vpop.f32.mrb[0].mxu0
  %v136 = vpop.f32.mrb[0].mxu0
  %v137 = vadd.f32 0.0, %v136
  %v138 = vpop.f32.mrb[0].mxu0
  %139 = vdwg.mxu0
  %v140 = vld [vmem:[%s2] sm:$0x1]
  %v142 = vlaneseq
  %v143 = vshrl.u32 %v142, 7
  %v144 = vsub.s32 0, %v143
  %v145 = vrot.slane %v140, %v144
  %v147 = vmul.f32 %v134, %v145
  %v148 = vmul.f32 %v137, %v145
  %v149 = vld [vmem:[%s3] sm:$0x1]
  %v151 = vlaneseq
  %v152 = vshrl.u32 %v151, 7
  %v153 = vsub.s32 0, %v152
  %v154 = vrot.slane %v149, %v153
  %v156 = vadd.f32 %v147, %v154
  %v157 = vadd.f32 %v148, %v154
  %v158 = vmax.f32 %v156, 0.0
  %v159 = vmax.f32 %v157, 0.0
  %v160 = vpack.c.bf16 %v159, %v158
  %v161 = vld [vmem:[%s4] sm:$0xf]
  %v162 = vld [vmem:[%s4 + $0x4] sm:$0xf]
  %v163 = vld [vmem:[%s4 + $0x8] sm:$0xf]
  %v164 = vld [vmem:[%s4 + $0xc] sm:$0xf]
  %v165 = vld [vmem:[%s4 + $0x10] sm:$0xf]
  %v166 = vld [vmem:[%s4 + $0x14] sm:$0xf]
  %v167 = vld [vmem:[%s4 + $0x18] sm:$0xf]
  %v168 = vld [vmem:[%s4 + $0x1c] sm:$0xf]
  %v169 = vld [vmem:[%s4 + $0x20] sm:$0xf]
  %v170 = vld [vmem:[%s4 + $0x24] sm:$0xf]
  %v171 = vld [vmem:[%s4 + $0x28] sm:$0xf]
  %v172 = vld [vmem:[%s4 + $0x2c] sm:$0xf]
  %v173 = vld [vmem:[%s4 + $0x30] sm:$0xf]
  %v174 = vld [vmem:[%s4 + $0x34] sm:$0xf]
  %v175 = vld [vmem:[%s4 + $0x38] sm:$0xf]
  %v176 = vld [vmem:[%s4 + $0x3c] sm:$0xf]
  %v193 = vunpack.c.l.b16 %v161
  %v194 = vunpack.c.l.b16 %v162
  %v195 = vunpack.c.l.b16 %v163
  %v196 = vunpack.c.l.b16 %v164
  %v197 = vunpack.c.l.b16 %v165
  %v198 = vunpack.c.l.b16 %v166
  %v199 = vunpack.c.l.b16 %v167
  %v200 = vunpack.c.l.b16 %v168
  %v201 = vunpack.c.l.b16 %v169
  %v202 = vunpack.c.l.b16 %v170
  %v203 = vunpack.c.l.b16 %v171
  %v204 = vunpack.c.l.b16 %v172
  %v205 = vunpack.c.l.b16 %v173
  %v206 = vunpack.c.l.b16 %v174
  %v207 = vunpack.c.l.b16 %v175
  %v208 = vunpack.c.l.b16 %v176
  %v209 = vpack.c.b16 %v194, %v193
  %v210 = vpack.c.b16 %v196, %v195
  %v211 = vpack.c.b16 %v198, %v197
  %v212 = vpack.c.b16 %v200, %v199
  %v213 = vpack.c.b16 %v202, %v201
  %v214 = vpack.c.b16 %v204, %v203
  %v215 = vpack.c.b16 %v206, %v205
  %v216 = vpack.c.b16 %v208, %v207
  %225 = vmatprep.subr.bf16.mxu0 0
  %226 = vmatpush1.bf16.msra.mxu0 %v209
  %227 = vmatprep.subr.bf16.mxu0 0
  %228 = vmatpush1.bf16.msra.mxu0 %v210
  %229 = vmatprep.subr.bf16.mxu0 0
  %230 = vmatpush1.bf16.msra.mxu0 %v211
  %231 = vmatprep.subr.bf16.mxu0 0
  %232 = vmatpush1.bf16.msra.mxu0 %v212
  %233 = vmatprep.subr.bf16.mxu0 0
  %234 = vmatpush1.bf16.msra.mxu0 %v213
  %235 = vmatprep.subr.bf16.mxu0 0
  %236 = vmatpush1.bf16.msra.mxu0 %v214
  %237 = vmatprep.subr.bf16.mxu0 0
  %238 = vmatpush1.bf16.msra.mxu0 %v215
  %239 = vmatprep.subr.bf16.mxu0 0
  %240 = vmatpush1.bf16.msra.mxu0 %v216
  %241 = vmatprep.subr.bf16.mxu0 0
  %242 = vmatpush1.bf16.msra.mxu0 0
  %243 = vmatprep.subr.bf16.mxu0 0
  %244 = vmatpush1.bf16.msra.mxu0 0
  %245 = vmatprep.subr.bf16.mxu0 0
  %246 = vmatpush1.bf16.msra.mxu0 0
  %247 = vmatprep.subr.bf16.mxu0 0
  %248 = vmatpush1.bf16.msra.mxu0 0
  %249 = vmatprep.subr.bf16.mxu0 0
  %250 = vmatpush1.bf16.msra.mxu0 0
  %251 = vmatprep.subr.bf16.mxu0 0
  %252 = vmatpush1.bf16.msra.mxu0 0
  %253 = vmatprep.subr.bf16.mxu0 0
  %254 = vmatpush1.bf16.msra.mxu0 0
  %255 = vmatprep.subr.bf16.mxu0 0
  %256 = vmatpush1.bf16.msra.mxu0 0
  %257 = vmatprep.mubr.bf16.mxu0 0
  %258 = vmatmul.mubr.bf16.gmra.mrb[0].mxu0 %v160
  %v259 = vpop.f32.mrb[0].mxu0
  %v260 = vadd.f32 0.0, %v259
  %v261 = vpop.f32.mrb[0].mxu0
  %v262 = vpop.f32.mrb[0].mxu0
  %v263 = vadd.f32 0.0, %v262
  %v264 = vpop.f32.mrb[0].mxu0
  %265 = vdwg.mxu0
  %v266 = vld [vmem:[%s5] sm:$0x1]
  %v268 = vlaneseq
  %v269 = vshrl.u32 %v268, 7
  %v270 = vsub.s32 0, %v269
  %v271 = vrot.slane %v266, %v270
  %v273 = vmul.f32 %v260, %v271
  %v274 = vmul.f32 %v263, %v271
  %v275 = vld [vmem:[%s6] sm:$0x1]
  %v277 = vlaneseq
  %v278 = vshrl.u32 %v277, 7
  %v279 = vsub.s32 0, %v278
  %v280 = vrot.slane %v275, %v279
  %v282 = vadd.f32 %v273, %v280
  %v283 = vadd.f32 %v274, %v280
  %v284 = vmax.f32 %v282, 0.0
  %v285 = vmax.f32 %v283, 0.0
  %v286 = vpack.c.bf16 %v285, %v284
  %v288 = vunpack.c.l.b16 %v286
  %v289 = vunpack.c.h.b16 %v286
  %v290 = vpack.c.b16 %v288, %v288
  %v291 = vpack.c.b16 %v289, %v289
  %294 = vst [vmem:[%s7] sm:$0xf] %v290
  %295 = vst [vmem:[%s7 + $0x4] sm:$0xf] %v291
  // Predicated region
  $region30: #{_lambda_.10} parent=0 // pred_check
    _
  $region31: #{_lambda_.10} parent=0 // pred_check_branch
    %297 = sbr.rel (0) target = $region33
  $region32: #{_lambda_.10} parent=0 // pred_region
    _
  $region33: #{_lambda_.10} parent=0 // pred_fallthru
    _
  // Predicated region
  $region34: #{_lambda_.10} parent=0 // pred_check
    _
  $region35: #{_lambda_.10} parent=0 // pred_check_branch
    %299 = sbr.rel (0) target = $region37
  $region36: #{_lambda_.10} parent=0 // pred_region
    _
  $region37: #{_lambda_.10} parent=0 // pred_fallthru
    _

// kernel: _lambda_.11
$region0: #{_lambda_.11}
  #allocation0 [shape = 'u32[]', space=smem, size = 0x4, offset = 0x4, fixed_abs, tag = 'smem constant byte address 0x4 - core index']
  #allocation1 [shape = 'u32[144,128]{1,0:T(1,128)}', space=vmem, size = 0x12000, scoped, tag = 'internal scratch']
  %s0 = inlined_call_operand.vmem [shape: bf16[16,128], index: 0, kind: input, shape index: {}]
  %s1 = inlined_call_operand.vmem [shape: bf16[128,256], index: 1, kind: input, shape index: {}]
  %s2 = inlined_call_operand.vmem [shape: f32[1,256], index: 2, kind: input, shape index: {}]
  %s3 = inlined_call_operand.vmem [shape: f32[1,256], index: 3, kind: input, shape index: {}]
  %s4 = inlined_call_operand.vmem [shape: bf16[256,256], index: 4, kind: input, shape index: {}]
  %s5 = inlined_call_operand.vmem [shape: f32[1,256], index: 5, kind: input, shape index: {}]
  %s6 = inlined_call_operand.vmem [shape: f32[1,256], index: 6, kind: input, shape index: {}]
  %s7 = inlined_call_operand.vmem [shape: bf16[16,256], index: 7, kind: output, shape index: {}]
  %s8 = sld [smem:[#allocation0]]
  $region38: #{_lambda_.11} parent=0
    _
  %s10 = ssub.s32 1, %s8
  %s11 = scalar_select 0, %s10, %s8
  // Predicated region
  $region2: #{_lambda_.11} parent=0 // pred_check
    _
  $region3: #{_lambda_.11} parent=0 // pred_check_branch
    %13 = sbr.rel (0) target = $region5
  $region4: #{_lambda_.11} parent=0 // pred_region
    _
  $region5: #{_lambda_.11} parent=0 // pred_fallthru
    _
  // Predicated region
  $region6: #{_lambda_.11} parent=0 // pred_check
    _
  $region7: #{_lambda_.11} parent=0 // pred_check_branch
    %15 = sbr.rel (0) target = $region9
  $region8: #{_lambda_.11} parent=0 // pred_region
    _
  $region9: #{_lambda_.11} parent=0 // pred_fallthru
    _
  // Predicated region
  $region10: #{_lambda_.11} parent=0 // pred_check
    _
  $region11: #{_lambda_.11} parent=0 // pred_check_branch
    %17 = sbr.rel (0) target = $region13
  $region12: #{_lambda_.11} parent=0 // pred_region
    _
  $region13: #{_lambda_.11} parent=0 // pred_fallthru
    _
  // Predicated region
  $region14: #{_lambda_.11} parent=0 // pred_check
    _
  $region15: #{_lambda_.11} parent=0 // pred_check_branch
    %19 = sbr.rel (0) target = $region17
  $region16: #{_lambda_.11} parent=0 // pred_region
    _
  $region17: #{_lambda_.11} parent=0 // pred_fallthru
    _
  // Predicated region
  $region18: #{_lambda_.11} parent=0 // pred_check
    _
  $region19: #{_lambda_.11} parent=0 // pred_check_branch
    %21 = sbr.rel (0) target = $region21
  $region20: #{_lambda_.11} parent=0 // pred_region
    _
  $region21: #{_lambda_.11} parent=0 // pred_fallthru
    _
  // Predicated region
  $region22: #{_lambda_.11} parent=0 // pred_check
    _
  $region23: #{_lambda_.11} parent=0 // pred_check_branch
    %23 = sbr.rel (0) target = $region25
  $region24: #{_lambda_.11} parent=0 // pred_region
    _
  $region25: #{_lambda_.11} parent=0 // pred_fallthru
    _
  // Predicated region
  $region26: #{_lambda_.11} parent=0 // pred_check
    _
  $region27: #{_lambda_.11} parent=0 // pred_check_branch
    %25 = sbr.rel (0) target = $region29
  $region28: #{_lambda_.11} parent=0 // pred_region
    _
  $region29: #{_lambda_.11} parent=0 // pred_fallthru
    _
  %v27 = vld [vmem:[%s0] sm:$0xf]
  %v28 = vld [vmem:[%s0 + $0x4] sm:$0xf]
  %v29 = vld [vmem:[%s1] sm:$0xff]
  %v30 = vld [vmem:[%s1 + $0x8] sm:$0xff]
  %v31 = vld [vmem:[%s1 + $0x10] sm:$0xff]
  %v32 = vld [vmem:[%s1 + $0x18] sm:$0xff]
  %v33 = vld [vmem:[%s1 + $0x20] sm:$0xff]
  %v34 = vld [vmem:[%s1 + $0x28] sm:$0xff]
  %v35 = vld [vmem:[%s1 + $0x30] sm:$0xff]
  %v36 = vld [vmem:[%s1 + $0x38] sm:$0xff]
  %v37 = vld [vmem:[%s1 + $0x40] sm:$0xff]
  %v38 = vld [vmem:[%s1 + $0x48] sm:$0xff]
  %v39 = vld [vmem:[%s1 + $0x50] sm:$0xff]
  %v40 = vld [vmem:[%s1 + $0x58] sm:$0xff]
  %v41 = vld [vmem:[%s1 + $0x60] sm:$0xff]
  %v42 = vld [vmem:[%s1 + $0x68] sm:$0xff]
  %v43 = vld [vmem:[%s1 + $0x70] sm:$0xff]
  %v44 = vld [vmem:[%s1 + $0x78] sm:$0xff]
  %v47 = vunpack.c.l.b16 %v27
  %v48 = vunpack.c.l.b16 %v28
  %v49 = vpack.c.b16 %v48, %v47
  %v67 = vunpack.c.l.b16 %v29
  %v68 = vunpack.c.h.b16 %v29
  %v69 = vunpack.c.l.b16 %v30
  %v70 = vunpack.c.h.b16 %v30
  %v71 = vunpack.c.l.b16 %v31
  %v72 = vunpack.c.h.b16 %v31
  %v73 = vunpack.c.l.b16 %v32
  %v74 = vunpack.c.h.b16 %v32
  %v75 = vunpack.c.l.b16 %v33
  %v76 = vunpack.c.h.b16 %v33
  %v77 = vunpack.c.l.b16 %v34
  %v78 = vunpack.c.h.b16 %v34
  %v79 = vunpack.c.l.b16 %v35
  %v80 = vunpack.c.h.b16 %v35
  %v81 = vunpack.c.l.b16 %v36
  %v82 = vunpack.c.h.b16 %v36
  %v83 = vunpack.c.l.b16 %v37
  %v84 = vunpack.c.h.b16 %v37
  %v85 = vunpack.c.l.b16 %v38
  %v86 = vunpack.c.h.b16 %v38
  %v87 = vunpack.c.l.b16 %v39
  %v88 = vunpack.c.h.b16 %v39
  %v89 = vunpack.c.l.b16 %v40
  %v90 = vunpack.c.h.b16 %v40
  %v91 = vunpack.c.l.b16 %v41
  %v92 = vunpack.c.h.b16 %v41
  %v93 = vunpack.c.l.b16 %v42
  %v94 = vunpack.c.h.b16 %v42
  %v95 = vunpack.c.l.b16 %v43
  %v96 = vunpack.c.h.b16 %v43
  %v97 = vunpack.c.l.b16 %v44
  %v98 = vunpack.c.h.b16 %v44
  %v99 = vpack.c.b16 %v69, %v67
  %v100 = vpack.c.b16 %v70, %v68
  %v101 = vpack.c.b16 %v73, %v71
  %v102 = vpack.c.b16 %v74, %v72
  %v103 = vpack.c.b16 %v77, %v75
  %v104 = vpack.c.b16 %v78, %v76
  %v105 = vpack.c.b16 %v81, %v79
  %v106 = vpack.c.b16 %v82, %v80
  %v107 = vpack.c.b16 %v85, %v83
  %v108 = vpack.c.b16 %v86, %v84
  %v109 = vpack.c.b16 %v89, %v87
  %v110 = vpack.c.b16 %v90, %v88
  %v111 = vpack.c.b16 %v93, %v91
  %v112 = vpack.c.b16 %v94, %v92
  %v113 = vpack.c.b16 %v97, %v95
  %v114 = vpack.c.b16 %v98, %v96
  %131 = vmatprep.subr.bf16.mxu0 %v100
  %132 = vmatpush1.bf16.msra.mxu0 %v99
  %133 = vmatprep.subr.bf16.mxu0 %v102
  %134 = vmatpush1.bf16.msra.mxu0 %v101
  %135 = vmatprep.subr.bf16.mxu0 %v104
  %136 = vmatpush1.bf16.msra.mxu0 %v103
  %137 = vmatprep.subr.bf16.mxu0 %v106
  %138 = vmatpush1.bf16.msra.mxu0 %v105
  %139 = vmatprep.subr.bf16.mxu0 %v108
  %140 = vmatpush1.bf16.msra.mxu0 %v107
  %141 = vmatprep.subr.bf16.mxu0 %v110
  %142 = vmatpush1.bf16.msra.mxu0 %v109
  %143 = vmatprep.subr.bf16.mxu0 %v112
  %144 = vmatpush1.bf16.msra.mxu0 %v111
  %145 = vmatprep.subr.bf16.mxu0 %v114
  %146 = vmatpush1.bf16.msra.mxu0 %v113
  %147 = vmatprep.subr.bf16.mxu0 0
  %148 = vmatpush1.bf16.msra.mxu0 0
  %149 = vmatprep.subr.bf16.mxu0 0
  %150 = vmatpush1.bf16.msra.mxu0 0
  %151 = vmatprep.subr.bf16.mxu0 0
  %152 = vmatpush1.bf16.msra.mxu0 0
  %153 = vmatprep.subr.bf16.mxu0 0
  %154 = vmatpush1.bf16.msra.mxu0 0
  %155 = vmatprep.subr.bf16.mxu0 0
  %156 = vmatpush1.bf16.msra.mxu0 0
  %157 = vmatprep.subr.bf16.mxu0 0
  %158 = vmatpush1.bf16.msra.mxu0 0
  %159 = vmatprep.subr.bf16.mxu0 0
  %160 = vmatpush1.bf16.msra.mxu0 0
  %161 = vmatprep.subr.bf16.mxu0 0
  %162 = vmatpush1.bf16.msra.mxu0 0
  %163 = vmatprep.mubr.bf16.mxu0 0
  %164 = vmatmul.mubr.bf16.gmra.mrb[0].mxu0 %v49
  %v165 = vpop.f32.mrb[0].mxu0
  %v166 = vadd.f32 0.0, %v165
  %v167 = vpop.f32.mrb[0].mxu0
  %v168 = vadd.f32 0.0, %v167
  %v169 = vpop.f32.mrb[0].mxu0
  %v170 = vadd.f32 0.0, %v169
  %v171 = vpop.f32.mrb[0].mxu0
  %v172 = vadd.f32 0.0, %v171
  %173 = vdwg.mxu0
  %v174 = vld [vmem:[%s2] sm:$0x3]
  %v176 = vlaneseq
  %v177 = vshrl.u32 %v176, 7
  %v178 = vsub.s32 0, %v177
  %v179 = vrot.slane %v174, %v178
  %v180 = vlaneseq
  %v181 = vshrl.u32 %v180, 7
  %v182 = vsub.s32 1, %v181
  %v183 = vrot.slane %v174, %v182
  %v186 = vmul.f32 %v166, %v179
  %v187 = vmul.f32 %v168, %v183
  %v188 = vmul.f32 %v170, %v179
  %v189 = vmul.f32 %v172, %v183
  %v190 = vld [vmem:[%s3] sm:$0x3]
  %v192 = vlaneseq
  %v193 = vshrl.u32 %v192, 7
  %v194 = vsub.s32 0, %v193
  %v195 = vrot.slane %v190, %v194
  %v196 = vlaneseq
  %v197 = vshrl.u32 %v196, 7
  %v198 = vsub.s32 1, %v197
  %v199 = vrot.slane %v190, %v198
  %v202 = vadd.f32 %v186, %v195
  %v203 = vadd.f32 %v187, %v199
  %v204 = vadd.f32 %v188, %v195
  %v205 = vadd.f32 %v189, %v199
  %v206 = vmax.f32 %v202, 0.0
  %v207 = vmax.f32 %v203, 0.0
  %v208 = vmax.f32 %v204, 0.0
  %v209 = vmax.f32 %v205, 0.0
  %v210 = vpack.c.bf16 %v208, %v206
  %v211 = vpack.c.bf16 %v209, %v207
  %v212 = vld [vmem:[%s4] sm:$0xff]
  %v213 = vld [vmem:[%s4 + $0x8] sm:$0xff]
  %v214 = vld [vmem:[%s4 + $0x10] sm:$0xff]
  %v215 = vld [vmem:[%s4 + $0x18] sm:$0xff]
  %v216 = vld [vmem:[%s4 + $0x20] sm:$0xff]
  %v217 = vld [vmem:[%s4 + $0x28] sm:$0xff]
  %v218 = vld [vmem:[%s4 + $0x30] sm:$0xff]
  %v219 = vld [vmem:[%s4 + $0x38] sm:$0xff]
  %v220 = vld [vmem:[%s4 + $0x40] sm:$0xff]
  %v221 = vld [vmem:[%s4 + $0x48] sm:$0xff]
  %v222 = vld [vmem:[%s4 + $0x50] sm:$0xff]
  %v223 = vld [vmem:[%s4 + $0x58] sm:$0xff]
  %v224 = vld [vmem:[%s4 + $0x60] sm:$0xff]
  %v225 = vld [vmem:[%s4 + $0x68] sm:$0xff]
  %v226 = vld [vmem:[%s4 + $0x70] sm:$0xff]
  %v227 = vld [vmem:[%s4 + $0x78] sm:$0xff]
  %v228 = vld [vmem:[%s4 + $0x80] sm:$0xff]
  %v229 = vld [vmem:[%s4 + $0x88] sm:$0xff]
  %v230 = vld [vmem:[%s4 + $0x90] sm:$0xff]
  %v231 = vld [vmem:[%s4 + $0x98] sm:$0xff]
  %v232 = vld [vmem:[%s4 + $0xa0] sm:$0xff]
  %v233 = vld [vmem:[%s4 + $0xa8] sm:$0xff]
  %v234 = vld [vmem:[%s4 + $0xb0] sm:$0xff]
  %v235 = vld [vmem:[%s4 + $0xb8] sm:$0xff]
  %v236 = vld [vmem:[%s4 + $0xc0] sm:$0xff]
  %v237 = vld [vmem:[%s4 + $0xc8] sm:$0xff]
  %v238 = vld [vmem:[%s4 + $0xd0] sm:$0xff]
  %v239 = vld [vmem:[%s4 + $0xd8] sm:$0xff]
  %v240 = vld [vmem:[%s4 + $0xe0] sm:$0xff]
  %v241 = vld [vmem:[%s4 + $0xe8] sm:$0xff]
  %v242 = vld [vmem:[%s4 + $0xf0] sm:$0xff]
  %v243 = vld [vmem:[%s4 + $0xf8] sm:$0xff]
  %v276 = vunpack.c.l.b16 %v212
  %v277 = vunpack.c.h.b16 %v212
  %v278 = vunpack.c.l.b16 %v213
  %v279 = vunpack.c.h.b16 %v213
  %v280 = vunpack.c.l.b16 %v214
  %v281 = vunpack.c.h.b16 %v214
  %v282 = vunpack.c.l.b16 %v215
  %v283 = vunpack.c.h.b16 %v215
  %v284 = vunpack.c.l.b16 %v216
  %v285 = vunpack.c.h.b16 %v216
  %v286 = vunpack.c.l.b16 %v217
  %v287 = vunpack.c.h.b16 %v217
  %v288 = vunpack.c.l.b16 %v218
  %v289 = vunpack.c.h.b16 %v218
  %v290 = vunpack.c.l.b16 %v219
  %v291 = vunpack.c.h.b16 %v219
  %v292 = vunpack.c.l.b16 %v220
  %v293 = vunpack.c.h.b16 %v220
  %v294 = vunpack.c.l.b16 %v221
  %v295 = vunpack.c.h.b16 %v221
  %v296 = vunpack.c.l.b16 %v222
  %v297 = vunpack.c.h.b16 %v222
  %v298 = vunpack.c.l.b16 %v223
  %v299 = vunpack.c.h.b16 %v223
  %v300 = vunpack.c.l.b16 %v224
  %v301 = vunpack.c.h.b16 %v224
  %v302 = vunpack.c.l.b16 %v225
  %v303 = vunpack.c.h.b16 %v225
  %v304 = vunpack.c.l.b16 %v226
  %v305 = vunpack.c.h.b16 %v226
  %v306 = vunpack.c.l.b16 %v227
  %v307 = vunpack.c.h.b16 %v227
  %v308 = vunpack.c.l.b16 %v228
  %v309 = vunpack.c.h.b16 %v228
  %v310 = vunpack.c.l.b16 %v229
  %v311 = vunpack.c.h.b16 %v229
  %v312 = vunpack.c.l.b16 %v230
  %v313 = vunpack.c.h.b16 %v230
  %v314 = vunpack.c.l.b16 %v231
  %v315 = vunpack.c.h.b16 %v231
  %v316 = vunpack.c.l.b16 %v232
  %v317 = vunpack.c.h.b16 %v232
  %v318 = vunpack.c.l.b16 %v233
  %v319 = vunpack.c.h.b16 %v233
  %v320 = vunpack.c.l.b16 %v234
  %v321 = vunpack.c.h.b16 %v234
  %v322 = vunpack.c.l.b16 %v235
  %v323 = vunpack.c.h.b16 %v235
  %v324 = vunpack.c.l.b16 %v236
  %v325 = vunpack.c.h.b16 %v236
  %v326 = vunpack.c.l.b16 %v237
  %v327 = vunpack.c.h.b16 %v237
  %v328 = vunpack.c.l.b16 %v238
  %v329 = vunpack.c.h.b16 %v238
  %v330 = vunpack.c.l.b16 %v239
  %v331 = vunpack.c.h.b16 %v239
  %v332 = vunpack.c.l.b16 %v240
  %v333 = vunpack.c.h.b16 %v240
  %v334 = vunpack.c.l.b16 %v241
  %v335 = vunpack.c.h.b16 %v241
  %v336 = vunpack.c.l.b16 %v242
  %v337 = vunpack.c.h.b16 %v242
  %v338 = vunpack.c.l.b16 %v243
  %v339 = vunpack.c.h.b16 %v243
  %v340 = vpack.c.b16 %v278, %v276
  %v341 = vpack.c.b16 %v279, %v277
  %v342 = vpack.c.b16 %v282, %v280
  %v343 = vpack.c.b16 %v283, %v281
  %v344 = vpack.c.b16 %v286, %v284
  %v345 = vpack.c.b16 %v287, %v285
  %v346 = vpack.c.b16 %v290, %v288
  %v347 = vpack.c.b16 %v291, %v289
  %v348 = vpack.c.b16 %v294, %v292
  %v349 = vpack.c.b16 %v295, %v293
  %v350 = vpack.c.b16 %v298, %v296
  %v351 = vpack.c.b16 %v299, %v297
  %v352 = vpack.c.b16 %v302, %v300
  %v353 = vpack.c.b16 %v303, %v301
  %v354 = vpack.c.b16 %v306, %v304
  %v355 = vpack.c.b16 %v307, %v305
  %v356 = vpack.c.b16 %v310, %v308
  %v357 = vpack.c.b16 %v311, %v309
  %v358 = vpack.c.b16 %v314, %v312
  %v359 = vpack.c.b16 %v315, %v313
  %v360 = vpack.c.b16 %v318, %v316
  %v361 = vpack.c.b16 %v319, %v317
  %v362 = vpack.c.b16 %v322, %v320
  %v363 = vpack.c.b16 %v323, %v321
  %v364 = vpack.c.b16 %v326, %v324
  %v365 = vpack.c.b16 %v327, %v325
  %v366 = vpack.c.b16 %v330, %v328
  %v367 = vpack.c.b16 %v331, %v329
  %v368 = vpack.c.b16 %v334, %v332
  %v369 = vpack.c.b16 %v335, %v333
  %v370 = vpack.c.b16 %v338, %v336
  %v371 = vpack.c.b16 %v339, %v337
  %404 = vmatprep.subr.bf16.mxu0 %v341
  %405 = vmatpush1.bf16.msra.mxu0 %v340
  %406 = vmatprep.subr.bf16.mxu0 %v343
  %407 = vmatpush1.bf16.msra.mxu0 %v342
  %408 = vmatprep.subr.bf16.mxu0 %v345
  %409 = vmatpush1.bf16.msra.mxu0 %v344
  %410 = vmatprep.subr.bf16.mxu0 %v347
  %411 = vmatpush1.bf16.msra.mxu0 %v346
  %412 = vmatprep.subr.bf16.mxu0 %v349
  %413 = vmatpush1.bf16.msra.mxu0 %v348
  %414 = vmatprep.subr.bf16.mxu0 %v351
  %415 = vmatpush1.bf16.msra.mxu0 %v350
  %416 = vmatprep.subr.bf16.mxu0 %v353
  %417 = vmatpush1.bf16.msra.mxu0 %v352
  %418 = vmatprep.subr.bf16.mxu0 %v355
  %419 = vmatpush1.bf16.msra.mxu0 %v354
  %420 = vmatprep.subr.bf16.mxu0 %v357
  %421 = vmatpush1.bf16.msra.mxu0 %v356
  %422 = vmatprep.subr.bf16.mxu0 %v359
  %423 = vmatpush1.bf16.msra.mxu0 %v358
  %424 = vmatprep.subr.bf16.mxu0 %v361
  %425 = vmatpush1.bf16.msra.mxu0 %v360
  %426 = vmatprep.subr.bf16.mxu0 %v363
  %427 = vmatpush1.bf16.msra.mxu0 %v362
  %428 = vmatprep.subr.bf16.mxu0 %v365
  %429 = vmatpush1.bf16.msra.mxu0 %v364
  %430 = vmatprep.subr.bf16.mxu0 %v367
  %431 = vmatpush1.bf16.msra.mxu0 %v366
  %432 = vmatprep.subr.bf16.mxu0 %v369
  %433 = vmatpush1.bf16.msra.mxu0 %v368
  %434 = vmatprep.subr.bf16.mxu0 %v371
  %435 = vmatpush1.bf16.msra.mxu0 %v370
  %436 = vmatprep.mubr.bf16.mxu0 %v211
  %437 = vmatmul.mubr.bf16.gmra.mrb[0].mxu0 %v210
  %v438 = vpop.f32.mrb[0].mxu0
  %v439 = vadd.f32 0.0, %v438
  %v440 = vpop.f32.mrb[0].mxu0
  %v441 = vadd.f32 0.0, %v440
  %v442 = vpop.f32.mrb[0].mxu0
  %v443 = vadd.f32 0.0, %v442
  %v444 = vpop.f32.mrb[0].mxu0
  %v445 = vadd.f32 0.0, %v444
  %446 = vdwg.mxu0
  %v447 = vld [vmem:[%s5] sm:$0x3]
  %v449 = vlaneseq
  %v450 = vshrl.u32 %v449, 7
  %v451 = vsub.s32 0, %v450
  %v452 = vrot.slane %v447, %v451
  %v453 = vlaneseq
  %v454 = vshrl.u32 %v453, 7
  %v455 = vsub.s32 1, %v454
  %v456 = vrot.slane %v447, %v455
  %v459 = vmul.f32 %v439, %v452
  %v460 = vmul.f32 %v441, %v456
  %v461 = vmul.f32 %v443, %v452
  %v462 = vmul.f32 %v445, %v456
  %v463 = vld [vmem:[%s6] sm:$0x3]
  %v465 = vlaneseq
  %v466 = vshrl.u32 %v465, 7
  %v467 = vsub.s32 0, %v466
  %v468 = vrot.slane %v463, %v467
  %v469 = vlaneseq
  %v470 = vshrl.u32 %v469, 7
  %v471 = vsub.s32 1, %v470
  %v472 = vrot.slane %v463, %v471
  %v475 = vadd.f32 %v459, %v468
  %v476 = vadd.f32 %v460, %v472
  %v477 = vadd.f32 %v461, %v468
  %v478 = vadd.f32 %v462, %v472
  %v479 = vmax.f32 %v475, 0.0
  %v480 = vmax.f32 %v476, 0.0
  %v481 = vmax.f32 %v477, 0.0
  %v482 = vmax.f32 %v478, 0.0
  %v483 = vpack.c.bf16 %v481, %v479
  %v484 = vpack.c.bf16 %v482, %v480
  %v487 = vunpack.c.l.b16 %v483
  %v488 = vunpack.c.l.b16 %v484
  %v489 = vunpack.c.h.b16 %v483
  %v490 = vunpack.c.h.b16 %v484
  %v491 = vpack.c.b16 %v488, %v487
  %v492 = vpack.c.b16 %v490, %v489
  %495 = vst [vmem:[%s7] sm:$0xff] %v491
  %496 = vst [vmem:[%s7 + $0x8] sm:$0xff] %v492
  // Predicated region
  $region30: #{_lambda_.11} parent=0 // pred_check
    _
  $region31: #{_lambda_.11} parent=0 // pred_check_branch
    %498 = sbr.rel (0) target = $region33
  $region32: #{_lambda_.11} parent=0 // pred_region
    _
  $region33: #{_lambda_.11} parent=0 // pred_fallthru
    _
  // Predicated region
  $region34: #{_lambda_.11} parent=0 // pred_check
    _
  $region35: #{_lambda_.11} parent=0 // pred_check_branch
    %500 = sbr.rel (0) target = $region37
  $region36: #{_lambda_.11} parent=0 // pred_region
    _
  $region37: #{_lambda_.11} parent=0 // pred_fallthru
    _

// kernel: _lambda_.12
$region0: #{_lambda_.12}
  #allocation0 [shape = 'u32[]', space=smem, size = 0x4, offset = 0x4, fixed_abs, tag = 'smem constant byte address 0x4 - core index']
  #allocation1 [shape = 'u32[144,128]{1,0:T(1,128)}', space=vmem, size = 0x12000, scoped, tag = 'internal scratch']
  %s0 = inlined_call_operand.vmem [shape: bf16[16,256], index: 0, kind: input, shape index: {}]
  %s1 = inlined_call_operand.vmem [shape: bf16[256,512], index: 1, kind: input, shape index: {}]
  %s2 = inlined_call_operand.vmem [shape: f32[1,512], index: 2, kind: input, shape index: {}]
  %s3 = inlined_call_operand.vmem [shape: f32[1,512], index: 3, kind: input, shape index: {}]
  %s4 = inlined_call_operand.vmem [shape: bf16[512,512], index: 4, kind: input, shape index: {}]
  %s5 = inlined_call_operand.vmem [shape: f32[1,512], index: 5, kind: input, shape index: {}]
  %s6 = inlined_call_operand.vmem [shape: f32[1,512], index: 6, kind: input, shape index: {}]
  %s7 = inlined_call_operand.vmem [shape: bf16[16,512], index: 7, kind: output, shape index: {}]
  %s8 = sld [smem:[#allocation0]]
  $region38: #{_lambda_.12} parent=0
    _
  %s10 = ssub.s32 1, %s8
  %s11 = scalar_select 0, %s10, %s8
  // Predicated region
  $region2: #{_lambda_.12} parent=0 // pred_check
    _
  $region3: #{_lambda_.12} parent=0 // pred_check_branch
    %13 = sbr.rel (0) target = $region5
  $region4: #{_lambda_.12} parent=0 // pred_region
    _
  $region5: #{_lambda_.12} parent=0 // pred_fallthru
    _
  // Predicated region
  $region6: #{_lambda_.12} parent=0 // pred_check
    _
  $region7: #{_lambda_.12} parent=0 // pred_check_branch
    %15 = sbr.rel (0) target = $region9
  $region8: #{_lambda_.12} parent=0 // pred_region
    _
  $region9: #{_lambda_.12} parent=0 // pred_fallthru
    _
  // Predicated region
  $region10: #{_lambda_.12} parent=0 // pred_check
    _
  $region11: #{_lambda_.12} parent=0 // pred_check_branch
    %17 = sbr.rel (0) target = $region13
  $region12: #{_lambda_.12} parent=0 // pred_region
    _
  $region13: #{_lambda_.12} parent=0 // pred_fallthru
    _
  // Predicated region
  $region14: #{_lambda_.12} parent=0 // pred_check
    _
  $region15: #{_lambda_.12} parent=0 // pred_check_branch
    %19 = sbr.rel (0) target = $region17
  $region16: #{_lambda_.12} parent=0 // pred_region
    _
  $region17: #{_lambda_.12} parent=0 // pred_fallthru
    _
  // Predicated region
  $region18: #{_lambda_.12} parent=0 // pred_check
    _
  $region19: #{_lambda_.12} parent=0 // pred_check_branch
    %21 = sbr.rel (0) target = $region21
  $region20: #{_lambda_.12} parent=0 // pred_region
    _
  $region21: #{_lambda_.12} parent=0 // pred_fallthru
    _
  // Predicated region
  $region22: #{_lambda_.12} parent=0 // pred_check
    _
  $region23: #{_lambda_.12} parent=0 // pred_check_branch
    %23 = sbr.rel (0) target = $region25
  $region24: #{_lambda_.12} parent=0 // pred_region
    _
  $region25: #{_lambda_.12} parent=0 // pred_fallthru
    _
  // Predicated region
  $region26: #{_lambda_.12} parent=0 // pred_check
    _
  $region27: #{_lambda_.12} parent=0 // pred_check_branch
    %25 = sbr.rel (0) target = $region29
  $region28: #{_lambda_.12} parent=0 // pred_region
    _
  $region29: #{_lambda_.12} parent=0 // pred_fallthru
    _
  %v26 = vld [vmem:[%s0] sm:$0xff]
  %v27 = vld [vmem:[%s0 + $0x8] sm:$0xff]
  %v28 = vld [vmem:[%s1] sm:$0xff]
  %v29 = vld [vmem:[%s1 + $0x8] sm:$0xff]
  %v30 = vld [vmem:[%s1 + $0x10] sm:$0xff]
  %v31 = vld [vmem:[%s1 + $0x18] sm:$0xff]
  %v32 = vld [vmem:[%s1 + $0x20] sm:$0xff]
  %v33 = vld [vmem:[%s1 + $0x28] sm:$0xff]
  %v34 = vld [vmem:[%s1 + $0x30] sm:$0xff]
  %v35 = vld [vmem:[%s1 + $0x38] sm:$0xff]
  %v36 = vld [vmem:[%s1 + $0x40] sm:$0xff]
  %v37 = vld [vmem:[%s1 + $0x48] sm:$0xff]
  %v38 = vld [vmem:[%s1 + $0x50] sm:$0xff]
  %v39 = vld [vmem:[%s1 + $0x58] sm:$0xff]
  %v40 = vld [vmem:[%s1 + $0x60] sm:$0xff]
  %v41 = vld [vmem:[%s1 + $0x68] sm:$0xff]
  %v42 = vld [vmem:[%s1 + $0x70] sm:$0xff]
  %v43 = vld [vmem:[%s1 + $0x78] sm:$0xff]
  %v44 = vld [vmem:[%s1 + $0x80] sm:$0xff]
  %v45 = vld [vmem:[%s1 + $0x88] sm:$0xff]
  %v46 = vld [vmem:[%s1 + $0x90] sm:$0xff]
  %v47 = vld [vmem:[%s1 + $0x98] sm:$0xff]
  %v48 = vld [vmem:[%s1 + $0xa0] sm:$0xff]
  %v49 = vld [vmem:[%s1 + $0xa8] sm:$0xff]
  %v50 = vld [vmem:[%s1 + $0xb0] sm:$0xff]
  %v51 = vld [vmem:[%s1 + $0xb8] sm:$0xff]
  %v52 = vld [vmem:[%s1 + $0xc0] sm:$0xff]
  %v53 = vld [vmem:[%s1 + $0xc8] sm:$0xff]
  %v54 = vld [vmem:[%s1 + $0xd0] sm:$0xff]
  %v55 = vld [vmem:[%s1 + $0xd8] sm:$0xff]
  %v56 = vld [vmem:[%s1 + $0xe0] sm:$0xff]
  %v57 = vld [vmem:[%s1 + $0xe8] sm:$0xff]
  %v58 = vld [vmem:[%s1 + $0xf0] sm:$0xff]
  %v59 = vld [vmem:[%s1 + $0xf8] sm:$0xff]
  %v60 = vld [vmem:[%s1 + $0x100] sm:$0xff]
  %v61 = vld [vmem:[%s1 + $0x108] sm:$0xff]
  %v62 = vld [vmem:[%s1 + $0x110] sm:$0xff]
  %v63 = vld [vmem:[%s1 + $0x118] sm:$0xff]
  %v64 = vld [vmem:[%s1 + $0x120] sm:$0xff]
  %v65 = vld [vmem:[%s1 + $0x128] sm:$0xff]
  %v66 = vld [vmem:[%s1 + $0x130] sm:$0xff]
  %v67 = vld [vmem:[%s1 + $0x138] sm:$0xff]
  %v68 = vld [vmem:[%s1 + $0x140] sm:$0xff]
  %v69 = vld [vmem:[%s1 + $0x148] sm:$0xff]
  %v70 = vld [vmem:[%s1 + $0x150] sm:$0xff]
  %v71 = vld [vmem:[%s1 + $0x158] sm:$0xff]
  %v72 = vld [vmem:[%s1 + $0x160] sm:$0xff]
  %v73 = vld [vmem:[%s1 + $0x168] sm:$0xff]
  %v74 = vld [vmem:[%s1 + $0x170] sm:$0xff]
  %v75 = vld [vmem:[%s1 + $0x178] sm:$0xff]
  %v76 = vld [vmem:[%s1 + $0x180] sm:$0xff]
  %v77 = vld [vmem:[%s1 + $0x188] sm:$0xff]
  %v78 = vld [vmem:[%s1 + $0x190] sm:$0xff]
  %v79 = vld [vmem:[%s1 + $0x198] sm:$0xff]
  %v80 = vld [vmem:[%s1 + $0x1a0] sm:$0xff]
  %v81 = vld [vmem:[%s1 + $0x1a8] sm:$0xff]
  %v82 = vld [vmem:[%s1 + $0x1b0] sm:$0xff]
  %v83 = vld [vmem:[%s1 + $0x1b8] sm:$0xff]
  %v84 = vld [vmem:[%s1 + $0x1c0] sm:$0xff]
  %v85 = vld [vmem:[%s1 + $0x1c8] sm:$0xff]
  %v86 = vld [vmem:[%s1 + $0x1d0] sm:$0xff]
  %v87 = vld [vmem:[%s1 + $0x1d8] sm:$0xff]
  %v88 = vld [vmem:[%s1 + $0x1e0] sm:$0xff]
  %v89 = vld [vmem:[%s1 + $0x1e8] sm:$0xff]
  %v90 = vld [vmem:[%s1 + $0x1f0] sm:$0xff]
  %v91 = vld [vmem:[%s1 + $0x1f8] sm:$0xff]
  %v94 = vunpack.c.l.b16 %v26
  %v95 = vunpack.c.h.b16 %v26
  %v96 = vunpack.c.l.b16 %v27
  %v97 = vunpack.c.h.b16 %v27
  %v98 = vpack.c.b16 %v96, %v94
  %v99 = vpack.c.b16 %v97, %v95
  %v166 = vunpack.c.l.b16 %v28
  %v167 = vunpack.c.h.b16 %v28
  %v168 = vunpack.c.l.b16 %v29
  %v169 = vunpack.c.h.b16 %v29
  %v170 = vunpack.c.l.b16 %v30
  %v171 = vunpack.c.h.b16 %v30
  %v172 = vunpack.c.l.b16 %v31
  %v173 = vunpack.c.h.b16 %v31
  %v174 = vunpack.c.l.b16 %v32
  %v175 = vunpack.c.h.b16 %v32
  %v176 = vunpack.c.l.b16 %v33
  %v177 = vunpack.c.h.b16 %v33
  %v178 = vunpack.c.l.b16 %v34
  %v179 = vunpack.c.h.b16 %v34
  %v180 = vunpack.c.l.b16 %v35
  %v181 = vunpack.c.h.b16 %v35
  %v182 = vunpack.c.l.b16 %v36
  %v183 = vunpack.c.h.b16 %v36
  %v184 = vunpack.c.l.b16 %v37
  %v185 = vunpack.c.h.b16 %v37
  %v186 = vunpack.c.l.b16 %v38
  %v187 = vunpack.c.h.b16 %v38
  %v188 = vunpack.c.l.b16 %v39
  %v189 = vunpack.c.h.b16 %v39
  %v190 = vunpack.c.l.b16 %v40
  %v191 = vunpack.c.h.b16 %v40
  %v192 = vunpack.c.l.b16 %v41
  %v193 = vunpack.c.h.b16 %v41
  %v194 = vunpack.c.l.b16 %v42
  %v195 = vunpack.c.h.b16 %v42
  %v196 = vunpack.c.l.b16 %v43
  %v197 = vunpack.c.h.b16 %v43
  %v198 = vunpack.c.l.b16 %v44
  %v199 = vunpack.c.h.b16 %v44
  %v200 = vunpack.c.l.b16 %v45
  %v201 = vunpack.c.h.b16 %v45
  %v202 = vunpack.c.l.b16 %v46
  %v203 = vunpack.c.h.b16 %v46
  %v204 = vunpack.c.l.b16 %v47
  %v205 = vunpack.c.h.b16 %v47
  %v206 = vunpack.c.l.b16 %v48
  %v207 = vunpack.c.h.b16 %v48
  %v208 = vunpack.c.l.b16 %v49
  %v209 = vunpack.c.h.b16 %v49
  %v210 = vunpack.c.l.b16 %v50
  %v211 = vunpack.c.h.b16 %v50
  %v212 = vunpack.c.l.b16 %v51
  %v213 = vunpack.c.h.b16 %v51
  %v214 = vunpack.c.l.b16 %v52
  %v215 = vunpack.c.h.b16 %v52
  %v216 = vunpack.c.l.b16 %v53
  %v217 = vunpack.c.h.b16 %v53
  %v218 = vunpack.c.l.b16 %v54
  %v219 = vunpack.c.h.b16 %v54
  %v220 = vunpack.c.l.b16 %v55
  %v221 = vunpack.c.h.b16 %v55
  %v222 = vunpack.c.l.b16 %v56
  %v223 = vunpack.c.h.b16 %v56
  %v224 = vunpack.c.l.b16 %v57
  %v225 = vunpack.c.h.b16 %v57
  %v226 = vunpack.c.l.b16 %v58
  %v227 = vunpack.c.h.b16 %v58
  %v228 = vunpack.c.l.b16 %v59
  %v229 = vunpack.c.h.b16 %v59
  %v230 = vunpack.c.l.b16 %v60
  %v231 = vunpack.c.h.b16 %v60
  %v232 = vunpack.c.l.b16 %v61
  %v233 = vunpack.c.h.b16 %v61
  %v234 = vunpack.c.l.b16 %v62
  %v235 = vunpack.c.h.b16 %v62
  %v236 = vunpack.c.l.b16 %v63
  %v237 = vunpack.c.h.b16 %v63
  %v238 = vunpack.c.l.b16 %v64
  %v239 = vunpack.c.h.b16 %v64
  %v240 = vunpack.c.l.b16 %v65
  %v241 = vunpack.c.h.b16 %v65
  %v242 = vunpack.c.l.b16 %v66
  %v243 = vunpack.c.h.b16 %v66
  %v244 = vunpack.c.l.b16 %v67
  %v245 = vunpack.c.h.b16 %v67
  %v246 = vunpack.c.l.b16 %v68
  %v247 = vunpack.c.h.b16 %v68
  %v248 = vunpack.c.l.b16 %v69
  %v249 = vunpack.c.h.b16 %v69
  %v250 = vunpack.c.l.b16 %v70
  %v251 = vunpack.c.h.b16 %v70
  %v252 = vunpack.c.l.b16 %v71
  %v253 = vunpack.c.h.b16 %v71
  %v254 = vunpack.c.l.b16 %v72
  %v255 = vunpack.c.h.b16 %v72
  %v256 = vunpack.c.l.b16 %v73
  %v257 = vunpack.c.h.b16 %v73
  %v258 = vunpack.c.l.b16 %v74
  %v259 = vunpack.c.h.b16 %v74
  %v260 = vunpack.c.l.b16 %v75
  %v261 = vunpack.c.h.b16 %v75
  %v262 = vunpack.c.l.b16 %v76
  %v263 = vunpack.c.h.b16 %v76
  %v264 = vunpack.c.l.b16 %v77
  %v265 = vunpack.c.h.b16 %v77
  %v266 = vunpack.c.l.b16 %v78
  %v267 = vunpack.c.h.b16 %v78
  %v268 = vunpack.c.l.b16 %v79
  %v269 = vunpack.c.h.b16 %v79
  %v270 = vunpack.c.l.b16 %v80
  %v271 = vunpack.c.h.b16 %v80
  %v272 = vunpack.c.l.b16 %v81
  %v273 = vunpack.c.h.b16 %v81
  %v274 = vunpack.c.l.b16 %v82
  %v275 = vunpack.c.h.b16 %v82
  %v276 = vunpack.c.l.b16 %v83
  %v277 = vunpack.c.h.b16 %v83
  %v278 = vunpack.c.l.b16 %v84
  %v279 = vunpack.c.h.b16 %v84
  %v280 = vunpack.c.l.b16 %v85
  %v281 = vunpack.c.h.b16 %v85
  %v282 = vunpack.c.l.b16 %v86
  %v283 = vunpack.c.h.b16 %v86
  %v284 = vunpack.c.l.b16 %v87
  %v285 = vunpack.c.h.b16 %v87
  %v286 = vunpack.c.l.b16 %v88
  %v287 = vunpack.c.h.b16 %v88
  %v288 = vunpack.c.l.b16 %v89
  %v289 = vunpack.c.h.b16 %v89
  %v290 = vunpack.c.l.b16 %v90
  %v291 = vunpack.c.h.b16 %v90
  %v292 = vunpack.c.l.b16 %v91
  %v293 = vunpack.c.h.b16 %v91
  %v294 = vpack.c.b16 %v170, %v166
  %v295 = vpack.c.b16 %v171, %v167
  %v296 = vpack.c.b16 %v172, %v168
  %v297 = vpack.c.b16 %v173, %v169
  %v298 = vpack.c.b16 %v178, %v174
  %v299 = vpack.c.b16 %v179, %v175
  %v300 = vpack.c.b16 %v180, %v176
  %v301 = vpack.c.b16 %v181, %v177
  %v302 = vpack.c.b16 %v186, %v182
  %v303 = vpack.c.b16 %v187, %v183
  %v304 = vpack.c.b16 %v188, %v184
  %v305 = vpack.c.b16 %v189, %v185
  %v306 = vpack.c.b16 %v194, %v190
  %v307 = vpack.c.b16 %v195, %v191
  %v308 = vpack.c.b16 %v196, %v192
  %v309 = vpack.c.b16 %v197, %v193
  %v310 = vpack.c.b16 %v202, %v198
  %v311 = vpack.c.b16 %v203, %v199
  %v312 = vpack.c.b16 %v204, %v200
  %v313 = vpack.c.b16 %v205, %v201
  %v314 = vpack.c.b16 %v210, %v206
  %v315 = vpack.c.b16 %v211, %v207
  %v316 = vpack.c.b16 %v212, %v208
  %v317 = vpack.c.b16 %v213, %v209
  %v318 = vpack.c.b16 %v218, %v214
  %v319 = vpack.c.b16 %v219, %v215
  %v320 = vpack.c.b16 %v220, %v216
  %v321 = vpack.c.b16 %v221, %v217
  %v322 = vpack.c.b16 %v226, %v222
  %v323 = vpack.c.b16 %v227, %v223
  %v324 = vpack.c.b16 %v228, %v224
  %v325 = vpack.c.b16 %v229, %v225
  %v326 = vpack.c.b16 %v234, %v230
  %v327 = vpack.c.b16 %v235, %v231
  %v328 = vpack.c.b16 %v236, %v232
  %v329 = vpack.c.b16 %v237, %v233
  %v330 = vpack.c.b16 %v242, %v238
  %v331 = vpack.c.b16 %v243, %v239
  %v332 = vpack.c.b16 %v244, %v240
  %v333 = vpack.c.b16 %v245, %v241
  %v334 = vpack.c.b16 %v250, %v246
  %v335 = vpack.c.b16 %v251, %v247
  %v336 = vpack.c.b16 %v252, %v248
  %v337 = vpack.c.b16 %v253, %v249
  %v338 = vpack.c.b16 %v258, %v254
  %v339 = vpack.c.b16 %v259, %v255
  %v340 = vpack.c.b16 %v260, %v256
  %v341 = vpack.c.b16 %v261, %v257
  %v342 = vpack.c.b16 %v266, %v262
  %v343 = vpack.c.b16 %v267, %v263
  %v344 = vpack.c.b16 %v268, %v264
  %v345 = vpack.c.b16 %v269, %v265
  %v346 = vpack.c.b16 %v274, %v270
  %v347 = vpack.c.b16 %v275, %v271
  %v348 = vpack.c.b16 %v276, %v272
  %v349 = vpack.c.b16 %v277, %v273
  %v350 = vpack.c.b16 %v282, %v278
  %v351 = vpack.c.b16 %v283, %v279
  %v352 = vpack.c.b16 %v284, %v280
  %v353 = vpack.c.b16 %v285, %v281
  %v354 = vpack.c.b16 %v290, %v286
  %v355 = vpack.c.b16 %v291, %v287
  %v356 = vpack.c.b16 %v292, %v288
  %v357 = vpack.c.b16 %v293, %v289
  %422 = vmatprep.subr.bf16.mxu0 %v295
  %423 = vmatpush1.bf16.msra.mxu0 %v294
  %424 = vmatprep.subr.bf16.mxu0 %v299
  %425 = vmatpush1.bf16.msra.mxu0 %v298
  %426 = vmatprep.subr.bf16.mxu0 %v303
  %427 = vmatpush1.bf16.msra.mxu0 %v302
  %428 = vmatprep.subr.bf16.mxu0 %v307
  %429 = vmatpush1.bf16.msra.mxu0 %v306
  %430 = vmatprep.subr.bf16.mxu0 %v311
  %431 = vmatpush1.bf16.msra.mxu0 %v310
  %432 = vmatprep.subr.bf16.mxu0 %v315
  %433 = vmatpush1.bf16.msra.mxu0 %v314
  %434 = vmatprep.subr.bf16.mxu0 %v319
  %435 = vmatpush1.bf16.msra.mxu0 %v318
  %436 = vmatprep.subr.bf16.mxu0 %v323
  %437 = vmatpush1.bf16.msra.mxu0 %v322
  %438 = vmatprep.subr.bf16.mxu0 %v327
  %439 = vmatpush1.bf16.msra.mxu0 %v326
  %440 = vmatprep.subr.bf16.mxu0 %v331
  %441 = vmatpush1.bf16.msra.mxu0 %v330
  %442 = vmatprep.subr.bf16.mxu0 %v335
  %443 = vmatpush1.bf16.msra.mxu0 %v334
  %444 = vmatprep.subr.bf16.mxu0 %v339
  %445 = vmatpush1.bf16.msra.mxu0 %v338
  %446 = vmatprep.subr.bf16.mxu0 %v343
  %447 = vmatpush1.bf16.msra.mxu0 %v342
  %448 = vmatprep.subr.bf16.mxu0 %v347
  %449 = vmatpush1.bf16.msra.mxu0 %v346
  %450 = vmatprep.subr.bf16.mxu0 %v351
  %451 = vmatpush1.bf16.msra.mxu0 %v350
  %452 = vmatprep.subr.bf16.mxu0 %v355
  %453 = vmatpush1.bf16.msra.mxu0 %v354
  %454 = vmatprep.mubr.bf16.mxu0 %v99
  %455 = vmatmul.mubr.bf16.gmra.mrb[0].mxu0 %v98
  %v456 = vpop.f32.mrb[0].mxu0
  %v457 = vadd.f32 0.0, %v456
  %v458 = vpop.f32.mrb[0].mxu0
  %v459 = vadd.f32 0.0, %v458
  %v460 = vpop.f32.mrb[0].mxu0
  %v461 = vadd.f32 0.0, %v460
  %v462 = vpop.f32.mrb[0].mxu0
  %v463 = vadd.f32 0.0, %v462
  %464 = vdwg.mxu0
  %465 = vmatprep.subr.bf16.mxu0 %v297
  %466 = vmatpush1.bf16.msra.mxu0 %v296
  %467 = vmatprep.subr.bf16.mxu0 %v301
  %468 = vmatpush1.bf16.msra.mxu0 %v300
  %469 = vmatprep.subr.bf16.mxu0 %v305
  %470 = vmatpush1.bf16.msra.mxu0 %v304
  %471 = vmatprep.subr.bf16.mxu0 %v309
  %472 = vmatpush1.bf16.msra.mxu0 %v308
  %473 = vmatprep.subr.bf16.mxu0 %v313
  %474 = vmatpush1.bf16.msra.mxu0 %v312
  %475 = vmatprep.subr.bf16.mxu0 %v317
  %476 = vmatpush1.bf16.msra.mxu0 %v316
  %477 = vmatprep.subr.bf16.mxu0 %v321
  %478 = vmatpush1.bf16.msra.mxu0 %v320
  %479 = vmatprep.subr.bf16.mxu0 %v325
  %480 = vmatpush1.bf16.msra.mxu0 %v324
  %481 = vmatprep.subr.bf16.mxu0 %v329
  %482 = vmatpush1.bf16.msra.mxu0 %v328
  %483 = vmatprep.subr.bf16.mxu0 %v333
  %484 = vmatpush1.bf16.msra.mxu0 %v332
  %485 = vmatprep.subr.bf16.mxu0 %v337
  %486 = vmatpush1.bf16.msra.mxu0 %v336
  %487 = vmatprep.subr.bf16.mxu0 %v341
  %488 = vmatpush1.bf16.msra.mxu0 %v340
  %489 = vmatprep.subr.bf16.mxu0 %v345
  %490 = vmatpush1.bf16.msra.mxu0 %v344
  %491 = vmatprep.subr.bf16.mxu0 %v349
  %492 = vmatpush1.bf16.msra.mxu0 %v348
  %493 = vmatprep.subr.bf16.mxu0 %v353
  %494 = vmatpush1.bf16.msra.mxu0 %v352
  %495 = vmatprep.subr.bf16.mxu0 %v357
  %496 = vmatpush1.bf16.msra.mxu0 %v356
  %497 = vmatprep.mubr.bf16.mxu0 %v99
  %498 = vmatmul.mubr.bf16.gmra.mrb[0].mxu0 %v98
  %v499 = vpop.f32.mrb[0].mxu0
  %v500 = vadd.f32 0.0, %v499
  %v501 = vpop.f32.mrb[0].mxu0
  %v502 = vadd.f32 0.0, %v501
  %v503 = vpop.f32.mrb[0].mxu0
  %v504 = vadd.f32 0.0, %v503
  %v505 = vpop.f32.mrb[0].mxu0
  %v506 = vadd.f32 0.0, %v505
  %507 = vdwg.mxu0
  %v508 = vld [vmem:[%s2] sm:$0xf]
  %v510 = vlaneseq
  %v511 = vshrl.u32 %v510, 7
  %v512 = vsub.s32 0, %v511
  %v513 = vrot.slane %v508, %v512
  %v514 = vlaneseq
  %v515 = vshrl.u32 %v514, 7
  %v516 = vsub.s32 1, %v515
  %v517 = vrot.slane %v508, %v516
  %v518 = vlaneseq
  %v519 = vshrl.u32 %v518, 7
  %v520 = vsub.s32 2, %v519
  %v521 = vrot.slane %v508, %v520
  %v522 = vlaneseq
  %v523 = vshrl.u32 %v522, 7
  %v524 = vsub.s32 3, %v523
  %v525 = vrot.slane %v508, %v524
  %v530 = vmul.f32 %v457, %v513
  %v531 = vmul.f32 %v459, %v517
  %v532 = vmul.f32 %v500, %v521
  %v533 = vmul.f32 %v502, %v525
  %v534 = vmul.f32 %v461, %v513
  %v535 = vmul.f32 %v463, %v517
  %v536 = vmul.f32 %v504, %v521
  %v537 = vmul.f32 %v506, %v525
  %v538 = vld [vmem:[%s3] sm:$0xf]
  %v540 = vlaneseq
  %v541 = vshrl.u32 %v540, 7
  %v542 = vsub.s32 0, %v541
  %v543 = vrot.slane %v538, %v542
  %v544 = vlaneseq
  %v545 = vshrl.u32 %v544, 7
  %v546 = vsub.s32 1, %v545
  %v547 = vrot.slane %v538, %v546
  %v548 = vlaneseq
  %v549 = vshrl.u32 %v548, 7
  %v550 = vsub.s32 2, %v549
  %v551 = vrot.slane %v538, %v550
  %v552 = vlaneseq
  %v553 = vshrl.u32 %v552, 7
  %v554 = vsub.s32 3, %v553
  %v555 = vrot.slane %v538, %v554
  %v560 = vadd.f32 %v530, %v543
  %v561 = vadd.f32 %v531, %v547
  %v562 = vadd.f32 %v532, %v551
  %v563 = vadd.f32 %v533, %v555
  %v564 = vadd.f32 %v534, %v543
  %v565 = vadd.f32 %v535, %v547
  %v566 = vadd.f32 %v536, %v551
  %v567 = vadd.f32 %v537, %v555
  %v568 = vmax.f32 %v560, 0.0
  %v569 = vmax.f32 %v561, 0.0
  %v570 = vmax.f32 %v562, 0.0
  %v571 = vmax.f32 %v563, 0.0
  %v572 = vmax.f32 %v564, 0.0
  %v573 = vmax.f32 %v565, 0.0
  %v574 = vmax.f32 %v566, 0.0
  %v575 = vmax.f32 %v567, 0.0
  %v576 = vpack.c.bf16 %v572, %v568
  %v577 = vpack.c.bf16 %v573, %v569
  %v578 = vpack.c.bf16 %v574, %v570
  %v579 = vpack.c.bf16 %v575, %v571
  %v580 = vld [vmem:[%s4] sm:$0xff]
  %v581 = vld [vmem:[%s4 + $0x8] sm:$0xff]
  %v582 = vld [vmem:[%s4 + $0x10] sm:$0xff]
  %v583 = vld [vmem:[%s4 + $0x18] sm:$0xff]
  %v584 = vld [vmem:[%s4 + $0x20] sm:$0xff]
  %v585 = vld [vmem:[%s4 + $0x28] sm:$0xff]
  %v586 = vld [vmem:[%s4 + $0x30] sm:$0xff]
  %v587 = vld [vmem:[%s4 + $0x38] sm:$0xff]
  %v588 = vld [vmem:[%s4 + $0x40] sm:$0xff]
  %v589 = vld [vmem:[%s4 + $0x48] sm:$0xff]
  %v590 = vld [vmem:[%s4 + $0x50] sm:$0xff]
  %v591 = vld [vmem:[%s4 + $0x58] sm:$0xff]
  %v592 = vld [vmem:[%s4 + $0x60] sm:$0xff]
  %v593 = vld [vmem:[%s4 + $0x68] sm:$0xff]
  %v594 = vld [vmem:[%s4 + $0x70] sm:$0xff]
  %v595 = vld [vmem:[%s4 + $0x78] sm:$0xff]
  %v596 = vld [vmem:[%s4 + $0x80] sm:$0xff]
  %v597 = vld [vmem:[%s4 + $0x88] sm:$0xff]
  %v598 = vld [vmem:[%s4 + $0x90] sm:$0xff]
  %v599 = vld [vmem:[%s4 + $0x98] sm:$0xff]
  %v600 = vld [vmem:[%s4 + $0xa0] sm:$0xff]
  %v601 = vld [vmem:[%s4 + $0xa8] sm:$0xff]
  %v602 = vld [vmem:[%s4 + $0xb0] sm:$0xff]
  %v603 = vld [vmem:[%s4 + $0xb8] sm:$0xff]
  %v604 = vld [vmem:[%s4 + $0xc0] sm:$0xff]
  %v605 = vld [vmem:[%s4 + $0xc8] sm:$0xff]
  %v606 = vld [vmem:[%s4 + $0xd0] sm:$0xff]
  %v607 = vld [vmem:[%s4 + $0xd8] sm:$0xff]
  %v608 = vld [vmem:[%s4 + $0xe0] sm:$0xff]
  %v609 = vld [vmem:[%s4 + $0xe8] sm:$0xff]
  %v610 = vld [vmem:[%s4 + $0xf0] sm:$0xff]
  %v611 = vld [vmem:[%s4 + $0xf8] sm:$0xff]
  %v612 = vld [vmem:[%s4 + $0x100] sm:$0xff]
  %v613 = vld [vmem:[%s4 + $0x108] sm:$0xff]
  %v614 = vld [vmem:[%s4 + $0x110] sm:$0xff]
  %v615 = vld [vmem:[%s4 + $0x118] sm:$0xff]
  %v616 = vld [vmem:[%s4 + $0x120] sm:$0xff]
  %v617 = vld [vmem:[%s4 + $0x128] sm:$0xff]
  %v618 = vld [vmem:[%s4 + $0x130] sm:$0xff]
  %v619 = vld [vmem:[%s4 + $0x138] sm:$0xff]
  %v620 = vld [vmem:[%s4 + $0x140] sm:$0xff]
  %v621 = vld [vmem:[%s4 + $0x148] sm:$0xff]
  %v622 = vld [vmem:[%s4 + $0x150] sm:$0xff]
  %v623 = vld [vmem:[%s4 + $0x158] sm:$0xff]
  %v624 = vld [vmem:[%s4 + $0x160] sm:$0xff]
  %v625 = vld [vmem:[%s4 + $0x168] sm:$0xff]
  %v626 = vld [vmem:[%s4 + $0x170] sm:$0xff]
  %v627 = vld [vmem:[%s4 + $0x178] sm:$0xff]
  %v628 = vld [vmem:[%s4 + $0x180] sm:$0xff]
  %v629 = vld [vmem:[%s4 + $0x188] sm:$0xff]
  %v630 = vld [vmem:[%s4 + $0x190] sm:$0xff]
  %v631 = vld [vmem:[%s4 + $0x198] sm:$0xff]
  %v632 = vld [vmem:[%s4 + $0x1a0] sm:$0xff]
  %v633 = vld [vmem:[%s4 + $0x1a8] sm:$0xff]
  %v634 = vld [vmem:[%s4 + $0x1b0] sm:$0xff]
  %v635 = vld [vmem:[%s4 + $0x1b8] sm:$0xff]
  %v636 = vld [vmem:[%s4 + $0x1c0] sm:$0xff]
  %v637 = vld [vmem:[%s4 + $0x1c8] sm:$0xff]
  %v638 = vld [vmem:[%s4 + $0x1d0] sm:$0xff]
  %v639 = vld [vmem:[%s4 + $0x1d8] sm:$0xff]
  %v640 = vld [vmem:[%s4 + $0x1e0] sm:$0xff]
  %v641 = vld [vmem:[%s4 + $0x1e8] sm:$0xff]
  %v642 = vld [vmem:[%s4 + $0x1f0] sm:$0xff]
  %v643 = vld [vmem:[%s4 + $0x1f8] sm:$0xff]
  %v644 = vld [vmem:[%s4 + $0x200] sm:$0xff]
  %v645 = vld [vmem:[%s4 + $0x208] sm:$0xff]
  %v646 = vld [vmem:[%s4 + $0x210] sm:$0xff]
  %v647 = vld [vmem:[%s4 + $0x218] sm:$0xff]
  %v648 = vld [vmem:[%s4 + $0x220] sm:$0xff]
  %v649 = vld [vmem:[%s4 + $0x228] sm:$0xff]
  %v650 = vld [vmem:[%s4 + $0x230] sm:$0xff]
  %v651 = vld [vmem:[%s4 + $0x238] sm:$0xff]
  %v652 = vld [vmem:[%s4 + $0x240] sm:$0xff]
  %v653 = vld [vmem:[%s4 + $0x248] sm:$0xff]
  %v654 = vld [vmem:[%s4 + $0x250] sm:$0xff]
  %v655 = vld [vmem:[%s4 + $0x258] sm:$0xff]
  %v656 = vld [vmem:[%s4 + $0x260] sm:$0xff]
  %v657 = vld [vmem:[%s4 + $0x268] sm:$0xff]
  %v658 = vld [vmem:[%s4 + $0x270] sm:$0xff]
  %v659 = vld [vmem:[%s4 + $0x278] sm:$0xff]
  %v660 = vld [vmem:[%s4 + $0x280] sm:$0xff]
  %v661 = vld [vmem:[%s4 + $0x288] sm:$0xff]
  %v662 = vld [vmem:[%s4 + $0x290] sm:$0xff]
  %v663 = vld [vmem:[%s4 + $0x298] sm:$0xff]
  %v664 = vld [vmem:[%s4 + $0x2a0] sm:$0xff]
  %v665 = vld [vmem:[%s4 + $0x2a8] sm:$0xff]
  %v666 = vld [vmem:[%s4 + $0x2b0] sm:$0xff]
  %v667 = vld [vmem:[%s4 + $0x2b8] sm:$0xff]
  %v668 = vld [vmem:[%s4 + $0x2c0] sm:$0xff]
  %v669 = vld [vmem:[%s4 + $0x2c8] sm:$0xff]
  %v670 = vld [vmem:[%s4 + $0x2d0] sm:$0xff]
  %v671 = vld [vmem:[%s4 + $0x2d8] sm:$0xff]
  %v672 = vld [vmem:[%s4 + $0x2e0] sm:$0xff]
  %v673 = vld [vmem:[%s4 + $0x2e8] sm:$0xff]
  %v674 = vld [vmem:[%s4 + $0x2f0] sm:$0xff]
  %v675 = vld [vmem:[%s4 + $0x2f8] sm:$0xff]
  %v676 = vld [vmem:[%s4 + $0x300] sm:$0xff]
  %v677 = vld [vmem:[%s4 + $0x308] sm:$0xff]
  %v678 = vld [vmem:[%s4 + $0x310] sm:$0xff]
  %v679 = vld [vmem:[%s4 + $0x318] sm:$0xff]
  %v680 = vld [vmem:[%s4 + $0x320] sm:$0xff]
  %v681 = vld [vmem:[%s4 + $0x328] sm:$0xff]
  %v682 = vld [vmem:[%s4 + $0x330] sm:$0xff]
  %v683 = vld [vmem:[%s4 + $0x338] sm:$0xff]
  %v684 = vld [vmem:[%s4 + $0x340] sm:$0xff]
  %v685 = vld [vmem:[%s4 + $0x348] sm:$0xff]
  %v686 = vld [vmem:[%s4 + $0x350] sm:$0xff]
  %v687 = vld [vmem:[%s4 + $0x358] sm:$0xff]
  %v688 = vld [vmem:[%s4 + $0x360] sm:$0xff]
  %v689 = vld [vmem:[%s4 + $0x368] sm:$0xff]
  %v690 = vld [vmem:[%s4 + $0x370] sm:$0xff]
  %v691 = vld [vmem:[%s4 + $0x378] sm:$0xff]
  %v692 = vld [vmem:[%s4 + $0x380] sm:$0xff]
  %v693 = vld [vmem:[%s4 + $0x388] sm:$0xff]
  %v694 = vld [vmem:[%s4 + $0x390] sm:$0xff]
  %v695 = vld [vmem:[%s4 + $0x398] sm:$0xff]
  %v696 = vld [vmem:[%s4 + $0x3a0] sm:$0xff]
  %v697 = vld [vmem:[%s4 + $0x3a8] sm:$0xff]
  %v698 = vld [vmem:[%s4 + $0x3b0] sm:$0xff]
  %v699 = vld [vmem:[%s4 + $0x3b8] sm:$0xff]
  %v700 = vld [vmem:[%s4 + $0x3c0] sm:$0xff]
  %v701 = vld [vmem:[%s4 + $0x3c8] sm:$0xff]
  %v702 = vld [vmem:[%s4 + $0x3d0] sm:$0xff]
  %v703 = vld [vmem:[%s4 + $0x3d8] sm:$0xff]
  %v704 = vld [vmem:[%s4 + $0x3e0] sm:$0xff]
  %v705 = vld [vmem:[%s4 + $0x3e8] sm:$0xff]
  %v706 = vld [vmem:[%s4 + $0x3f0] sm:$0xff]
  %v707 = vld [vmem:[%s4 + $0x3f8] sm:$0xff]
  %v836 = vunpack.c.l.b16 %v580
  %v837 = vunpack.c.h.b16 %v580
  %v838 = vunpack.c.l.b16 %v581
  %v839 = vunpack.c.h.b16 %v581
  %v840 = vunpack.c.l.b16 %v582
  %v841 = vunpack.c.h.b16 %v582
  %v842 = vunpack.c.l.b16 %v583
  %v843 = vunpack.c.h.b16 %v583
  %v844 = vunpack.c.l.b16 %v584
  %v845 = vunpack.c.h.b16 %v584
  %v846 = vunpack.c.l.b16 %v585
  %v847 = vunpack.c.h.b16 %v585
  %v848 = vunpack.c.l.b16 %v586
  %v849 = vunpack.c.h.b16 %v586
  %v850 = vunpack.c.l.b16 %v587
  %v851 = vunpack.c.h.b16 %v587
  %v852 = vunpack.c.l.b16 %v588
  %v853 = vunpack.c.h.b16 %v588
  %v854 = vunpack.c.l.b16 %v589
  %v855 = vunpack.c.h.b16 %v589
  %v856 = vunpack.c.l.b16 %v590
  %v857 = vunpack.c.h.b16 %v590
  %v858 = vunpack.c.l.b16 %v591
  %v859 = vunpack.c.h.b16 %v591
  %v860 = vunpack.c.l.b16 %v592
  %v861 = vunpack.c.h.b16 %v592
  %v862 = vunpack.c.l.b16 %v593
  %v863 = vunpack.c.h.b16 %v593
  %v864 = vunpack.c.l.b16 %v594
  %v865 = vunpack.c.h.b16 %v594
  %v866 = vunpack.c.l.b16 %v595
  %v867 = vunpack.c.h.b16 %v595
  %v868 = vunpack.c.l.b16 %v596
  %v869 = vunpack.c.h.b16 %v596
  %v870 = vunpack.c.l.b16 %v597
  %v871 = vunpack.c.h.b16 %v597
  %v872 = vunpack.c.l.b16 %v598
  %v873 = vunpack.c.h.b16 %v598
  %v874 = vunpack.c.l.b16 %v599
  %v875 = vunpack.c.h.b16 %v599
  %v876 = vunpack.c.l.b16 %v600
  %v877 = vunpack.c.h.b16 %v600
  %v878 = vunpack.c.l.b16 %v601
  %v879 = vunpack.c.h.b16 %v601
  %v880 = vunpack.c.l.b16 %v602
  %v881 = vunpack.c.h.b16 %v602
  %v882 = vunpack.c.l.b16 %v603
  %v883 = vunpack.c.h.b16 %v603
  %v884 = vunpack.c.l.b16 %v604
  %v885 = vunpack.c.h.b16 %v604
  %v886 = vunpack.c.l.b16 %v605
  %v887 = vunpack.c.h.b16 %v605
  %v888 = vunpack.c.l.b16 %v606
  %v889 = vunpack.c.h.b16 %v606
  %v890 = vunpack.c.l.b16 %v607
  %v891 = vunpack.c.h.b16 %v607
  %v892 = vunpack.c.l.b16 %v608
  %v893 = vunpack.c.h.b16 %v608
  %v894 = vunpack.c.l.b16 %v609
  %v895 = vunpack.c.h.b16 %v609
  %v896 = vunpack.c.l.b16 %v610
  %v897 = vunpack.c.h.b16 %v610
  %v898 = vunpack.c.l.b16 %v611
  %v899 = vunpack.c.h.b16 %v611
  %v900 = vunpack.c.l.b16 %v612
  %v901 = vunpack.c.h.b16 %v612
  %v902 = vunpack.c.l.b16 %v613
  %v903 = vunpack.c.h.b16 %v613
  %v904 = vunpack.c.l.b16 %v614
  %v905 = vunpack.c.h.b16 %v614
  %v906 = vunpack.c.l.b16 %v615
  %v907 = vunpack.c.h.b16 %v615
  %v908 = vunpack.c.l.b16 %v616
  %v909 = vunpack.c.h.b16 %v616
  %v910 = vunpack.c.l.b16 %v617
  %v911 = vunpack.c.h.b16 %v617
  %v912 = vunpack.c.l.b16 %v618
  %v913 = vunpack.c.h.b16 %v618
  %v914 = vunpack.c.l.b16 %v619
  %v915 = vunpack.c.h.b16 %v619
  %v916 = vunpack.c.l.b16 %v620
  %v917 = vunpack.c.h.b16 %v620
  %v918 = vunpack.c.l.b16 %v621
  %v919 = vunpack.c.h.b16 %v621
  %v920 = vunpack.c.l.b16 %v622
  %v921 = vunpack.c.h.b16 %v622
  %v922 = vunpack.c.l.b16 %v623
  %v923 = vunpack.c.h.b16 %v623
  %v924 = vunpack.c.l.b16 %v624
  %v925 = vunpack.c.h.b16 %v624
  %v926 = vunpack.c.l.b16 %v625
  %v927 = vunpack.c.h.b16 %v625
  %v928 = vunpack.c.l.b16 %v626
  %v929 = vunpack.c.h.b16 %v626
  %v930 = vunpack.c.l.b16 %v627
  %v931 = vunpack.c.h.b16 %v627
  %v932 = vunpack.c.l.b16 %v628
  %v933 = vunpack.c.h.b16 %v628
  %v934 = vunpack.c.l.b16 %v629
  %v935 = vunpack.c.h.b16 %v629
  %v936 = vunpack.c.l.b16 %v630
  %v937 = vunpack.c.h.b16 %v630
  %v938 = vunpack.c.l.b16 %v631
  %v939 = vunpack.c.h.b16 %v631
  %v940 = vunpack.c.l.b16 %v632
  %v941 = vunpack.c.h.b16 %v632
  %v942 = vunpack.c.l.b16 %v633
  %v943 = vunpack.c.h.b16 %v633
  %v944 = vunpack.c.l.b16 %v634
  %v945 = vunpack.c.h.b16 %v634
  %v946 = vunpack.c.l.b16 %v635
  %v947 = vunpack.c.h.b16 %v635
  %v948 = vunpack.c.l.b16 %v636
  %v949 = vunpack.c.h.b16 %v636
  %v950 = vunpack.c.l.b16 %v637
  %v951 = vunpack.c.h.b16 %v637
  %v952 = vunpack.c.l.b16 %v638
  %v953 = vunpack.c.h.b16 %v638
  %v954 = vunpack.c.l.b16 %v639
  %v955 = vunpack.c.h.b16 %v639
  %v956 = vunpack.c.l.b16 %v640
  %v957 = vunpack.c.h.b16 %v640
  %v958 = vunpack.c.l.b16 %v641
  %v959 = vunpack.c.h.b16 %v641
  %v960 = vunpack.c.l.b16 %v642
  %v961 = vunpack.c.h.b16 %v642
  %v962 = vunpack.c.l.b16 %v643
  %v963 = vunpack.c.h.b16 %v643
  %v964 = vunpack.c.l.b16 %v644
  %v965 = vunpack.c.h.b16 %v644
  %v966 = vunpack.c.l.b16 %v645
  %v967 = vunpack.c.h.b16 %v645
  %v968 = vunpack.c.l.b16 %v646
  %v969 = vunpack.c.h.b16 %v646
  %v970 = vunpack.c.l.b16 %v647
  %v971 = vunpack.c.h.b16 %v647
  %v972 = vunpack.c.l.b16 %v648
  %v973 = vunpack.c.h.b16 %v648
  %v974 = vunpack.c.l.b16 %v649
  %v975 = vunpack.c.h.b16 %v649
  %v976 = vunpack.c.l.b16 %v650
  %v977 = vunpack.c.h.b16 %v650
  %v978 = vunpack.c.l.b16 %v651
  %v979 = vunpack.c.h.b16 %v651
  %v980 = vunpack.c.l.b16 %v652
  %v981 = vunpack.c.h.b16 %v652
  %v982 = vunpack.c.l.b16 %v653
  %v983 = vunpack.c.h.b16 %v653
  %v984 = vunpack.c.l.b16 %v654
  %v985 = vunpack.c.h.b16 %v654
  %v986 = vunpack.c.l.b16 %v655
  %v987 = vunpack.c.h.b16 %v655
  %v988 = vunpack.c.l.b16 %v656
  %v989 = vunpack.c.h.b16 %v656
  %v990 = vunpack.c.l.b16 %v657
  %v991 = vunpack.c.h.b16 %v657
  %v992 = vunpack.c.l.b16 %v658
  %v993 = vunpack.c.h.b16 %v658
  %v994 = vunpack.c.l.b16 %v659
  %v995 = vunpack.c.h.b16 %v659
  %v996 = vunpack.c.l.b16 %v660
  %v997 = vunpack.c.h.b16 %v660
  %v998 = vunpack.c.l.b16 %v661
  %v999 = vunpack.c.h.b16 %v661
  %v1000 = vunpack.c.l.b16 %v662
  %v1001 = vunpack.c.h.b16 %v662
  %v1002 = vunpack.c.l.b16 %v663
  %v1003 = vunpack.c.h.b16 %v663
  %v1004 = vunpack.c.l.b16 %v664
  %v1005 = vunpack.c.h.b16 %v664
  %v1006 = vunpack.c.l.b16 %v665
  %v1007 = vunpack.c.h.b16 %v665
  %v1008 = vunpack.c.l.b16 %v666
  %v1009 = vunpack.c.h.b16 %v666
  %v1010 = vunpack.c.l.b16 %v667
  %v1011 = vunpack.c.h.b16 %v667
  %v1012 = vunpack.c.l.b16 %v668
  %v1013 = vunpack.c.h.b16 %v668
  %v1014 = vunpack.c.l.b16 %v669
  %v1015 = vunpack.c.h.b16 %v669
  %v1016 = vunpack.c.l.b16 %v670
  %v1017 = vunpack.c.h.b16 %v670
  %v1018 = vunpack.c.l.b16 %v671
  %v1019 = vunpack.c.h.b16 %v671
  %v1020 = vunpack.c.l.b16 %v672
  %v1021 = vunpack.c.h.b16 %v672
  %v1022 = vunpack.c.l.b16 %v673
  %v1023 = vunpack.c.h.b16 %v673
  %v1024 = vunpack.c.l.b16 %v674
  %v1025 = vunpack.c.h.b16 %v674
  %v1026 = vunpack.c.l.b16 %v675
  %v1027 = vunpack.c.h.b16 %v675
  %v1028 = vunpack.c.l.b16 %v676
  %v1029 = vunpack.c.h.b16 %v676
  %v1030 = vunpack.c.l.b16 %v677
  %v1031 = vunpack.c.h.b16 %v677
  %v1032 = vunpack.c.l.b16 %v678
  %v1033 = vunpack.c.h.b16 %v678
  %v1034 = vunpack.c.l.b16 %v679
  %v1035 = vunpack.c.h.b16 %v679
  %v1036 = vunpack.c.l.b16 %v680
  %v1037 = vunpack.c.h.b16 %v680
  %v1038 = vunpack.c.l.b16 %v681
  %v1039 = vunpack.c.h.b16 %v681
  %v1040 = vunpack.c.l.b16 %v682
  %v1041 = vunpack.c.h.b16 %v682
  %v1042 = vunpack.c.l.b16 %v683
  %v1043 = vunpack.c.h.b16 %v683
  %v1044 = vunpack.c.l.b16 %v684
  %v1045 = vunpack.c.h.b16 %v684
  %v1046 = vunpack.c.l.b16 %v685
  %v1047 = vunpack.c.h.b16 %v685
  %v1048 = vunpack.c.l.b16 %v686
  %v1049 = vunpack.c.h.b16 %v686
  %v1050 = vunpack.c.l.b16 %v687
  %v1051 = vunpack.c.h.b16 %v687
  %v1052 = vunpack.c.l.b16 %v688
  %v1053 = vunpack.c.h.b16 %v688
  %v1054 = vunpack.c.l.b16 %v689
  %v1055 = vunpack.c.h.b16 %v689
  %v1056 = vunpack.c.l.b16 %v690
  %v1057 = vunpack.c.h.b16 %v690
  %v1058 = vunpack.c.l.b16 %v691
  %v1059 = vunpack.c.h.b16 %v691
  %v1060 = vunpack.c.l.b16 %v692
  %v1061 = vunpack.c.h.b16 %v692
  %v1062 = vunpack.c.l.b16 %v693
  %v1063 = vunpack.c.h.b16 %v693
  %v1064 = vunpack.c.l.b16 %v694
  %v1065 = vunpack.c.h.b16 %v694
  %v1066 = vunpack.c.l.b16 %v695
  %v1067 = vunpack.c.h.b16 %v695
  %v1068 = vunpack.c.l.b16 %v696
  %v1069 = vunpack.c.h.b16 %v696
  %v1070 = vunpack.c.l.b16 %v697
  %v1071 = vunpack.c.h.b16 %v697
  %v1072 = vunpack.c.l.b16 %v698
  %v1073 = vunpack.c.h.b16 %v698
  %v1074 = vunpack.c.l.b16 %v699
  %v1075 = vunpack.c.h.b16 %v699
  %v1076 = vunpack.c.l.b16 %v700
  %v1077 = vunpack.c.h.b16 %v700
  %v1078 = vunpack.c.l.b16 %v701
  %v1079 = vunpack.c.h.b16 %v701
  %v1080 = vunpack.c.l.b16 %v702
  %v1081 = vunpack.c.h.b16 %v702
  %v1082 = vunpack.c.l.b16 %v703
  %v1083 = vunpack.c.h.b16 %v703
  %v1084 = vunpack.c.l.b16 %v704
  %v1085 = vunpack.c.h.b16 %v704
  %v1086 = vunpack.c.l.b16 %v705
  %v1087 = vunpack.c.h.b16 %v705
  %v1088 = vunpack.c.l.b16 %v706
  %v1089 = vunpack.c.h.b16 %v706
  %v1090 = vunpack.c.l.b16 %v707
  %v1091 = vunpack.c.h.b16 %v707
  %v1092 = vpack.c.b16 %v840, %v836
  %v1093 = vpack.c.b16 %v841, %v837
  %v1094 = vpack.c.b16 %v842, %v838
  %v1095 = vpack.c.b16 %v843, %v839
  %v1096 = vpack.c.b16 %v848, %v844
  %v1097 = vpack.c.b16 %v849, %v845
  %v1098 = vpack.c.b16 %v850, %v846
  %v1099 = vpack.c.b16 %v851, %v847
  %v1100 = vpack.c.b16 %v856, %v852
  %v1101 = vpack.c.b16 %v857, %v853
  %v1102 = vpack.c.b16 %v858, %v854
  %v1103 = vpack.c.b16 %v859, %v855
  %v1104 = vpack.c.b16 %v864, %v860
  %v1105 = vpack.c.b16 %v865, %v861
  %v1106 = vpack.c.b16 %v866, %v862
  %v1107 = vpack.c.b16 %v867, %v863
  %v1108 = vpack.c.b16 %v872, %v868
  %v1109 = vpack.c.b16 %v873, %v869
  %v1110 = vpack.c.b16 %v874, %v870
  %v1111 = vpack.c.b16 %v875, %v871
  %v1112 = vpack.c.b16 %v880, %v876
  %v1113 = vpack.c.b16 %v881, %v877
  %v1114 = vpack.c.b16 %v882, %v878
  %v1115 = vpack.c.b16 %v883, %v879
  %v1116 = vpack.c.b16 %v888, %v884
  %v1117 = vpack.c.b16 %v889, %v885
  %v1118 = vpack.c.b16 %v890, %v886
  %v1119 = vpack.c.b16 %v891, %v887
  %v1120 = vpack.c.b16 %v896, %v892
  %v1121 = vpack.c.b16 %v897, %v893
  %v1122 = vpack.c.b16 %v898, %v894
  %v1123 = vpack.c.b16 %v899, %v895
  %v1124 = vpack.c.b16 %v904, %v900
  %v1125 = vpack.c.b16 %v905, %v901
  %v1126 = vpack.c.b16 %v906, %v902
  %v1127 = vpack.c.b16 %v907, %v903
  %v1128 = vpack.c.b16 %v912, %v908
  %v1129 = vpack.c.b16 %v913, %v909
  %v1130 = vpack.c.b16 %v914, %v910
  %v1131 = vpack.c.b16 %v915, %v911
  %v1132 = vpack.c.b16 %v920, %v916
  %v1133 = vpack.c.b16 %v921, %v917
  %v1134 = vpack.c.b16 %v922, %v918
  %v1135 = vpack.c.b16 %v923, %v919
  %v1136 = vpack.c.b16 %v928, %v924
  %v1137 = vpack.c.b16 %v929, %v925
  %v1138 = vpack.c.b16 %v930, %v926
  %v1139 = vpack.c.b16 %v931, %v927
  %v1140 = vpack.c.b16 %v936, %v932
  %v1141 = vpack.c.b16 %v937, %v933
  %v1142 = vpack.c.b16 %v938, %v934
  %v1143 = vpack.c.b16 %v939, %v935
  %v1144 = vpack.c.b16 %v944, %v940
  %v1145 = vpack.c.b16 %v945, %v941
  %v1146 = vpack.c.b16 %v946, %v942
  %v1147 = vpack.c.b16 %v947, %v943
  %v1148 = vpack.c.b16 %v952, %v948
  %v1149 = vpack.c.b16 %v953, %v949
  %v1150 = vpack.c.b16 %v954, %v950
  %v1151 = vpack.c.b16 %v955, %v951
  %v1152 = vpack.c.b16 %v960, %v956
  %v1153 = vpack.c.b16 %v961, %v957
  %v1154 = vpack.c.b16 %v962, %v958
  %v1155 = vpack.c.b16 %v963, %v959
  %v1156 = vpack.c.b16 %v968, %v964
  %v1157 = vpack.c.b16 %v969, %v965
  %v1158 = vpack.c.b16 %v970, %v966
  %v1159 = vpack.c.b16 %v971, %v967
  %v1160 = vpack.c.b16 %v976, %v972
  %v1161 = vpack.c.b16 %v977, %v973
  %v1162 = vpack.c.b16 %v978, %v974
  %v1163 = vpack.c.b16 %v979, %v975
  %v1164 = vpack.c.b16 %v984, %v980
  %v1165 = vpack.c.b16 %v985, %v981
  %v1166 = vpack.c.b16 %v986, %v982
  %v1167 = vpack.c.b16 %v987, %v983
  %v1168 = vpack.c.b16 %v992, %v988
  %v1169 = vpack.c.b16 %v993, %v989
  %v1170 = vpack.c.b16 %v994, %v990
  %v1171 = vpack.c.b16 %v995, %v991
  %v1172 = vpack.c.b16 %v1000, %v996
  %v1173 = vpack.c.b16 %v1001, %v997
  %v1174 = vpack.c.b16 %v1002, %v998
  %v1175 = vpack.c.b16 %v1003, %v999
  %v1176 = vpack.c.b16 %v1008, %v1004
  %v1177 = vpack.c.b16 %v1009, %v1005
  %v1178 = vpack.c.b16 %v1010, %v1006
  %v1179 = vpack.c.b16 %v1011, %v1007
  %v1180 = vpack.c.b16 %v1016, %v1012
  %v1181 = vpack.c.b16 %v1017, %v1013
  %v1182 = vpack.c.b16 %v1018, %v1014
  %v1183 = vpack.c.b16 %v1019, %v1015
  %v1184 = vpack.c.b16 %v1024, %v1020
  %v1185 = vpack.c.b16 %v1025, %v1021
  %v1186 = vpack.c.b16 %v1026, %v1022
  %v1187 = vpack.c.b16 %v1027, %v1023
  %v1188 = vpack.c.b16 %v1032, %v1028
  %v1189 = vpack.c.b16 %v1033, %v1029
  %v1190 = vpack.c.b16 %v1034, %v1030
  %v1191 = vpack.c.b16 %v1035, %v1031
  %v1192 = vpack.c.b16 %v1040, %v1036
  %v1193 = vpack.c.b16 %v1041, %v1037
  %v1194 = vpack.c.b16 %v1042, %v1038
  %v1195 = vpack.c.b16 %v1043, %v1039
  %v1196 = vpack.c.b16 %v1048, %v1044
  %v1197 = vpack.c.b16 %v1049, %v1045
  %v1198 = vpack.c.b16 %v1050, %v1046
  %v1199 = vpack.c.b16 %v1051, %v1047
  %v1200 = vpack.c.b16 %v1056, %v1052
  %v1201 = vpack.c.b16 %v1057, %v1053
  %v1202 = vpack.c.b16 %v1058, %v1054
  %v1203 = vpack.c.b16 %v1059, %v1055
  %v1204 = vpack.c.b16 %v1064, %v1060
  %v1205 = vpack.c.b16 %v1065, %v1061
  %v1206 = vpack.c.b16 %v1066, %v1062
  %v1207 = vpack.c.b16 %v1067, %v1063
  %v1208 = vpack.c.b16 %v1072, %v1068
  %v1209 = vpack.c.b16 %v1073, %v1069
  %v1210 = vpack.c.b16 %v1074, %v1070
  %v1211 = vpack.c.b16 %v1075, %v1071
  %v1212 = vpack.c.b16 %v1080, %v1076
  %v1213 = vpack.c.b16 %v1081, %v1077
  %v1214 = vpack.c.b16 %v1082, %v1078
  %v1215 = vpack.c.b16 %v1083, %v1079
  %v1216 = vpack.c.b16 %v1088, %v1084
  %v1217 = vpack.c.b16 %v1089, %v1085
  %v1218 = vpack.c.b16 %v1090, %v1086
  %v1219 = vpack.c.b16 %v1091, %v1087
  %1348 = vmatprep.subr.bf16.mxu0 %v1093
  %1349 = vmatpush1.bf16.msra.mxu0 %v1092
  %1350 = vmatprep.subr.bf16.mxu0 %v1097
  %1351 = vmatpush1.bf16.msra.mxu0 %v1096
  %1352 = vmatprep.subr.bf16.mxu0 %v1101
  %1353 = vmatpush1.bf16.msra.mxu0 %v1100
  %1354 = vmatprep.subr.bf16.mxu0 %v1105
  %1355 = vmatpush1.bf16.msra.mxu0 %v1104
  %1356 = vmatprep.subr.bf16.mxu0 %v1109
  %1357 = vmatpush1.bf16.msra.mxu0 %v1108
  %1358 = vmatprep.subr.bf16.mxu0 %v1113
  %1359 = vmatpush1.bf16.msra.mxu0 %v1112
  %1360 = vmatprep.subr.bf16.mxu0 %v1117
  %1361 = vmatpush1.bf16.msra.mxu0 %v1116
  %1362 = vmatprep.subr.bf16.mxu0 %v1121
  %1363 = vmatpush1.bf16.msra.mxu0 %v1120
  %1364 = vmatprep.subr.bf16.mxu0 %v1125
  %1365 = vmatpush1.bf16.msra.mxu0 %v1124
  %1366 = vmatprep.subr.bf16.mxu0 %v1129
  %1367 = vmatpush1.bf16.msra.mxu0 %v1128
  %1368 = vmatprep.subr.bf16.mxu0 %v1133
  %1369 = vmatpush1.bf16.msra.mxu0 %v1132
  %1370 = vmatprep.subr.bf16.mxu0 %v1137
  %1371 = vmatpush1.bf16.msra.mxu0 %v1136
  %1372 = vmatprep.subr.bf16.mxu0 %v1141
  %1373 = vmatpush1.bf16.msra.mxu0 %v1140
  %1374 = vmatprep.subr.bf16.mxu0 %v1145
  %1375 = vmatpush1.bf16.msra.mxu0 %v1144
  %1376 = vmatprep.subr.bf16.mxu0 %v1149
  %1377 = vmatpush1.bf16.msra.mxu0 %v1148
  %1378 = vmatprep.subr.bf16.mxu0 %v1153
  %1379 = vmatpush1.bf16.msra.mxu0 %v1152
  %1380 = vmatprep.mubr.bf16.mxu0 %v577
  %1381 = vmatmul.mubr.bf16.gmra.mrb[0].mxu0 %v576
  %v1382 = vpop.f32.mrb[0].mxu0
  %v1383 = vadd.f32 0.0, %v1382
  %v1384 = vpop.f32.mrb[0].mxu0
  %v1385 = vadd.f32 0.0, %v1384
  %v1386 = vpop.f32.mrb[0].mxu0
  %v1387 = vadd.f32 0.0, %v1386
  %v1388 = vpop.f32.mrb[0].mxu0
  %v1389 = vadd.f32 0.0, %v1388
  %1390 = vdwg.mxu0
  %1391 = vmatprep.subr.bf16.mxu0 %v1157
  %1392 = vmatpush1.bf16.msra.mxu0 %v1156
  %1393 = vmatprep.subr.bf16.mxu0 %v1161
  %1394 = vmatpush1.bf16.msra.mxu0 %v1160
  %1395 = vmatprep.subr.bf16.mxu0 %v1165
  %1396 = vmatpush1.bf16.msra.mxu0 %v1164
  %1397 = vmatprep.subr.bf16.mxu0 %v1169
  %1398 = vmatpush1.bf16.msra.mxu0 %v1168
  %1399 = vmatprep.subr.bf16.mxu0 %v1173
  %1400 = vmatpush1.bf16.msra.mxu0 %v1172
  %1401 = vmatprep.subr.bf16.mxu0 %v1177
  %1402 = vmatpush1.bf16.msra.mxu0 %v1176
  %1403 = vmatprep.subr.bf16.mxu0 %v1181
  %1404 = vmatpush1.bf16.msra.mxu0 %v1180
  %1405 = vmatprep.subr.bf16.mxu0 %v1185
  %1406 = vmatpush1.bf16.msra.mxu0 %v1184
  %1407 = vmatprep.subr.bf16.mxu0 %v1189
  %1408 = vmatpush1.bf16.msra.mxu0 %v1188
  %1409 = vmatprep.subr.bf16.mxu0 %v1193
  %1410 = vmatpush1.bf16.msra.mxu0 %v1192
  %1411 = vmatprep.subr.bf16.mxu0 %v1197
  %1412 = vmatpush1.bf16.msra.mxu0 %v1196
  %1413 = vmatprep.subr.bf16.mxu0 %v1201
  %1414 = vmatpush1.bf16.msra.mxu0 %v1200
  %1415 = vmatprep.subr.bf16.mxu0 %v1205
  %1416 = vmatpush1.bf16.msra.mxu0 %v1204
  %1417 = vmatprep.subr.bf16.mxu0 %v1209
  %1418 = vmatpush1.bf16.msra.mxu0 %v1208
  %1419 = vmatprep.subr.bf16.mxu0 %v1213
  %1420 = vmatpush1.bf16.msra.mxu0 %v1212
  %1421 = vmatprep.subr.bf16.mxu0 %v1217
  %1422 = vmatpush1.bf16.msra.mxu0 %v1216
  %1423 = vmatprep.mubr.bf16.mxu0 %v579
  %1424 = vmatmul.mubr.bf16.gmra.mrb[0].mxu0 %v578
  %v1425 = vpop.f32.mrb[0].mxu0
  %v1426 = vadd.f32 %v1383, %v1425
  %v1427 = vpop.f32.mrb[0].mxu0
  %v1428 = vadd.f32 %v1385, %v1427
  %v1429 = vpop.f32.mrb[0].mxu0
  %v1430 = vadd.f32 %v1387, %v1429
  %v1431 = vpop.f32.mrb[0].mxu0
  %v1432 = vadd.f32 %v1389, %v1431
  %1433 = vdwg.mxu0
  %1434 = vmatprep.subr.bf16.mxu0 %v1095
  %1435 = vmatpush1.bf16.msra.mxu0 %v1094
  %1436 = vmatprep.subr.bf16.mxu0 %v1099
  %1437 = vmatpush1.bf16.msra.mxu0 %v1098
  %1438 = vmatprep.subr.bf16.mxu0 %v1103
  %1439 = vmatpush1.bf16.msra.mxu0 %v1102
  %1440 = vmatprep.subr.bf16.mxu0 %v1107
  %1441 = vmatpush1.bf16.msra.mxu0 %v1106
  %1442 = vmatprep.subr.bf16.mxu0 %v1111
  %1443 = vmatpush1.bf16.msra.mxu0 %v1110
  %1444 = vmatprep.subr.bf16.mxu0 %v1115
  %1445 = vmatpush1.bf16.msra.mxu0 %v1114
  %1446 = vmatprep.subr.bf16.mxu0 %v1119
  %1447 = vmatpush1.bf16.msra.mxu0 %v1118
  %1448 = vmatprep.subr.bf16.mxu0 %v1123
  %1449 = vmatpush1.bf16.msra.mxu0 %v1122
  %1450 = vmatprep.subr.bf16.mxu0 %v1127
  %1451 = vmatpush1.bf16.msra.mxu0 %v1126
  %1452 = vmatprep.subr.bf16.mxu0 %v1131
  %1453 = vmatpush1.bf16.msra.mxu0 %v1130
  %1454 = vmatprep.subr.bf16.mxu0 %v1135
  %1455 = vmatpush1.bf16.msra.mxu0 %v1134
  %1456 = vmatprep.subr.bf16.mxu0 %v1139
  %1457 = vmatpush1.bf16.msra.mxu0 %v1138
  %1458 = vmatprep.subr.bf16.mxu0 %v1143
  %1459 = vmatpush1.bf16.msra.mxu0 %v1142
  %1460 = vmatprep.subr.bf16.mxu0 %v1147
  %1461 = vmatpush1.bf16.msra.mxu0 %v1146
  %1462 = vmatprep.subr.bf16.mxu0 %v1151
  %1463 = vmatpush1.bf16.msra.mxu0 %v1150
  %1464 = vmatprep.subr.bf16.mxu0 %v1155
  %1465 = vmatpush1.bf16.msra.mxu0 %v1154
  %1466 = vmatprep.mubr.bf16.mxu0 %v577
  %1467 = vmatmul.mubr.bf16.gmra.mrb[0].mxu0 %v576
  %v1468 = vpop.f32.mrb[0].mxu0
  %v1469 = vadd.f32 0.0, %v1468
  %v1470 = vpop.f32.mrb[0].mxu0
  %v1471 = vadd.f32 0.0, %v1470
  %v1472 = vpop.f32.mrb[0].mxu0
  %v1473 = vadd.f32 0.0, %v1472
  %v1474 = vpop.f32.mrb[0].mxu0
  %v1475 = vadd.f32 0.0, %v1474
  %1476 = vdwg.mxu0
  %1477 = vmatprep.subr.bf16.mxu0 %v1159
  %1478 = vmatpush1.bf16.msra.mxu0 %v1158
  %1479 = vmatprep.subr.bf16.mxu0 %v1163
  %1480 = vmatpush1.bf16.msra.mxu0 %v1162
  %1481 = vmatprep.subr.bf16.mxu0 %v1167
  %1482 = vmatpush1.bf16.msra.mxu0 %v1166
  %1483 = vmatprep.subr.bf16.mxu0 %v1171
  %1484 = vmatpush1.bf16.msra.mxu0 %v1170
  %1485 = vmatprep.subr.bf16.mxu0 %v1175
  %1486 = vmatpush1.bf16.msra.mxu0 %v1174
  %1487 = vmatprep.subr.bf16.mxu0 %v1179
  %1488 = vmatpush1.bf16.msra.mxu0 %v1178
  %1489 = vmatprep.subr.bf16.mxu0 %v1183
  %1490 = vmatpush1.bf16.msra.mxu0 %v1182
  %1491 = vmatprep.subr.bf16.mxu0 %v1187
  %1492 = vmatpush1.bf16.msra.mxu0 %v1186
  %1493 = vmatprep.subr.bf16.mxu0 %v1191
  %1494 = vmatpush1.bf16.msra.mxu0 %v1190
  %1495 = vmatprep.subr.bf16.mxu0 %v1195
  %1496 = vmatpush1.bf16.msra.mxu0 %v1194
  %1497 = vmatprep.subr.bf16.mxu0 %v1199
  %1498 = vmatpush1.bf16.msra.mxu0 %v1198
  %1499 = vmatprep.subr.bf16.mxu0 %v1203
  %1500 = vmatpush1.bf16.msra.mxu0 %v1202
  %1501 = vmatprep.subr.bf16.mxu0 %v1207
  %1502 = vmatpush1.bf16.msra.mxu0 %v1206
  %1503 = vmatprep.subr.bf16.mxu0 %v1211
  %1504 = vmatpush1.bf16.msra.mxu0 %v1210
  %1505 = vmatprep.subr.bf16.mxu0 %v1215
  %1506 = vmatpush1.bf16.msra.mxu0 %v1214
  %1507 = vmatprep.subr.bf16.mxu0 %v1219
  %1508 = vmatpush1.bf16.msra.mxu0 %v1218
  %1509 = vmatprep.mubr.bf16.mxu0 %v579
  %1510 = vmatmul.mubr.bf16.gmra.mrb[0].mxu0 %v578
  %v1511 = vpop.f32.mrb[0].mxu0
  %v1512 = vadd.f32 %v1469, %v1511
  %v1513 = vpop.f32.mrb[0].mxu0
  %v1514 = vadd.f32 %v1471, %v1513
  %v1515 = vpop.f32.mrb[0].mxu0
  %v1516 = vadd.f32 %v1473, %v1515
  %v1517 = vpop.f32.mrb[0].mxu0
  %v1518 = vadd.f32 %v1475, %v1517
  %1519 = vdwg.mxu0
  %v1520 = vld [vmem:[%s5] sm:$0xf]
  %v1522 = vlaneseq
  %v1523 = vshrl.u32 %v1522, 7
  %v1524 = vsub.s32 0, %v1523
  %v1525 = vrot.slane %v1520, %v1524
  %v1526 = vlaneseq
  %v1527 = vshrl.u32 %v1526, 7
  %v1528 = vsub.s32 1, %v1527
  %v1529 = vrot.slane %v1520, %v1528
  %v1530 = vlaneseq
  %v1531 = vshrl.u32 %v1530, 7
  %v1532 = vsub.s32 2, %v1531
  %v1533 = vrot.slane %v1520, %v1532
  %v1534 = vlaneseq
  %v1535 = vshrl.u32 %v1534, 7
  %v1536 = vsub.s32 3, %v1535
  %v1537 = vrot.slane %v1520, %v1536
  %v1542 = vmul.f32 %v1426, %v1525
  %v1543 = vmul.f32 %v1428, %v1529
  %v1544 = vmul.f32 %v1512, %v1533
  %v1545 = vmul.f32 %v1514, %v1537
  %v1546 = vmul.f32 %v1430, %v1525
  %v1547 = vmul.f32 %v1432, %v1529
  %v1548 = vmul.f32 %v1516, %v1533
  %v1549 = vmul.f32 %v1518, %v1537
  %v1550 = vld [vmem:[%s6] sm:$0xf]
  %v1552 = vlaneseq
  %v1553 = vshrl.u32 %v1552, 7
  %v1554 = vsub.s32 0, %v1553
  %v1555 = vrot.slane %v1550, %v1554
  %v1556 = vlaneseq
  %v1557 = vshrl.u32 %v1556, 7
  %v1558 = vsub.s32 1, %v1557
  %v1559 = vrot.slane %v1550, %v1558
  %v1560 = vlaneseq
  %v1561 = vshrl.u32 %v1560, 7
  %v1562 = vsub.s32 2, %v1561
  %v1563 = vrot.slane %v1550, %v1562
  %v1564 = vlaneseq
  %v1565 = vshrl.u32 %v1564, 7
  %v1566 = vsub.s32 3, %v1565
  %v1567 = vrot.slane %v1550, %v1566
  %v1572 = vadd.f32 %v1542, %v1555
  %v1573 = vadd.f32 %v1543, %v1559
  %v1574 = vadd.f32 %v1544, %v1563
  %v1575 = vadd.f32 %v1545, %v1567
  %v1576 = vadd.f32 %v1546, %v1555
  %v1577 = vadd.f32 %v1547, %v1559
  %v1578 = vadd.f32 %v1548, %v1563
  %v1579 = vadd.f32 %v1549, %v1567
  %v1580 = vmax.f32 %v1572, 0.0
  %v1581 = vmax.f32 %v1573, 0.0
  %v1582 = vmax.f32 %v1574, 0.0
  %v1583 = vmax.f32 %v1575, 0.0
  %v1584 = vmax.f32 %v1576, 0.0
  %v1585 = vmax.f32 %v1577, 0.0
  %v1586 = vmax.f32 %v1578, 0.0
  %v1587 = vmax.f32 %v1579, 0.0
  %v1588 = vpack.c.bf16 %v1584, %v1580
  %v1589 = vpack.c.bf16 %v1585, %v1581
  %v1590 = vpack.c.bf16 %v1586, %v1582
  %v1591 = vpack.c.bf16 %v1587, %v1583
  %v1596 = vunpack.c.l.b16 %v1588
  %v1597 = vunpack.c.l.b16 %v1589
  %v1598 = vunpack.c.l.b16 %v1590
  %v1599 = vunpack.c.l.b16 %v1591
  %v1600 = vunpack.c.h.b16 %v1588
  %v1601 = vunpack.c.h.b16 %v1589
  %v1602 = vunpack.c.h.b16 %v1590
  %v1603 = vunpack.c.h.b16 %v1591
  %v1604 = vpack.c.b16 %v1597, %v1596
  %v1605 = vpack.c.b16 %v1599, %v1598
  %v1606 = vpack.c.b16 %v1601, %v1600
  %v1607 = vpack.c.b16 %v1603, %v1602
  %1612 = vst [vmem:[%s7] sm:$0xff] %v1604
  %1613 = vst [vmem:[%s7 + $0x8] sm:$0xff] %v1605
  %1614 = vst [vmem:[%s7 + $0x10] sm:$0xff] %v1606
  %1615 = vst [vmem:[%s7 + $0x18] sm:$0xff] %v1607
  // Predicated region
  $region30: #{_lambda_.12} parent=0 // pred_check
    _
  $region31: #{_lambda_.12} parent=0 // pred_check_branch
    %1617 = sbr.rel (0) target = $region33
  $region32: #{_lambda_.12} parent=0 // pred_region
    _
  $region33: #{_lambda_.12} parent=0 // pred_fallthru
    _
  // Predicated region
  $region34: #{_lambda_.12} parent=0 // pred_check
    _
  $region35: #{_lambda_.12} parent=0 // pred_check_branch
    %1619 = sbr.rel (0) target = $region37
  $region36: #{_lambda_.12} parent=0 // pred_region
    _
  $region37: #{_lambda_.12} parent=0 // pred_fallthru
    _

// kernel: _lambda_.13
$region0: #{_lambda_.13}
  #allocation0 [shape = 'u32[]', space=smem, size = 0x4, offset = 0x4, fixed_abs, tag = 'smem constant byte address 0x4 - core index']
  #allocation1 [shape = 'u32[144,128]{1,0:T(1,128)}', space=vmem, size = 0x12000, scoped, tag = 'internal scratch']
  %s0 = inlined_call_operand.vmem [shape: bf16[2,1,512], index: 0, kind: input, shape index: {}]
  %s1 = inlined_call_operand.vmem [shape: bf16[512,1024], index: 1, kind: input, shape index: {}]
  %s2 = inlined_call_operand.vmem [shape: f32[1,1024], index: 2, kind: input, shape index: {}]
  %s3 = inlined_call_operand.hbm [shape: f32[2,1024], index: 3, kind: output, shape index: {}]
  %s4 = sld [smem:[#allocation0]]
  $region22: #{_lambda_.13} parent=0
    _
  %s6 = ssub.s32 1, %s4
  %s7 = scalar_select 0, %s6, %s4
  $region1: #{_lambda_.13} parent=0
    #allocation2 [shape = 'u8[8192]{0}', space=vmem, size = 0x2000, scoped, tag = 'output window, operand 0, single buffered']
    #allocation3 [shape = 's32[1]{0}', space=sflag, size = 0x4, scoped, tag = 'scoped memory for _lambda_.13']
    %8 = vsyncpa [#allocation3], 0
    // Predicated region
    $region2: #{_lambda_.13} parent=1 // pred_check
      _
    $region3: #{_lambda_.13} parent=1 // pred_check_branch
      %10 = sbr.rel (0) target = $region5
    $region4: #{_lambda_.13} parent=1 // pred_region
      _
    $region5: #{_lambda_.13} parent=1 // pred_fallthru
      _
    // Predicated region
    $region6: #{_lambda_.13} parent=1 // pred_check
      _
    $region7: #{_lambda_.13} parent=1 // pred_check_branch
      %12 = sbr.rel (0) target = $region9
    $region8: #{_lambda_.13} parent=1 // pred_region
      _
    $region9: #{_lambda_.13} parent=1 // pred_fallthru
      _
    // Predicated region
    $region10: #{_lambda_.13} parent=1 // pred_check
      _
    $region11: #{_lambda_.13} parent=1 // pred_check_branch
      %14 = sbr.rel (0) target = $region13
    $region12: #{_lambda_.13} parent=1 // pred_region
      _
    $region13: #{_lambda_.13} parent=1 // pred_fallthru
      _
    %v15 = vld [vmem:[%s0] sm:$0xf]
    %v16 = vld [vmem:[%s0 + $0x4] sm:$0xf]
    %v17 = vunpack.c.l.bf16 %v15
    %v18 = vunpack.c.l.bf16 %v16
    %v19 = vadd.f32 %v17, 0.0
    %v20 = vadd.f32 %v18, 0.0
    %v23 = vlaneseq
    %v24 = vshrl.u32 %v23, 7
    %v25 = vsub.s32 0, %v24
    %v26 = vrot.slane %v19, %v25
    %v27 = vlaneseq
    %v28 = vshrl.u32 %v27, 7
    %v29 = vsub.s32 2, %v28
    %v30 = vrot.slane %v19, %v29
    %v31 = vlaneseq
    %v32 = vshrl.u32 %v31, 7
    %v33 = vsub.s32 4, %v32
    %v34 = vrot.slane %v19, %v33
    %v35 = vlaneseq
    %v36 = vshrl.u32 %v35, 7
    %v37 = vsub.s32 6, %v36
    %v38 = vrot.slane %v19, %v37
    %v39 = vlaneseq
    %v40 = vshrl.u32 %v39, 7
    %v41 = vsub.s32 0, %v40
    %v42 = vrot.slane %v20, %v41
    %v43 = vlaneseq
    %v44 = vshrl.u32 %v43, 7
    %v45 = vsub.s32 2, %v44
    %v46 = vrot.slane %v20, %v45
    %v47 = vlaneseq
    %v48 = vshrl.u32 %v47, 7
    %v49 = vsub.s32 4, %v48
    %v50 = vrot.slane %v20, %v49
    %v51 = vlaneseq
    %v52 = vshrl.u32 %v51, 7
    %v53 = vsub.s32 6, %v52
    %v54 = vrot.slane %v20, %v53
    %v63 = vpack.c.bf16 %v26, %v26
    %v64 = vpack.c.bf16 %v30, %v30
    %v65 = vpack.c.bf16 %v34, %v34
    %v66 = vpack.c.bf16 %v38, %v38
    %v67 = vpack.c.bf16 %v42, %v42
    %v68 = vpack.c.bf16 %v46, %v46
    %v69 = vpack.c.bf16 %v50, %v50
    %v70 = vpack.c.bf16 %v54, %v54
    %v71 = vld [vmem:[%s1] sm:$0xff]
    %v72 = vld [vmem:[%s1 + $0x8] sm:$0xff]
    %v73 = vld [vmem:[%s1 + $0x10] sm:$0xff]
    %v74 = vld [vmem:[%s1 + $0x18] sm:$0xff]
    %v75 = vld [vmem:[%s1 + $0x20] sm:$0xff]
    %v76 = vld [vmem:[%s1 + $0x28] sm:$0xff]
    %v77 = vld [vmem:[%s1 + $0x30] sm:$0xff]
    %v78 = vld [vmem:[%s1 + $0x38] sm:$0xff]
    %v79 = vld [vmem:[%s1 + $0x40] sm:$0xff]
    %v80 = vld [vmem:[%s1 + $0x48] sm:$0xff]
    %v81 = vld [vmem:[%s1 + $0x50] sm:$0xff]
    %v82 = vld [vmem:[%s1 + $0x58] sm:$0xff]
    %v83 = vld [vmem:[%s1 + $0x60] sm:$0xff]
    %v84 = vld [vmem:[%s1 + $0x68] sm:$0xff]
    %v85 = vld [vmem:[%s1 + $0x70] sm:$0xff]
    %v86 = vld [vmem:[%s1 + $0x78] sm:$0xff]
    %v87 = vld [vmem:[%s1 + $0x80] sm:$0xff]
    %v88 = vld [vmem:[%s1 + $0x88] sm:$0xff]
    %v89 = vld [vmem:[%s1 + $0x90] sm:$0xff]
    %v90 = vld [vmem:[%s1 + $0x98] sm:$0xff]
    %v91 = vld [vmem:[%s1 + $0xa0] sm:$0xff]
    %v92 = vld [vmem:[%s1 + $0xa8] sm:$0xff]
    %v93 = vld [vmem:[%s1 + $0xb0] sm:$0xff]
    %v94 = vld [vmem:[%s1 + $0xb8] sm:$0xff]
    %v95 = vld [vmem:[%s1 + $0xc0] sm:$0xff]
    %v96 = vld [vmem:[%s1 + $0xc8] sm:$0xff]
    %v97 = vld [vmem:[%s1 + $0xd0] sm:$0xff]
    %v98 = vld [vmem:[%s1 + $0xd8] sm:$0xff]
    %v99 = vld [vmem:[%s1 + $0xe0] sm:$0xff]
    %v100 = vld [vmem:[%s1 + $0xe8] sm:$0xff]
    %v101 = vld [vmem:[%s1 + $0xf0] sm:$0xff]
    %v102 = vld [vmem:[%s1 + $0xf8] sm:$0xff]
    %v103 = vld [vmem:[%s1 + $0x100] sm:$0xff]
    %v104 = vld [vmem:[%s1 + $0x108] sm:$0xff]
    %v105 = vld [vmem:[%s1 + $0x110] sm:$0xff]
    %v106 = vld [vmem:[%s1 + $0x118] sm:$0xff]
    %v107 = vld [vmem:[%s1 + $0x120] sm:$0xff]
    %v108 = vld [vmem:[%s1 + $0x128] sm:$0xff]
    %v109 = vld [vmem:[%s1 + $0x130] sm:$0xff]
    %v110 = vld [vmem:[%s1 + $0x138] sm:$0xff]
    %v111 = vld [vmem:[%s1 + $0x140] sm:$0xff]
    %v112 = vld [vmem:[%s1 + $0x148] sm:$0xff]
    %v113 = vld [vmem:[%s1 + $0x150] sm:$0xff]
    %v114 = vld [vmem:[%s1 + $0x158] sm:$0xff]
    %v115 = vld [vmem:[%s1 + $0x160] sm:$0xff]
    %v116 = vld [vmem:[%s1 + $0x168] sm:$0xff]
    %v117 = vld [vmem:[%s1 + $0x170] sm:$0xff]
    %v118 = vld [vmem:[%s1 + $0x178] sm:$0xff]
    %v119 = vld [vmem:[%s1 + $0x180] sm:$0xff]
    %v120 = vld [vmem:[%s1 + $0x188] sm:$0xff]
    %v121 = vld [vmem:[%s1 + $0x190] sm:$0xff]
    %v122 = vld [vmem:[%s1 + $0x198] sm:$0xff]
    %v123 = vld [vmem:[%s1 + $0x1a0] sm:$0xff]
    %v124 = vld [vmem:[%s1 + $0x1a8] sm:$0xff]
    %v125 = vld [vmem:[%s1 + $0x1b0] sm:$0xff]
    %v126 = vld [vmem:[%s1 + $0x1b8] sm:$0xff]
    %v127 = vld [vmem:[%s1 + $0x1c0] sm:$0xff]
    %v128 = vld [vmem:[%s1 + $0x1c8] sm:$0xff]
    %v129 = vld [vmem:[%s1 + $0x1d0] sm:$0xff]
    %v130 = vld [vmem:[%s1 + $0x1d8] sm:$0xff]
    %v131 = vld [vmem:[%s1 + $0x1e0] sm:$0xff]
    %v132 = vld [vmem:[%s1 + $0x1e8] sm:$0xff]
    %v133 = vld [vmem:[%s1 + $0x1f0] sm:$0xff]
    %v134 = vld [vmem:[%s1 + $0x1f8] sm:$0xff]
    %v135 = vld [vmem:[%s1 + $0x200] sm:$0xff]
    %v136 = vld [vmem:[%s1 + $0x208] sm:$0xff]
    %v137 = vld [vmem:[%s1 + $0x210] sm:$0xff]
    %v138 = vld [vmem:[%s1 + $0x218] sm:$0xff]
    %v139 = vld [vmem:[%s1 + $0x220] sm:$0xff]
    %v140 = vld [vmem:[%s1 + $0x228] sm:$0xff]
    %v141 = vld [vmem:[%s1 + $0x230] sm:$0xff]
    %v142 = vld [vmem:[%s1 + $0x238] sm:$0xff]
    %v143 = vld [vmem:[%s1 + $0x240] sm:$0xff]
    %v144 = vld [vmem:[%s1 + $0x248] sm:$0xff]
    %v145 = vld [vmem:[%s1 + $0x250] sm:$0xff]
    %v146 = vld [vmem:[%s1 + $0x258] sm:$0xff]
    %v147 = vld [vmem:[%s1 + $0x260] sm:$0xff]
    %v148 = vld [vmem:[%s1 + $0x268] sm:$0xff]
    %v149 = vld [vmem:[%s1 + $0x270] sm:$0xff]
    %v150 = vld [vmem:[%s1 + $0x278] sm:$0xff]
    %v151 = vld [vmem:[%s1 + $0x280] sm:$0xff]
    %v152 = vld [vmem:[%s1 + $0x288] sm:$0xff]
    %v153 = vld [vmem:[%s1 + $0x290] sm:$0xff]
    %v154 = vld [vmem:[%s1 + $0x298] sm:$0xff]
    %v155 = vld [vmem:[%s1 + $0x2a0] sm:$0xff]
    %v156 = vld [vmem:[%s1 + $0x2a8] sm:$0xff]
    %v157 = vld [vmem:[%s1 + $0x2b0] sm:$0xff]
    %v158 = vld [vmem:[%s1 + $0x2b8] sm:$0xff]
    %v159 = vld [vmem:[%s1 + $0x2c0] sm:$0xff]
    %v160 = vld [vmem:[%s1 + $0x2c8] sm:$0xff]
    %v161 = vld [vmem:[%s1 + $0x2d0] sm:$0xff]
    %v162 = vld [vmem:[%s1 + $0x2d8] sm:$0xff]
    %v163 = vld [vmem:[%s1 + $0x2e0] sm:$0xff]
    %v164 = vld [vmem:[%s1 + $0x2e8] sm:$0xff]
    %v165 = vld [vmem:[%s1 + $0x2f0] sm:$0xff]
    %v166 = vld [vmem:[%s1 + $0x2f8] sm:$0xff]
    %v167 = vld [vmem:[%s1 + $0x300] sm:$0xff]
    %v168 = vld [vmem:[%s1 + $0x308] sm:$0xff]
    %v169 = vld [vmem:[%s1 + $0x310] sm:$0xff]
    %v170 = vld [vmem:[%s1 + $0x318] sm:$0xff]
    %v171 = vld [vmem:[%s1 + $0x320] sm:$0xff]
    %v172 = vld [vmem:[%s1 + $0x328] sm:$0xff]
    %v173 = vld [vmem:[%s1 + $0x330] sm:$0xff]
    %v174 = vld [vmem:[%s1 + $0x338] sm:$0xff]
    %v175 = vld [vmem:[%s1 + $0x340] sm:$0xff]
    %v176 = vld [vmem:[%s1 + $0x348] sm:$0xff]
    %v177 = vld [vmem:[%s1 + $0x350] sm:$0xff]
    %v178 = vld [vmem:[%s1 + $0x358] sm:$0xff]
    %v179 = vld [vmem:[%s1 + $0x360] sm:$0xff]
    %v180 = vld [vmem:[%s1 + $0x368] sm:$0xff]
    %v181 = vld [vmem:[%s1 + $0x370] sm:$0xff]
    %v182 = vld [vmem:[%s1 + $0x378] sm:$0xff]
    %v183 = vld [vmem:[%s1 + $0x380] sm:$0xff]
    %v184 = vld [vmem:[%s1 + $0x388] sm:$0xff]
    %v185 = vld [vmem:[%s1 + $0x390] sm:$0xff]
    %v186 = vld [vmem:[%s1 + $0x398] sm:$0xff]
    %v187 = vld [vmem:[%s1 + $0x3a0] sm:$0xff]
    %v188 = vld [vmem:[%s1 + $0x3a8] sm:$0xff]
    %v189 = vld [vmem:[%s1 + $0x3b0] sm:$0xff]
    %v190 = vld [vmem:[%s1 + $0x3b8] sm:$0xff]
    %v191 = vld [vmem:[%s1 + $0x3c0] sm:$0xff]
    %v192 = vld [vmem:[%s1 + $0x3c8] sm:$0xff]
    %v193 = vld [vmem:[%s1 + $0x3d0] sm:$0xff]
    %v194 = vld [vmem:[%s1 + $0x3d8] sm:$0xff]
    %v195 = vld [vmem:[%s1 + $0x3e0] sm:$0xff]
    %v196 = vld [vmem:[%s1 + $0x3e8] sm:$0xff]
    %v197 = vld [vmem:[%s1 + $0x3f0] sm:$0xff]
    %v198 = vld [vmem:[%s1 + $0x3f8] sm:$0xff]
    %v199 = vld [vmem:[%s1 + $0x400] sm:$0xff]
    %v200 = vld [vmem:[%s1 + $0x408] sm:$0xff]
    %v201 = vld [vmem:[%s1 + $0x410] sm:$0xff]
    %v202 = vld [vmem:[%s1 + $0x418] sm:$0xff]
    %v203 = vld [vmem:[%s1 + $0x420] sm:$0xff]
    %v204 = vld [vmem:[%s1 + $0x428] sm:$0xff]
    %v205 = vld [vmem:[%s1 + $0x430] sm:$0xff]
    %v206 = vld [vmem:[%s1 + $0x438] sm:$0xff]
    %v207 = vld [vmem:[%s1 + $0x440] sm:$0xff]
    %v208 = vld [vmem:[%s1 + $0x448] sm:$0xff]
    %v209 = vld [vmem:[%s1 + $0x450] sm:$0xff]
    %v210 = vld [vmem:[%s1 + $0x458] sm:$0xff]
    %v211 = vld [vmem:[%s1 + $0x460] sm:$0xff]
    %v212 = vld [vmem:[%s1 + $0x468] sm:$0xff]
    %v213 = vld [vmem:[%s1 + $0x470] sm:$0xff]
    %v214 = vld [vmem:[%s1 + $0x478] sm:$0xff]
    %v215 = vld [vmem:[%s1 + $0x480] sm:$0xff]
    %v216 = vld [vmem:[%s1 + $0x488] sm:$0xff]
    %v217 = vld [vmem:[%s1 + $0x490] sm:$0xff]
    %v218 = vld [vmem:[%s1 + $0x498] sm:$0xff]
    %v219 = vld [vmem:[%s1 + $0x4a0] sm:$0xff]
    %v220 = vld [vmem:[%s1 + $0x4a8] sm:$0xff]
    %v221 = vld [vmem:[%s1 + $0x4b0] sm:$0xff]
    %v222 = vld [vmem:[%s1 + $0x4b8] sm:$0xff]
    %v223 = vld [vmem:[%s1 + $0x4c0] sm:$0xff]
    %v224 = vld [vmem:[%s1 + $0x4c8] sm:$0xff]
    %v225 = vld [vmem:[%s1 + $0x4d0] sm:$0xff]
    %v226 = vld [vmem:[%s1 + $0x4d8] sm:$0xff]
    %v227 = vld [vmem:[%s1 + $0x4e0] sm:$0xff]
    %v228 = vld [vmem:[%s1 + $0x4e8] sm:$0xff]
    %v229 = vld [vmem:[%s1 + $0x4f0] sm:$0xff]
    %v230 = vld [vmem:[%s1 + $0x4f8] sm:$0xff]
    %v231 = vld [vmem:[%s1 + $0x500] sm:$0xff]
    %v232 = vld [vmem:[%s1 + $0x508] sm:$0xff]
    %v233 = vld [vmem:[%s1 + $0x510] sm:$0xff]
    %v234 = vld [vmem:[%s1 + $0x518] sm:$0xff]
    %v235 = vld [vmem:[%s1 + $0x520] sm:$0xff]
    %v236 = vld [vmem:[%s1 + $0x528] sm:$0xff]
    %v237 = vld [vmem:[%s1 + $0x530] sm:$0xff]
    %v238 = vld [vmem:[%s1 + $0x538] sm:$0xff]
    %v239 = vld [vmem:[%s1 + $0x540] sm:$0xff]
    %v240 = vld [vmem:[%s1 + $0x548] sm:$0xff]
    %v241 = vld [vmem:[%s1 + $0x550] sm:$0xff]
    %v242 = vld [vmem:[%s1 + $0x558] sm:$0xff]
    %v243 = vld [vmem:[%s1 + $0x560] sm:$0xff]
    %v244 = vld [vmem:[%s1 + $0x568] sm:$0xff]
    %v245 = vld [vmem:[%s1 + $0x570] sm:$0xff]
    %v246 = vld [vmem:[%s1 + $0x578] sm:$0xff]
    %v247 = vld [vmem:[%s1 + $0x580] sm:$0xff]
    %v248 = vld [vmem:[%s1 + $0x588] sm:$0xff]
    %v249 = vld [vmem:[%s1 + $0x590] sm:$0xff]
    %v250 = vld [vmem:[%s1 + $0x598] sm:$0xff]
    %v251 = vld [vmem:[%s1 + $0x5a0] sm:$0xff]
    %v252 = vld [vmem:[%s1 + $0x5a8] sm:$0xff]
    %v253 = vld [vmem:[%s1 + $0x5b0] sm:$0xff]
    %v254 = vld [vmem:[%s1 + $0x5b8] sm:$0xff]
    %v255 = vld [vmem:[%s1 + $0x5c0] sm:$0xff]
    %v256 = vld [vmem:[%s1 + $0x5c8] sm:$0xff]
    %v257 = vld [vmem:[%s1 + $0x5d0] sm:$0xff]
    %v258 = vld [vmem:[%s1 + $0x5d8] sm:$0xff]
    %v259 = vld [vmem:[%s1 + $0x5e0] sm:$0xff]
    %v260 = vld [vmem:[%s1 + $0x5e8] sm:$0xff]
    %v261 = vld [vmem:[%s1 + $0x5f0] sm:$0xff]
    %v262 = vld [vmem:[%s1 + $0x5f8] sm:$0xff]
    %v263 = vld [vmem:[%s1 + $0x600] sm:$0xff]
    %v264 = vld [vmem:[%s1 + $0x608] sm:$0xff]
    %v265 = vld [vmem:[%s1 + $0x610] sm:$0xff]
    %v266 = vld [vmem:[%s1 + $0x618] sm:$0xff]
    %v267 = vld [vmem:[%s1 + $0x620] sm:$0xff]
    %v268 = vld [vmem:[%s1 + $0x628] sm:$0xff]
    %v269 = vld [vmem:[%s1 + $0x630] sm:$0xff]
    %v270 = vld [vmem:[%s1 + $0x638] sm:$0xff]
    %v271 = vld [vmem:[%s1 + $0x640] sm:$0xff]
    %v272 = vld [vmem:[%s1 + $0x648] sm:$0xff]
    %v273 = vld [vmem:[%s1 + $0x650] sm:$0xff]
    %v274 = vld [vmem:[%s1 + $0x658] sm:$0xff]
    %v275 = vld [vmem:[%s1 + $0x660] sm:$0xff]
    %v276 = vld [vmem:[%s1 + $0x668] sm:$0xff]
    %v277 = vld [vmem:[%s1 + $0x670] sm:$0xff]
    %v278 = vld [vmem:[%s1 + $0x678] sm:$0xff]
    %v279 = vld [vmem:[%s1 + $0x680] sm:$0xff]
    %v280 = vld [vmem:[%s1 + $0x688] sm:$0xff]
    %v281 = vld [vmem:[%s1 + $0x690] sm:$0xff]
    %v282 = vld [vmem:[%s1 + $0x698] sm:$0xff]
    %v283 = vld [vmem:[%s1 + $0x6a0] sm:$0xff]
    %v284 = vld [vmem:[%s1 + $0x6a8] sm:$0xff]
    %v285 = vld [vmem:[%s1 + $0x6b0] sm:$0xff]
    %v286 = vld [vmem:[%s1 + $0x6b8] sm:$0xff]
    %v287 = vld [vmem:[%s1 + $0x6c0] sm:$0xff]
    %v288 = vld [vmem:[%s1 + $0x6c8] sm:$0xff]
    %v289 = vld [vmem:[%s1 + $0x6d0] sm:$0xff]
    %v290 = vld [vmem:[%s1 + $0x6d8] sm:$0xff]
    %v291 = vld [vmem:[%s1 + $0x6e0] sm:$0xff]
    %v292 = vld [vmem:[%s1 + $0x6e8] sm:$0xff]
    %v293 = vld [vmem:[%s1 + $0x6f0] sm:$0xff]
    %v294 = vld [vmem:[%s1 + $0x6f8] sm:$0xff]
    %v295 = vld [vmem:[%s1 + $0x700] sm:$0xff]
    %v296 = vld [vmem:[%s1 + $0x708] sm:$0xff]
    %v297 = vld [vmem:[%s1 + $0x710] sm:$0xff]
    %v298 = vld [vmem:[%s1 + $0x718] sm:$0xff]
    %v299 = vld [vmem:[%s1 + $0x720] sm:$0xff]
    %v300 = vld [vmem:[%s1 + $0x728] sm:$0xff]
    %v301 = vld [vmem:[%s1 + $0x730] sm:$0xff]
    %v302 = vld [vmem:[%s1 + $0x738] sm:$0xff]
    %v303 = vld [vmem:[%s1 + $0x740] sm:$0xff]
    %v304 = vld [vmem:[%s1 + $0x748] sm:$0xff]
    %v305 = vld [vmem:[%s1 + $0x750] sm:$0xff]
    %v306 = vld [vmem:[%s1 + $0x758] sm:$0xff]
    %v307 = vld [vmem:[%s1 + $0x760] sm:$0xff]
    %v308 = vld [vmem:[%s1 + $0x768] sm:$0xff]
    %v309 = vld [vmem:[%s1 + $0x770] sm:$0xff]
    %v310 = vld [vmem:[%s1 + $0x778] sm:$0xff]
    %v311 = vld [vmem:[%s1 + $0x780] sm:$0xff]
    %v312 = vld [vmem:[%s1 + $0x788] sm:$0xff]
    %v313 = vld [vmem:[%s1 + $0x790] sm:$0xff]
    %v314 = vld [vmem:[%s1 + $0x798] sm:$0xff]
    %v315 = vld [vmem:[%s1 + $0x7a0] sm:$0xff]
    %v316 = vld [vmem:[%s1 + $0x7a8] sm:$0xff]
    %v317 = vld [vmem:[%s1 + $0x7b0] sm:$0xff]
    %v318 = vld [vmem:[%s1 + $0x7b8] sm:$0xff]
    %v319 = vld [vmem:[%s1 + $0x7c0] sm:$0xff]
    %v320 = vld [vmem:[%s1 + $0x7c8] sm:$0xff]
    %v321 = vld [vmem:[%s1 + $0x7d0] sm:$0xff]
    %v322 = vld [vmem:[%s1 + $0x7d8] sm:$0xff]
    %v323 = vld [vmem:[%s1 + $0x7e0] sm:$0xff]
    %v324 = vld [vmem:[%s1 + $0x7e8] sm:$0xff]
    %v325 = vld [vmem:[%s1 + $0x7f0] sm:$0xff]
    %v326 = vld [vmem:[%s1 + $0x7f8] sm:$0xff]
    %v327 = vld [vmem:[%s2] sm:$0xff]
    %v329 = vlaneseq
    %v330 = vshrl.u32 %v329, 7
    %v331 = vsub.s32 0, %v330
    %v332 = vrot.slane %v327, %v331
    %v333 = vlaneseq
    %v334 = vshrl.u32 %v333, 7
    %v335 = vsub.s32 1, %v334
    %v336 = vrot.slane %v327, %v335
    %v337 = vlaneseq
    %v338 = vshrl.u32 %v337, 7
    %v339 = vsub.s32 2, %v338
    %v340 = vrot.slane %v327, %v339
    %v341 = vlaneseq
    %v342 = vshrl.u32 %v341, 7
    %v343 = vsub.s32 3, %v342
    %v344 = vrot.slane %v327, %v343
    %v345 = vlaneseq
    %v346 = vshrl.u32 %v345, 7
    %v347 = vsub.s32 4, %v346
    %v348 = vrot.slane %v327, %v347
    %v349 = vlaneseq
    %v350 = vshrl.u32 %v349, 7
    %v351 = vsub.s32 5, %v350
    %v352 = vrot.slane %v327, %v351
    %v353 = vlaneseq
    %v354 = vshrl.u32 %v353, 7
    %v355 = vsub.s32 6, %v354
    %v356 = vrot.slane %v327, %v355
    %v357 = vlaneseq
    %v358 = vshrl.u32 %v357, 7
    %v359 = vsub.s32 7, %v358
    %v360 = vrot.slane %v327, %v359
    %v377 = vunpack.c.l.b16 %v63
    %v378 = vunpack.c.l.b16 %v64
    %v379 = vunpack.c.l.b16 %v65
    %v380 = vunpack.c.l.b16 %v66
    %v381 = vunpack.c.l.b16 %v67
    %v382 = vunpack.c.l.b16 %v68
    %v383 = vunpack.c.l.b16 %v69
    %v384 = vunpack.c.l.b16 %v70
    %v385 = vrot.slane %v381, 7
    %vm386 = vcmask 1041409
    %v387 = vsel %vm386, %v385, %v377
    %v388 = vrot.slane %v382, 7
    %v389 = vsel %vm386, %v388, %v378
    %v390 = vrot.slane %v383, 7
    %v391 = vsel %vm386, %v390, %v379
    %v392 = vrot.slane %v384, 7
    %v393 = vsel %vm386, %v392, %v380
    %v394 = vpack.c.b16 %v387, %v387
    %v395 = vpack.c.b16 %v389, %v389
    %v396 = vpack.c.b16 %v391, %v391
    %v397 = vpack.c.b16 %v393, %v393
    %v658 = vunpack.c.l.b16 %v71
    %v659 = vunpack.c.h.b16 %v71
    %v660 = vunpack.c.l.b16 %v72
    %v661 = vunpack.c.h.b16 %v72
    %v662 = vunpack.c.l.b16 %v73
    %v663 = vunpack.c.h.b16 %v73
    %v664 = vunpack.c.l.b16 %v74
    %v665 = vunpack.c.h.b16 %v74
    %v666 = vunpack.c.l.b16 %v75
    %v667 = vunpack.c.h.b16 %v75
    %v668 = vunpack.c.l.b16 %v76
    %v669 = vunpack.c.h.b16 %v76
    %v670 = vunpack.c.l.b16 %v77
    %v671 = vunpack.c.h.b16 %v77
    %v672 = vunpack.c.l.b16 %v78
    %v673 = vunpack.c.h.b16 %v78
    %v674 = vunpack.c.l.b16 %v79
    %v675 = vunpack.c.h.b16 %v79
    %v676 = vunpack.c.l.b16 %v80
    %v677 = vunpack.c.h.b16 %v80
    %v678 = vunpack.c.l.b16 %v81
    %v679 = vunpack.c.h.b16 %v81
    %v680 = vunpack.c.l.b16 %v82
    %v681 = vunpack.c.h.b16 %v82
    %v682 = vunpack.c.l.b16 %v83
    %v683 = vunpack.c.h.b16 %v83
    %v684 = vunpack.c.l.b16 %v84
    %v685 = vunpack.c.h.b16 %v84
    %v686 = vunpack.c.l.b16 %v85
    %v687 = vunpack.c.h.b16 %v85
    %v688 = vunpack.c.l.b16 %v86
    %v689 = vunpack.c.h.b16 %v86
    %v690 = vunpack.c.l.b16 %v87
    %v691 = vunpack.c.h.b16 %v87
    %v692 = vunpack.c.l.b16 %v88
    %v693 = vunpack.c.h.b16 %v88
    %v694 = vunpack.c.l.b16 %v89
    %v695 = vunpack.c.h.b16 %v89
    %v696 = vunpack.c.l.b16 %v90
    %v697 = vunpack.c.h.b16 %v90
    %v698 = vunpack.c.l.b16 %v91
    %v699 = vunpack.c.h.b16 %v91
    %v700 = vunpack.c.l.b16 %v92
    %v701 = vunpack.c.h.b16 %v92
    %v702 = vunpack.c.l.b16 %v93
    %v703 = vunpack.c.h.b16 %v93
    %v704 = vunpack.c.l.b16 %v94
    %v705 = vunpack.c.h.b16 %v94
    %v706 = vunpack.c.l.b16 %v95
    %v707 = vunpack.c.h.b16 %v95
    %v708 = vunpack.c.l.b16 %v96
    %v709 = vunpack.c.h.b16 %v96
    %v710 = vunpack.c.l.b16 %v97
    %v711 = vunpack.c.h.b16 %v97
    %v712 = vunpack.c.l.b16 %v98
    %v713 = vunpack.c.h.b16 %v98
    %v714 = vunpack.c.l.b16 %v99
    %v715 = vunpack.c.h.b16 %v99
    %v716 = vunpack.c.l.b16 %v100
    %v717 = vunpack.c.h.b16 %v100
    %v718 = vunpack.c.l.b16 %v101
    %v719 = vunpack.c.h.b16 %v101
    %v720 = vunpack.c.l.b16 %v102
    %v721 = vunpack.c.h.b16 %v102
    %v722 = vunpack.c.l.b16 %v103
    %v723 = vunpack.c.h.b16 %v103
    %v724 = vunpack.c.l.b16 %v104
    %v725 = vunpack.c.h.b16 %v104
    %v726 = vunpack.c.l.b16 %v105
    %v727 = vunpack.c.h.b16 %v105
    %v728 = vunpack.c.l.b16 %v106
    %v729 = vunpack.c.h.b16 %v106
    %v730 = vunpack.c.l.b16 %v107
    %v731 = vunpack.c.h.b16 %v107
    %v732 = vunpack.c.l.b16 %v108
    %v733 = vunpack.c.h.b16 %v108
    %v734 = vunpack.c.l.b16 %v109
    %v735 = vunpack.c.h.b16 %v109
    %v736 = vunpack.c.l.b16 %v110
    %v737 = vunpack.c.h.b16 %v110
    %v738 = vunpack.c.l.b16 %v111
    %v739 = vunpack.c.h.b16 %v111
    %v740 = vunpack.c.l.b16 %v112
    %v741 = vunpack.c.h.b16 %v112
    %v742 = vunpack.c.l.b16 %v113
    %v743 = vunpack.c.h.b16 %v113
    %v744 = vunpack.c.l.b16 %v114
    %v745 = vunpack.c.h.b16 %v114
    %v746 = vunpack.c.l.b16 %v115
    %v747 = vunpack.c.h.b16 %v115
    %v748 = vunpack.c.l.b16 %v116
    %v749 = vunpack.c.h.b16 %v116
    %v750 = vunpack.c.l.b16 %v117
    %v751 = vunpack.c.h.b16 %v117
    %v752 = vunpack.c.l.b16 %v118
    %v753 = vunpack.c.h.b16 %v118
    %v754 = vunpack.c.l.b16 %v119
    %v755 = vunpack.c.h.b16 %v119
    %v756 = vunpack.c.l.b16 %v120
    %v757 = vunpack.c.h.b16 %v120
    %v758 = vunpack.c.l.b16 %v121
    %v759 = vunpack.c.h.b16 %v121
    %v760 = vunpack.c.l.b16 %v122
    %v761 = vunpack.c.h.b16 %v122
    %v762 = vunpack.c.l.b16 %v123
    %v763 = vunpack.c.h.b16 %v123
    %v764 = vunpack.c.l.b16 %v124
    %v765 = vunpack.c.h.b16 %v124
    %v766 = vunpack.c.l.b16 %v125
    %v767 = vunpack.c.h.b16 %v125
    %v768 = vunpack.c.l.b16 %v126
    %v769 = vunpack.c.h.b16 %v126
    %v770 = vunpack.c.l.b16 %v127
    %v771 = vunpack.c.h.b16 %v127
    %v772 = vunpack.c.l.b16 %v128
    %v773 = vunpack.c.h.b16 %v128
    %v774 = vunpack.c.l.b16 %v129
    %v775 = vunpack.c.h.b16 %v129
    %v776 = vunpack.c.l.b16 %v130
    %v777 = vunpack.c.h.b16 %v130
    %v778 = vunpack.c.l.b16 %v131
    %v779 = vunpack.c.h.b16 %v131
    %v780 = vunpack.c.l.b16 %v132
    %v781 = vunpack.c.h.b16 %v132
    %v782 = vunpack.c.l.b16 %v133
    %v783 = vunpack.c.h.b16 %v133
    %v784 = vunpack.c.l.b16 %v134
    %v785 = vunpack.c.h.b16 %v134
    %v786 = vunpack.c.l.b16 %v135
    %v787 = vunpack.c.h.b16 %v135
    %v788 = vunpack.c.l.b16 %v136
    %v789 = vunpack.c.h.b16 %v136
    %v790 = vunpack.c.l.b16 %v137
    %v791 = vunpack.c.h.b16 %v137
    %v792 = vunpack.c.l.b16 %v138
    %v793 = vunpack.c.h.b16 %v138
    %v794 = vunpack.c.l.b16 %v139
    %v795 = vunpack.c.h.b16 %v139
    %v796 = vunpack.c.l.b16 %v140
    %v797 = vunpack.c.h.b16 %v140
    %v798 = vunpack.c.l.b16 %v141
    %v799 = vunpack.c.h.b16 %v141
    %v800 = vunpack.c.l.b16 %v142
    %v801 = vunpack.c.h.b16 %v142
    %v802 = vunpack.c.l.b16 %v143
    %v803 = vunpack.c.h.b16 %v143
    %v804 = vunpack.c.l.b16 %v144
    %v805 = vunpack.c.h.b16 %v144
    %v806 = vunpack.c.l.b16 %v145
    %v807 = vunpack.c.h.b16 %v145
    %v808 = vunpack.c.l.b16 %v146
    %v809 = vunpack.c.h.b16 %v146
    %v810 = vunpack.c.l.b16 %v147
    %v811 = vunpack.c.h.b16 %v147
    %v812 = vunpack.c.l.b16 %v148
    %v813 = vunpack.c.h.b16 %v148
    %v814 = vunpack.c.l.b16 %v149
    %v815 = vunpack.c.h.b16 %v149
    %v816 = vunpack.c.l.b16 %v150
    %v817 = vunpack.c.h.b16 %v150
    %v818 = vunpack.c.l.b16 %v151
    %v819 = vunpack.c.h.b16 %v151
    %v820 = vunpack.c.l.b16 %v152
    %v821 = vunpack.c.h.b16 %v152
    %v822 = vunpack.c.l.b16 %v153
    %v823 = vunpack.c.h.b16 %v153
    %v824 = vunpack.c.l.b16 %v154
    %v825 = vunpack.c.h.b16 %v154
    %v826 = vunpack.c.l.b16 %v155
    %v827 = vunpack.c.h.b16 %v155
    %v828 = vunpack.c.l.b16 %v156
    %v829 = vunpack.c.h.b16 %v156
    %v830 = vunpack.c.l.b16 %v157
    %v831 = vunpack.c.h.b16 %v157
    %v832 = vunpack.c.l.b16 %v158
    %v833 = vunpack.c.h.b16 %v158
    %v834 = vunpack.c.l.b16 %v159
    %v835 = vunpack.c.h.b16 %v159
    %v836 = vunpack.c.l.b16 %v160
    %v837 = vunpack.c.h.b16 %v160
    %v838 = vunpack.c.l.b16 %v161
    %v839 = vunpack.c.h.b16 %v161
    %v840 = vunpack.c.l.b16 %v162
    %v841 = vunpack.c.h.b16 %v162
    %v842 = vunpack.c.l.b16 %v163
    %v843 = vunpack.c.h.b16 %v163
    %v844 = vunpack.c.l.b16 %v164
    %v845 = vunpack.c.h.b16 %v164
    %v846 = vunpack.c.l.b16 %v165
    %v847 = vunpack.c.h.b16 %v165
    %v848 = vunpack.c.l.b16 %v166
    %v849 = vunpack.c.h.b16 %v166
    %v850 = vunpack.c.l.b16 %v167
    %v851 = vunpack.c.h.b16 %v167
    %v852 = vunpack.c.l.b16 %v168
    %v853 = vunpack.c.h.b16 %v168
    %v854 = vunpack.c.l.b16 %v169
    %v855 = vunpack.c.h.b16 %v169
    %v856 = vunpack.c.l.b16 %v170
    %v857 = vunpack.c.h.b16 %v170
    %v858 = vunpack.c.l.b16 %v171
    %v859 = vunpack.c.h.b16 %v171
    %v860 = vunpack.c.l.b16 %v172
    %v861 = vunpack.c.h.b16 %v172
    %v862 = vunpack.c.l.b16 %v173
    %v863 = vunpack.c.h.b16 %v173
    %v864 = vunpack.c.l.b16 %v174
    %v865 = vunpack.c.h.b16 %v174
    %v866 = vunpack.c.l.b16 %v175
    %v867 = vunpack.c.h.b16 %v175
    %v868 = vunpack.c.l.b16 %v176
    %v869 = vunpack.c.h.b16 %v176
    %v870 = vunpack.c.l.b16 %v177
    %v871 = vunpack.c.h.b16 %v177
    %v872 = vunpack.c.l.b16 %v178
    %v873 = vunpack.c.h.b16 %v178
    %v874 = vunpack.c.l.b16 %v179
    %v875 = vunpack.c.h.b16 %v179
    %v876 = vunpack.c.l.b16 %v180
    %v877 = vunpack.c.h.b16 %v180
    %v878 = vunpack.c.l.b16 %v181
    %v879 = vunpack.c.h.b16 %v181
    %v880 = vunpack.c.l.b16 %v182
    %v881 = vunpack.c.h.b16 %v182
    %v882 = vunpack.c.l.b16 %v183
    %v883 = vunpack.c.h.b16 %v183
    %v884 = vunpack.c.l.b16 %v184
    %v885 = vunpack.c.h.b16 %v184
    %v886 = vunpack.c.l.b16 %v185
    %v887 = vunpack.c.h.b16 %v185
    %v888 = vunpack.c.l.b16 %v186
    %v889 = vunpack.c.h.b16 %v186
    %v890 = vunpack.c.l.b16 %v187
    %v891 = vunpack.c.h.b16 %v187
    %v892 = vunpack.c.l.b16 %v188
    %v893 = vunpack.c.h.b16 %v188
    %v894 = vunpack.c.l.b16 %v189
    %v895 = vunpack.c.h.b16 %v189
    %v896 = vunpack.c.l.b16 %v190
    %v897 = vunpack.c.h.b16 %v190
    %v898 = vunpack.c.l.b16 %v191
    %v899 = vunpack.c.h.b16 %v191
    %v900 = vunpack.c.l.b16 %v192
    %v901 = vunpack.c.h.b16 %v192
    %v902 = vunpack.c.l.b16 %v193
    %v903 = vunpack.c.h.b16 %v193
    %v904 = vunpack.c.l.b16 %v194
    %v905 = vunpack.c.h.b16 %v194
    %v906 = vunpack.c.l.b16 %v195
    %v907 = vunpack.c.h.b16 %v195
    %v908 = vunpack.c.l.b16 %v196
    %v909 = vunpack.c.h.b16 %v196
    %v910 = vunpack.c.l.b16 %v197
    %v911 = vunpack.c.h.b16 %v197
    %v912 = vunpack.c.l.b16 %v198
    %v913 = vunpack.c.h.b16 %v198
    %v914 = vunpack.c.l.b16 %v199
    %v915 = vunpack.c.h.b16 %v199
    %v916 = vunpack.c.l.b16 %v200
    %v917 = vunpack.c.h.b16 %v200
    %v918 = vunpack.c.l.b16 %v201
    %v919 = vunpack.c.h.b16 %v201
    %v920 = vunpack.c.l.b16 %v202
    %v921 = vunpack.c.h.b16 %v202
    %v922 = vunpack.c.l.b16 %v203
    %v923 = vunpack.c.h.b16 %v203
    %v924 = vunpack.c.l.b16 %v204
    %v925 = vunpack.c.h.b16 %v204
    %v926 = vunpack.c.l.b16 %v205
    %v927 = vunpack.c.h.b16 %v205
    %v928 = vunpack.c.l.b16 %v206
    %v929 = vunpack.c.h.b16 %v206
    %v930 = vunpack.c.l.b16 %v207
    %v931 = vunpack.c.h.b16 %v207
    %v932 = vunpack.c.l.b16 %v208
    %v933 = vunpack.c.h.b16 %v208
    %v934 = vunpack.c.l.b16 %v209
    %v935 = vunpack.c.h.b16 %v209
    %v936 = vunpack.c.l.b16 %v210
    %v937 = vunpack.c.h.b16 %v210
    %v938 = vunpack.c.l.b16 %v211
    %v939 = vunpack.c.h.b16 %v211
    %v940 = vunpack.c.l.b16 %v212
    %v941 = vunpack.c.h.b16 %v212
    %v942 = vunpack.c.l.b16 %v213
    %v943 = vunpack.c.h.b16 %v213
    %v944 = vunpack.c.l.b16 %v214
    %v945 = vunpack.c.h.b16 %v214
    %v946 = vunpack.c.l.b16 %v215
    %v947 = vunpack.c.h.b16 %v215
    %v948 = vunpack.c.l.b16 %v216
    %v949 = vunpack.c.h.b16 %v216
    %v950 = vunpack.c.l.b16 %v217
    %v951 = vunpack.c.h.b16 %v217
    %v952 = vunpack.c.l.b16 %v218
    %v953 = vunpack.c.h.b16 %v218
    %v954 = vunpack.c.l.b16 %v219
    %v955 = vunpack.c.h.b16 %v219
    %v956 = vunpack.c.l.b16 %v220
    %v957 = vunpack.c.h.b16 %v220
    %v958 = vunpack.c.l.b16 %v221
    %v959 = vunpack.c.h.b16 %v221
    %v960 = vunpack.c.l.b16 %v222
    %v961 = vunpack.c.h.b16 %v222
    %v962 = vunpack.c.l.b16 %v223
    %v963 = vunpack.c.h.b16 %v223
    %v964 = vunpack.c.l.b16 %v224
    %v965 = vunpack.c.h.b16 %v224
    %v966 = vunpack.c.l.b16 %v225
    %v967 = vunpack.c.h.b16 %v225
    %v968 = vunpack.c.l.b16 %v226
    %v969 = vunpack.c.h.b16 %v226
    %v970 = vunpack.c.l.b16 %v227
    %v971 = vunpack.c.h.b16 %v227
    %v972 = vunpack.c.l.b16 %v228
    %v973 = vunpack.c.h.b16 %v228
    %v974 = vunpack.c.l.b16 %v229
    %v975 = vunpack.c.h.b16 %v229
    %v976 = vunpack.c.l.b16 %v230
    %v977 = vunpack.c.h.b16 %v230
    %v978 = vunpack.c.l.b16 %v231
    %v979 = vunpack.c.h.b16 %v231
    %v980 = vunpack.c.l.b16 %v232
    %v981 = vunpack.c.h.b16 %v232
    %v982 = vunpack.c.l.b16 %v233
    %v983 = vunpack.c.h.b16 %v233
    %v984 = vunpack.c.l.b16 %v234
    %v985 = vunpack.c.h.b16 %v234
    %v986 = vunpack.c.l.b16 %v235
    %v987 = vunpack.c.h.b16 %v235
    %v988 = vunpack.c.l.b16 %v236
    %v989 = vunpack.c.h.b16 %v236
    %v990 = vunpack.c.l.b16 %v237
    %v991 = vunpack.c.h.b16 %v237
    %v992 = vunpack.c.l.b16 %v238
    %v993 = vunpack.c.h.b16 %v238
    %v994 = vunpack.c.l.b16 %v239
    %v995 = vunpack.c.h.b16 %v239
    %v996 = vunpack.c.l.b16 %v240
    %v997 = vunpack.c.h.b16 %v240
    %v998 = vunpack.c.l.b16 %v241
    %v999 = vunpack.c.h.b16 %v241
    %v1000 = vunpack.c.l.b16 %v242
    %v1001 = vunpack.c.h.b16 %v242
    %v1002 = vunpack.c.l.b16 %v243
    %v1003 = vunpack.c.h.b16 %v243
    %v1004 = vunpack.c.l.b16 %v244
    %v1005 = vunpack.c.h.b16 %v244
    %v1006 = vunpack.c.l.b16 %v245
    %v1007 = vunpack.c.h.b16 %v245
    %v1008 = vunpack.c.l.b16 %v246
    %v1009 = vunpack.c.h.b16 %v246
    %v1010 = vunpack.c.l.b16 %v247
    %v1011 = vunpack.c.h.b16 %v247
    %v1012 = vunpack.c.l.b16 %v248
    %v1013 = vunpack.c.h.b16 %v248
    %v1014 = vunpack.c.l.b16 %v249
    %v1015 = vunpack.c.h.b16 %v249
    %v1016 = vunpack.c.l.b16 %v250
    %v1017 = vunpack.c.h.b16 %v250
    %v1018 = vunpack.c.l.b16 %v251
    %v1019 = vunpack.c.h.b16 %v251
    %v1020 = vunpack.c.l.b16 %v252
    %v1021 = vunpack.c.h.b16 %v252
    %v1022 = vunpack.c.l.b16 %v253
    %v1023 = vunpack.c.h.b16 %v253
    %v1024 = vunpack.c.l.b16 %v254
    %v1025 = vunpack.c.h.b16 %v254
    %v1026 = vunpack.c.l.b16 %v255
    %v1027 = vunpack.c.h.b16 %v255
    %v1028 = vunpack.c.l.b16 %v256
    %v1029 = vunpack.c.h.b16 %v256
    %v1030 = vunpack.c.l.b16 %v257
    %v1031 = vunpack.c.h.b16 %v257
    %v1032 = vunpack.c.l.b16 %v258
    %v1033 = vunpack.c.h.b16 %v258
    %v1034 = vunpack.c.l.b16 %v259
    %v1035 = vunpack.c.h.b16 %v259
    %v1036 = vunpack.c.l.b16 %v260
    %v1037 = vunpack.c.h.b16 %v260
    %v1038 = vunpack.c.l.b16 %v261
    %v1039 = vunpack.c.h.b16 %v261
    %v1040 = vunpack.c.l.b16 %v262
    %v1041 = vunpack.c.h.b16 %v262
    %v1042 = vunpack.c.l.b16 %v263
    %v1043 = vunpack.c.h.b16 %v263
    %v1044 = vunpack.c.l.b16 %v264
    %v1045 = vunpack.c.h.b16 %v264
    %v1046 = vunpack.c.l.b16 %v265
    %v1047 = vunpack.c.h.b16 %v265
    %v1048 = vunpack.c.l.b16 %v266
    %v1049 = vunpack.c.h.b16 %v266
    %v1050 = vunpack.c.l.b16 %v267
    %v1051 = vunpack.c.h.b16 %v267
    %v1052 = vunpack.c.l.b16 %v268
    %v1053 = vunpack.c.h.b16 %v268
    %v1054 = vunpack.c.l.b16 %v269
    %v1055 = vunpack.c.h.b16 %v269
    %v1056 = vunpack.c.l.b16 %v270
    %v1057 = vunpack.c.h.b16 %v270
    %v1058 = vunpack.c.l.b16 %v271
    %v1059 = vunpack.c.h.b16 %v271
    %v1060 = vunpack.c.l.b16 %v272
    %v1061 = vunpack.c.h.b16 %v272
    %v1062 = vunpack.c.l.b16 %v273
    %v1063 = vunpack.c.h.b16 %v273
    %v1064 = vunpack.c.l.b16 %v274
    %v1065 = vunpack.c.h.b16 %v274
    %v1066 = vunpack.c.l.b16 %v275
    %v1067 = vunpack.c.h.b16 %v275
    %v1068 = vunpack.c.l.b16 %v276
    %v1069 = vunpack.c.h.b16 %v276
    %v1070 = vunpack.c.l.b16 %v277
    %v1071 = vunpack.c.h.b16 %v277
    %v1072 = vunpack.c.l.b16 %v278
    %v1073 = vunpack.c.h.b16 %v278
    %v1074 = vunpack.c.l.b16 %v279
    %v1075 = vunpack.c.h.b16 %v279
    %v1076 = vunpack.c.l.b16 %v280
    %v1077 = vunpack.c.h.b16 %v280
    %v1078 = vunpack.c.l.b16 %v281
    %v1079 = vunpack.c.h.b16 %v281
    %v1080 = vunpack.c.l.b16 %v282
    %v1081 = vunpack.c.h.b16 %v282
    %v1082 = vunpack.c.l.b16 %v283
    %v1083 = vunpack.c.h.b16 %v283
    %v1084 = vunpack.c.l.b16 %v284
    %v1085 = vunpack.c.h.b16 %v284
    %v1086 = vunpack.c.l.b16 %v285
    %v1087 = vunpack.c.h.b16 %v285
    %v1088 = vunpack.c.l.b16 %v286
    %v1089 = vunpack.c.h.b16 %v286
    %v1090 = vunpack.c.l.b16 %v287
    %v1091 = vunpack.c.h.b16 %v287
    %v1092 = vunpack.c.l.b16 %v288
    %v1093 = vunpack.c.h.b16 %v288
    %v1094 = vunpack.c.l.b16 %v289
    %v1095 = vunpack.c.h.b16 %v289
    %v1096 = vunpack.c.l.b16 %v290
    %v1097 = vunpack.c.h.b16 %v290
    %v1098 = vunpack.c.l.b16 %v291
    %v1099 = vunpack.c.h.b16 %v291
    %v1100 = vunpack.c.l.b16 %v292
    %v1101 = vunpack.c.h.b16 %v292
    %v1102 = vunpack.c.l.b16 %v293
    %v1103 = vunpack.c.h.b16 %v293
    %v1104 = vunpack.c.l.b16 %v294
    %v1105 = vunpack.c.h.b16 %v294
    %v1106 = vunpack.c.l.b16 %v295
    %v1107 = vunpack.c.h.b16 %v295
    %v1108 = vunpack.c.l.b16 %v296
    %v1109 = vunpack.c.h.b16 %v296
    %v1110 = vunpack.c.l.b16 %v297
    %v1111 = vunpack.c.h.b16 %v297
    %v1112 = vunpack.c.l.b16 %v298
    %v1113 = vunpack.c.h.b16 %v298
    %v1114 = vunpack.c.l.b16 %v299
    %v1115 = vunpack.c.h.b16 %v299
    %v1116 = vunpack.c.l.b16 %v300
    %v1117 = vunpack.c.h.b16 %v300
    %v1118 = vunpack.c.l.b16 %v301
    %v1119 = vunpack.c.h.b16 %v301
    %v1120 = vunpack.c.l.b16 %v302
    %v1121 = vunpack.c.h.b16 %v302
    %v1122 = vunpack.c.l.b16 %v303
    %v1123 = vunpack.c.h.b16 %v303
    %v1124 = vunpack.c.l.b16 %v304
    %v1125 = vunpack.c.h.b16 %v304
    %v1126 = vunpack.c.l.b16 %v305
    %v1127 = vunpack.c.h.b16 %v305
    %v1128 = vunpack.c.l.b16 %v306
    %v1129 = vunpack.c.h.b16 %v306
    %v1130 = vunpack.c.l.b16 %v307
    %v1131 = vunpack.c.h.b16 %v307
    %v1132 = vunpack.c.l.b16 %v308
    %v1133 = vunpack.c.h.b16 %v308
    %v1134 = vunpack.c.l.b16 %v309
    %v1135 = vunpack.c.h.b16 %v309
    %v1136 = vunpack.c.l.b16 %v310
    %v1137 = vunpack.c.h.b16 %v310
    %v1138 = vunpack.c.l.b16 %v311
    %v1139 = vunpack.c.h.b16 %v311
    %v1140 = vunpack.c.l.b16 %v312
    %v1141 = vunpack.c.h.b16 %v312
    %v1142 = vunpack.c.l.b16 %v313
    %v1143 = vunpack.c.h.b16 %v313
    %v1144 = vunpack.c.l.b16 %v314
    %v1145 = vunpack.c.h.b16 %v314
    %v1146 = vunpack.c.l.b16 %v315
    %v1147 = vunpack.c.h.b16 %v315
    %v1148 = vunpack.c.l.b16 %v316
    %v1149 = vunpack.c.h.b16 %v316
    %v1150 = vunpack.c.l.b16 %v317
    %v1151 = vunpack.c.h.b16 %v317
    %v1152 = vunpack.c.l.b16 %v318
    %v1153 = vunpack.c.h.b16 %v318
    %v1154 = vunpack.c.l.b16 %v319
    %v1155 = vunpack.c.h.b16 %v319
    %v1156 = vunpack.c.l.b16 %v320
    %v1157 = vunpack.c.h.b16 %v320
    %v1158 = vunpack.c.l.b16 %v321
    %v1159 = vunpack.c.h.b16 %v321
    %v1160 = vunpack.c.l.b16 %v322
    %v1161 = vunpack.c.h.b16 %v322
    %v1162 = vunpack.c.l.b16 %v323
    %v1163 = vunpack.c.h.b16 %v323
    %v1164 = vunpack.c.l.b16 %v324
    %v1165 = vunpack.c.h.b16 %v324
    %v1166 = vunpack.c.l.b16 %v325
    %v1167 = vunpack.c.h.b16 %v325
    %v1168 = vunpack.c.l.b16 %v326
    %v1169 = vunpack.c.h.b16 %v326
    %v1170 = vpack.c.b16 %v666, %v658
    %v1171 = vpack.c.b16 %v667, %v659
    %v1172 = vpack.c.b16 %v668, %v660
    %v1173 = vpack.c.b16 %v669, %v661
    %v1174 = vpack.c.b16 %v670, %v662
    %v1175 = vpack.c.b16 %v671, %v663
    %v1176 = vpack.c.b16 %v672, %v664
    %v1177 = vpack.c.b16 %v673, %v665
    %v1178 = vpack.c.b16 %v682, %v674
    %v1179 = vpack.c.b16 %v683, %v675
    %v1180 = vpack.c.b16 %v684, %v676
    %v1181 = vpack.c.b16 %v685, %v677
    %v1182 = vpack.c.b16 %v686, %v678
    %v1183 = vpack.c.b16 %v687, %v679
    %v1184 = vpack.c.b16 %v688, %v680
    %v1185 = vpack.c.b16 %v689, %v681
    %v1186 = vpack.c.b16 %v698, %v690
    %v1187 = vpack.c.b16 %v699, %v691
    %v1188 = vpack.c.b16 %v700, %v692
    %v1189 = vpack.c.b16 %v701, %v693
    %v1190 = vpack.c.b16 %v702, %v694
    %v1191 = vpack.c.b16 %v703, %v695
    %v1192 = vpack.c.b16 %v704, %v696
    %v1193 = vpack.c.b16 %v705, %v697
    %v1194 = vpack.c.b16 %v714, %v706
    %v1195 = vpack.c.b16 %v715, %v707
    %v1196 = vpack.c.b16 %v716, %v708
    %v1197 = vpack.c.b16 %v717, %v709
    %v1198 = vpack.c.b16 %v718, %v710
    %v1199 = vpack.c.b16 %v719, %v711
    %v1200 = vpack.c.b16 %v720, %v712
    %v1201 = vpack.c.b16 %v721, %v713
    %v1202 = vpack.c.b16 %v730, %v722
    %v1203 = vpack.c.b16 %v731, %v723
    %v1204 = vpack.c.b16 %v732, %v724
    %v1205 = vpack.c.b16 %v733, %v725
    %v1206 = vpack.c.b16 %v734, %v726
    %v1207 = vpack.c.b16 %v735, %v727
    %v1208 = vpack.c.b16 %v736, %v728
    %v1209 = vpack.c.b16 %v737, %v729
    %v1210 = vpack.c.b16 %v746, %v738
    %v1211 = vpack.c.b16 %v747, %v739
    %v1212 = vpack.c.b16 %v748, %v740
    %v1213 = vpack.c.b16 %v749, %v741
    %v1214 = vpack.c.b16 %v750, %v742
    %v1215 = vpack.c.b16 %v751, %v743
    %v1216 = vpack.c.b16 %v752, %v744
    %v1217 = vpack.c.b16 %v753, %v745
    %v1218 = vpack.c.b16 %v762, %v754
    %v1219 = vpack.c.b16 %v763, %v755
    %v1220 = vpack.c.b16 %v764, %v756
    %v1221 = vpack.c.b16 %v765, %v757
    %v1222 = vpack.c.b16 %v766, %v758
    %v1223 = vpack.c.b16 %v767, %v759
    %v1224 = vpack.c.b16 %v768, %v760
    %v1225 = vpack.c.b16 %v769, %v761
    %v1226 = vpack.c.b16 %v778, %v770
    %v1227 = vpack.c.b16 %v779, %v771
    %v1228 = vpack.c.b16 %v780, %v772
    %v1229 = vpack.c.b16 %v781, %v773
    %v1230 = vpack.c.b16 %v782, %v774
    %v1231 = vpack.c.b16 %v783, %v775
    %v1232 = vpack.c.b16 %v784, %v776
    %v1233 = vpack.c.b16 %v785, %v777
    %v1234 = vpack.c.b16 %v794, %v786
    %v1235 = vpack.c.b16 %v795, %v787
    %v1236 = vpack.c.b16 %v796, %v788
    %v1237 = vpack.c.b16 %v797, %v789
    %v1238 = vpack.c.b16 %v798, %v790
    %v1239 = vpack.c.b16 %v799, %v791
    %v1240 = vpack.c.b16 %v800, %v792
    %v1241 = vpack.c.b16 %v801, %v793
    %v1242 = vpack.c.b16 %v810, %v802
    %v1243 = vpack.c.b16 %v811, %v803
    %v1244 = vpack.c.b16 %v812, %v804
    %v1245 = vpack.c.b16 %v813, %v805
    %v1246 = vpack.c.b16 %v814, %v806
    %v1247 = vpack.c.b16 %v815, %v807
    %v1248 = vpack.c.b16 %v816, %v808
    %v1249 = vpack.c.b16 %v817, %v809
    %v1250 = vpack.c.b16 %v826, %v818
    %v1251 = vpack.c.b16 %v827, %v819
    %v1252 = vpack.c.b16 %v828, %v820
    %v1253 = vpack.c.b16 %v829, %v821
    %v1254 = vpack.c.b16 %v830, %v822
    %v1255 = vpack.c.b16 %v831, %v823
    %v1256 = vpack.c.b16 %v832, %v824
    %v1257 = vpack.c.b16 %v833, %v825
    %v1258 = vpack.c.b16 %v842, %v834
    %v1259 = vpack.c.b16 %v843, %v835
    %v1260 = vpack.c.b16 %v844, %v836
    %v1261 = vpack.c.b16 %v845, %v837
    %v1262 = vpack.c.b16 %v846, %v838
    %v1263 = vpack.c.b16 %v847, %v839
    %v1264 = vpack.c.b16 %v848, %v840
    %v1265 = vpack.c.b16 %v849, %v841
    %v1266 = vpack.c.b16 %v858, %v850
    %v1267 = vpack.c.b16 %v859, %v851
    %v1268 = vpack.c.b16 %v860, %v852
    %v1269 = vpack.c.b16 %v861, %v853
    %v1270 = vpack.c.b16 %v862, %v854
    %v1271 = vpack.c.b16 %v863, %v855
    %v1272 = vpack.c.b16 %v864, %v856
    %v1273 = vpack.c.b16 %v865, %v857
    %v1274 = vpack.c.b16 %v874, %v866
    %v1275 = vpack.c.b16 %v875, %v867
    %v1276 = vpack.c.b16 %v876, %v868
    %v1277 = vpack.c.b16 %v877, %v869
    %v1278 = vpack.c.b16 %v878, %v870
    %v1279 = vpack.c.b16 %v879, %v871
    %v1280 = vpack.c.b16 %v880, %v872
    %v1281 = vpack.c.b16 %v881, %v873
    %v1282 = vpack.c.b16 %v890, %v882
    %v1283 = vpack.c.b16 %v891, %v883
    %v1284 = vpack.c.b16 %v892, %v884
    %v1285 = vpack.c.b16 %v893, %v885
    %v1286 = vpack.c.b16 %v894, %v886
    %v1287 = vpack.c.b16 %v895, %v887
    %v1288 = vpack.c.b16 %v896, %v888
    %v1289 = vpack.c.b16 %v897, %v889
    %v1290 = vpack.c.b16 %v906, %v898
    %v1291 = vpack.c.b16 %v907, %v899
    %v1292 = vpack.c.b16 %v908, %v900
    %v1293 = vpack.c.b16 %v909, %v901
    %v1294 = vpack.c.b16 %v910, %v902
    %v1295 = vpack.c.b16 %v911, %v903
    %v1296 = vpack.c.b16 %v912, %v904
    %v1297 = vpack.c.b16 %v913, %v905
    %v1298 = vpack.c.b16 %v922, %v914
    %v1299 = vpack.c.b16 %v923, %v915
    %v1300 = vpack.c.b16 %v924, %v916
    %v1301 = vpack.c.b16 %v925, %v917
    %v1302 = vpack.c.b16 %v926, %v918
    %v1303 = vpack.c.b16 %v927, %v919
    %v1304 = vpack.c.b16 %v928, %v920
    %v1305 = vpack.c.b16 %v929, %v921
    %v1306 = vpack.c.b16 %v938, %v930
    %v1307 = vpack.c.b16 %v939, %v931
    %v1308 = vpack.c.b16 %v940, %v932
    %v1309 = vpack.c.b16 %v941, %v933
    %v1310 = vpack.c.b16 %v942, %v934
    %v1311 = vpack.c.b16 %v943, %v935
    %v1312 = vpack.c.b16 %v944, %v936
    %v1313 = vpack.c.b16 %v945, %v937
    %v1314 = vpack.c.b16 %v954, %v946
    %v1315 = vpack.c.b16 %v955, %v947
    %v1316 = vpack.c.b16 %v956, %v948
    %v1317 = vpack.c.b16 %v957, %v949
    %v1318 = vpack.c.b16 %v958, %v950
    %v1319 = vpack.c.b16 %v959, %v951
    %v1320 = vpack.c.b16 %v960, %v952
    %v1321 = vpack.c.b16 %v961, %v953
    %v1322 = vpack.c.b16 %v970, %v962
    %v1323 = vpack.c.b16 %v971, %v963
    %v1324 = vpack.c.b16 %v972, %v964
    %v1325 = vpack.c.b16 %v973, %v965
    %v1326 = vpack.c.b16 %v974, %v966
    %v1327 = vpack.c.b16 %v975, %v967
    %v1328 = vpack.c.b16 %v976, %v968
    %v1329 = vpack.c.b16 %v977, %v969
    %v1330 = vpack.c.b16 %v986, %v978
    %v1331 = vpack.c.b16 %v987, %v979
    %v1332 = vpack.c.b16 %v988, %v980
    %v1333 = vpack.c.b16 %v989, %v981
    %v1334 = vpack.c.b16 %v990, %v982
    %v1335 = vpack.c.b16 %v991, %v983
    %v1336 = vpack.c.b16 %v992, %v984
    %v1337 = vpack.c.b16 %v993, %v985
    %v1338 = vpack.c.b16 %v1002, %v994
    %v1339 = vpack.c.b16 %v1003, %v995
    %v1340 = vpack.c.b16 %v1004, %v996
    %v1341 = vpack.c.b16 %v1005, %v997
    %v1342 = vpack.c.b16 %v1006, %v998
    %v1343 = vpack.c.b16 %v1007, %v999
    %v1344 = vpack.c.b16 %v1008, %v1000
    %v1345 = vpack.c.b16 %v1009, %v1001
    %v1346 = vpack.c.b16 %v1018, %v1010
    %v1347 = vpack.c.b16 %v1019, %v1011
    %v1348 = vpack.c.b16 %v1020, %v1012
    %v1349 = vpack.c.b16 %v1021, %v1013
    %v1350 = vpack.c.b16 %v1022, %v1014
    %v1351 = vpack.c.b16 %v1023, %v1015
    %v1352 = vpack.c.b16 %v1024, %v1016
    %v1353 = vpack.c.b16 %v1025, %v1017
    %v1354 = vpack.c.b16 %v1034, %v1026
    %v1355 = vpack.c.b16 %v1035, %v1027
    %v1356 = vpack.c.b16 %v1036, %v1028
    %v1357 = vpack.c.b16 %v1037, %v1029
    %v1358 = vpack.c.b16 %v1038, %v1030
    %v1359 = vpack.c.b16 %v1039, %v1031
    %v1360 = vpack.c.b16 %v1040, %v1032
    %v1361 = vpack.c.b16 %v1041, %v1033
    %v1362 = vpack.c.b16 %v1050, %v1042
    %v1363 = vpack.c.b16 %v1051, %v1043
    %v1364 = vpack.c.b16 %v1052, %v1044
    %v1365 = vpack.c.b16 %v1053, %v1045
    %v1366 = vpack.c.b16 %v1054, %v1046
    %v1367 = vpack.c.b16 %v1055, %v1047
    %v1368 = vpack.c.b16 %v1056, %v1048
    %v1369 = vpack.c.b16 %v1057, %v1049
    %v1370 = vpack.c.b16 %v1066, %v1058
    %v1371 = vpack.c.b16 %v1067, %v1059
    %v1372 = vpack.c.b16 %v1068, %v1060
    %v1373 = vpack.c.b16 %v1069, %v1061
    %v1374 = vpack.c.b16 %v1070, %v1062
    %v1375 = vpack.c.b16 %v1071, %v1063
    %v1376 = vpack.c.b16 %v1072, %v1064
    %v1377 = vpack.c.b16 %v1073, %v1065
    %v1378 = vpack.c.b16 %v1082, %v1074
    %v1379 = vpack.c.b16 %v1083, %v1075
    %v1380 = vpack.c.b16 %v1084, %v1076
    %v1381 = vpack.c.b16 %v1085, %v1077
    %v1382 = vpack.c.b16 %v1086, %v1078
    %v1383 = vpack.c.b16 %v1087, %v1079
    %v1384 = vpack.c.b16 %v1088, %v1080
    %v1385 = vpack.c.b16 %v1089, %v1081
    %v1386 = vpack.c.b16 %v1098, %v1090
    %v1387 = vpack.c.b16 %v1099, %v1091
    %v1388 = vpack.c.b16 %v1100, %v1092
    %v1389 = vpack.c.b16 %v1101, %v1093
    %v1390 = vpack.c.b16 %v1102, %v1094
    %v1391 = vpack.c.b16 %v1103, %v1095
    %v1392 = vpack.c.b16 %v1104, %v1096
    %v1393 = vpack.c.b16 %v1105, %v1097
    %v1394 = vpack.c.b16 %v1114, %v1106
    %v1395 = vpack.c.b16 %v1115, %v1107
    %v1396 = vpack.c.b16 %v1116, %v1108
    %v1397 = vpack.c.b16 %v1117, %v1109
    %v1398 = vpack.c.b16 %v1118, %v1110
    %v1399 = vpack.c.b16 %v1119, %v1111
    %v1400 = vpack.c.b16 %v1120, %v1112
    %v1401 = vpack.c.b16 %v1121, %v1113
    %v1402 = vpack.c.b16 %v1130, %v1122
    %v1403 = vpack.c.b16 %v1131, %v1123
    %v1404 = vpack.c.b16 %v1132, %v1124
    %v1405 = vpack.c.b16 %v1133, %v1125
    %v1406 = vpack.c.b16 %v1134, %v1126
    %v1407 = vpack.c.b16 %v1135, %v1127
    %v1408 = vpack.c.b16 %v1136, %v1128
    %v1409 = vpack.c.b16 %v1137, %v1129
    %v1410 = vpack.c.b16 %v1146, %v1138
    %v1411 = vpack.c.b16 %v1147, %v1139
    %v1412 = vpack.c.b16 %v1148, %v1140
    %v1413 = vpack.c.b16 %v1149, %v1141
    %v1414 = vpack.c.b16 %v1150, %v1142
    %v1415 = vpack.c.b16 %v1151, %v1143
    %v1416 = vpack.c.b16 %v1152, %v1144
    %v1417 = vpack.c.b16 %v1153, %v1145
    %v1418 = vpack.c.b16 %v1162, %v1154
    %v1419 = vpack.c.b16 %v1163, %v1155
    %v1420 = vpack.c.b16 %v1164, %v1156
    %v1421 = vpack.c.b16 %v1165, %v1157
    %v1422 = vpack.c.b16 %v1166, %v1158
    %v1423 = vpack.c.b16 %v1167, %v1159
    %v1424 = vpack.c.b16 %v1168, %v1160
    %v1425 = vpack.c.b16 %v1169, %v1161
    %1682 = vmatprep.subr.bf16.mxu0 %v1171
    %1683 = vmatpush1.bf16.msra.mxu0 %v1170
    %1684 = vmatprep.subr.bf16.mxu0 %v1179
    %1685 = vmatpush1.bf16.msra.mxu0 %v1178
    %1686 = vmatprep.subr.bf16.mxu0 %v1187
    %1687 = vmatpush1.bf16.msra.mxu0 %v1186
    %1688 = vmatprep.subr.bf16.mxu0 %v1195
    %1689 = vmatpush1.bf16.msra.mxu0 %v1194
    %1690 = vmatprep.subr.bf16.mxu0 %v1203
    %1691 = vmatpush1.bf16.msra.mxu0 %v1202
    %1692 = vmatprep.subr.bf16.mxu0 %v1211
    %1693 = vmatpush1.bf16.msra.mxu0 %v1210
    %1694 = vmatprep.subr.bf16.mxu0 %v1219
    %1695 = vmatpush1.bf16.msra.mxu0 %v1218
    %1696 = vmatprep.subr.bf16.mxu0 %v1227
    %1697 = vmatpush1.bf16.msra.mxu0 %v1226
    %1698 = vmatprep.subr.bf16.mxu0 %v1235
    %1699 = vmatpush1.bf16.msra.mxu0 %v1234
    %1700 = vmatprep.subr.bf16.mxu0 %v1243
    %1701 = vmatpush1.bf16.msra.mxu0 %v1242
    %1702 = vmatprep.subr.bf16.mxu0 %v1251
    %1703 = vmatpush1.bf16.msra.mxu0 %v1250
    %1704 = vmatprep.subr.bf16.mxu0 %v1259
    %1705 = vmatpush1.bf16.msra.mxu0 %v1258
    %1706 = vmatprep.subr.bf16.mxu0 %v1267
    %1707 = vmatpush1.bf16.msra.mxu0 %v1266
    %1708 = vmatprep.subr.bf16.mxu0 %v1275
    %1709 = vmatpush1.bf16.msra.mxu0 %v1274
    %1710 = vmatprep.subr.bf16.mxu0 %v1283
    %1711 = vmatpush1.bf16.msra.mxu0 %v1282
    %1712 = vmatprep.subr.bf16.mxu0 %v1291
    %1713 = vmatpush1.bf16.msra.mxu0 %v1290
    %1714 = vmatprep.mubr.bf16.mxu0 %v395
    %1715 = vmatmul.mubr.bf16.gmra.mrb[0].mxu0 %v394
    %v1716 = vpop.f32.mrb[0].mxu0
    %v1717 = vadd.f32 %v332, %v1716
    %v1718 = vpop.f32.mrb[0].mxu0
    %v1719 = vadd.f32 %v336, %v1718
    %v1720 = vpop.f32.mrb[0].mxu0
    %v1721 = vpop.f32.mrb[0].mxu0
    %1722 = vdwg.mxu0
    %1723 = vmatprep.subr.bf16.mxu0 %v1299
    %1724 = vmatpush1.bf16.msra.mxu0 %v1298
    %1725 = vmatprep.subr.bf16.mxu0 %v1307
    %1726 = vmatpush1.bf16.msra.mxu0 %v1306
    %1727 = vmatprep.subr.bf16.mxu0 %v1315
    %1728 = vmatpush1.bf16.msra.mxu0 %v1314
    %1729 = vmatprep.subr.bf16.mxu0 %v1323
    %1730 = vmatpush1.bf16.msra.mxu0 %v1322
    %1731 = vmatprep.subr.bf16.mxu0 %v1331
    %1732 = vmatpush1.bf16.msra.mxu0 %v1330
    %1733 = vmatprep.subr.bf16.mxu0 %v1339
    %1734 = vmatpush1.bf16.msra.mxu0 %v1338
    %1735 = vmatprep.subr.bf16.mxu0 %v1347
    %1736 = vmatpush1.bf16.msra.mxu0 %v1346
    %1737 = vmatprep.subr.bf16.mxu0 %v1355
    %1738 = vmatpush1.bf16.msra.mxu0 %v1354
    %1739 = vmatprep.subr.bf16.mxu0 %v1363
    %1740 = vmatpush1.bf16.msra.mxu0 %v1362
    %1741 = vmatprep.subr.bf16.mxu0 %v1371
    %1742 = vmatpush1.bf16.msra.mxu0 %v1370
    %1743 = vmatprep.subr.bf16.mxu0 %v1379
    %1744 = vmatpush1.bf16.msra.mxu0 %v1378
    %1745 = vmatprep.subr.bf16.mxu0 %v1387
    %1746 = vmatpush1.bf16.msra.mxu0 %v1386
    %1747 = vmatprep.subr.bf16.mxu0 %v1395
    %1748 = vmatpush1.bf16.msra.mxu0 %v1394
    %1749 = vmatprep.subr.bf16.mxu0 %v1403
    %1750 = vmatpush1.bf16.msra.mxu0 %v1402
    %1751 = vmatprep.subr.bf16.mxu0 %v1411
    %1752 = vmatpush1.bf16.msra.mxu0 %v1410
    %1753 = vmatprep.subr.bf16.mxu0 %v1419
    %1754 = vmatpush1.bf16.msra.mxu0 %v1418
    %1755 = vmatprep.mubr.bf16.mxu0 %v397
    %1756 = vmatmul.mubr.bf16.gmra.mrb[0].mxu0 %v396
    %v1757 = vpop.f32.mrb[0].mxu0
    %v1758 = vadd.f32 %v1717, %v1757
    %v1759 = vpop.f32.mrb[0].mxu0
    %v1760 = vadd.f32 %v1719, %v1759
    %v1761 = vpop.f32.mrb[0].mxu0
    %v1762 = vpop.f32.mrb[0].mxu0
    %1763 = vdwg.mxu0
    %1764 = vmatprep.subr.bf16.mxu0 %v1173
    %1765 = vmatpush1.bf16.msra.mxu0 %v1172
    %1766 = vmatprep.subr.bf16.mxu0 %v1181
    %1767 = vmatpush1.bf16.msra.mxu0 %v1180
    %1768 = vmatprep.subr.bf16.mxu0 %v1189
    %1769 = vmatpush1.bf16.msra.mxu0 %v1188
    %1770 = vmatprep.subr.bf16.mxu0 %v1197
    %1771 = vmatpush1.bf16.msra.mxu0 %v1196
    %1772 = vmatprep.subr.bf16.mxu0 %v1205
    %1773 = vmatpush1.bf16.msra.mxu0 %v1204
    %1774 = vmatprep.subr.bf16.mxu0 %v1213
    %1775 = vmatpush1.bf16.msra.mxu0 %v1212
    %1776 = vmatprep.subr.bf16.mxu0 %v1221
    %1777 = vmatpush1.bf16.msra.mxu0 %v1220
    %1778 = vmatprep.subr.bf16.mxu0 %v1229
    %1779 = vmatpush1.bf16.msra.mxu0 %v1228
    %1780 = vmatprep.subr.bf16.mxu0 %v1237
    %1781 = vmatpush1.bf16.msra.mxu0 %v1236
    %1782 = vmatprep.subr.bf16.mxu0 %v1245
    %1783 = vmatpush1.bf16.msra.mxu0 %v1244
    %1784 = vmatprep.subr.bf16.mxu0 %v1253
    %1785 = vmatpush1.bf16.msra.mxu0 %v1252
    %1786 = vmatprep.subr.bf16.mxu0 %v1261
    %1787 = vmatpush1.bf16.msra.mxu0 %v1260
    %1788 = vmatprep.subr.bf16.mxu0 %v1269
    %1789 = vmatpush1.bf16.msra.mxu0 %v1268
    %1790 = vmatprep.subr.bf16.mxu0 %v1277
    %1791 = vmatpush1.bf16.msra.mxu0 %v1276
    %1792 = vmatprep.subr.bf16.mxu0 %v1285
    %1793 = vmatpush1.bf16.msra.mxu0 %v1284
    %1794 = vmatprep.subr.bf16.mxu0 %v1293
    %1795 = vmatpush1.bf16.msra.mxu0 %v1292
    %1796 = vmatprep.mubr.bf16.mxu0 %v395
    %1797 = vmatmul.mubr.bf16.gmra.mrb[0].mxu0 %v394
    %v1798 = vpop.f32.mrb[0].mxu0
    %v1799 = vadd.f32 %v340, %v1798
    %v1800 = vpop.f32.mrb[0].mxu0
    %v1801 = vadd.f32 %v344, %v1800
    %v1802 = vpop.f32.mrb[0].mxu0
    %v1803 = vpop.f32.mrb[0].mxu0
    %1804 = vdwg.mxu0
    %1805 = vmatprep.subr.bf16.mxu0 %v1301
    %1806 = vmatpush1.bf16.msra.mxu0 %v1300
    %1807 = vmatprep.subr.bf16.mxu0 %v1309
    %1808 = vmatpush1.bf16.msra.mxu0 %v1308
    %1809 = vmatprep.subr.bf16.mxu0 %v1317
    %1810 = vmatpush1.bf16.msra.mxu0 %v1316
    %1811 = vmatprep.subr.bf16.mxu0 %v1325
    %1812 = vmatpush1.bf16.msra.mxu0 %v1324
    %1813 = vmatprep.subr.bf16.mxu0 %v1333
    %1814 = vmatpush1.bf16.msra.mxu0 %v1332
    %1815 = vmatprep.subr.bf16.mxu0 %v1341
    %1816 = vmatpush1.bf16.msra.mxu0 %v1340
    %1817 = vmatprep.subr.bf16.mxu0 %v1349
    %1818 = vmatpush1.bf16.msra.mxu0 %v1348
    %1819 = vmatprep.subr.bf16.mxu0 %v1357
    %1820 = vmatpush1.bf16.msra.mxu0 %v1356
    %1821 = vmatprep.subr.bf16.mxu0 %v1365
    %1822 = vmatpush1.bf16.msra.mxu0 %v1364
    %1823 = vmatprep.subr.bf16.mxu0 %v1373
    %1824 = vmatpush1.bf16.msra.mxu0 %v1372
    %1825 = vmatprep.subr.bf16.mxu0 %v1381
    %1826 = vmatpush1.bf16.msra.mxu0 %v1380
    %1827 = vmatprep.subr.bf16.mxu0 %v1389
    %1828 = vmatpush1.bf16.msra.mxu0 %v1388
    %1829 = vmatprep.subr.bf16.mxu0 %v1397
    %1830 = vmatpush1.bf16.msra.mxu0 %v1396
    %1831 = vmatprep.subr.bf16.mxu0 %v1405
    %1832 = vmatpush1.bf16.msra.mxu0 %v1404
    %1833 = vmatprep.subr.bf16.mxu0 %v1413
    %1834 = vmatpush1.bf16.msra.mxu0 %v1412
    %1835 = vmatprep.subr.bf16.mxu0 %v1421
    %1836 = vmatpush1.bf16.msra.mxu0 %v1420
    %1837 = vmatprep.mubr.bf16.mxu0 %v397
    %1838 = vmatmul.mubr.bf16.gmra.mrb[0].mxu0 %v396
    %v1839 = vpop.f32.mrb[0].mxu0
    %v1840 = vadd.f32 %v1799, %v1839
    %v1841 = vpop.f32.mrb[0].mxu0
    %v1842 = vadd.f32 %v1801, %v1841
    %v1843 = vpop.f32.mrb[0].mxu0
    %v1844 = vpop.f32.mrb[0].mxu0
    %1845 = vdwg.mxu0
    %1846 = vmatprep.subr.bf16.mxu0 %v1175
    %1847 = vmatpush1.bf16.msra.mxu0 %v1174
    %1848 = vmatprep.subr.bf16.mxu0 %v1183
    %1849 = vmatpush1.bf16.msra.mxu0 %v1182
    %1850 = vmatprep.subr.bf16.mxu0 %v1191
    %1851 = vmatpush1.bf16.msra.mxu0 %v1190
    %1852 = vmatprep.subr.bf16.mxu0 %v1199
    %1853 = vmatpush1.bf16.msra.mxu0 %v1198
    %1854 = vmatprep.subr.bf16.mxu0 %v1207
    %1855 = vmatpush1.bf16.msra.mxu0 %v1206
    %1856 = vmatprep.subr.bf16.mxu0 %v1215
    %1857 = vmatpush1.bf16.msra.mxu0 %v1214
    %1858 = vmatprep.subr.bf16.mxu0 %v1223
    %1859 = vmatpush1.bf16.msra.mxu0 %v1222
    %1860 = vmatprep.subr.bf16.mxu0 %v1231
    %1861 = vmatpush1.bf16.msra.mxu0 %v1230
    %1862 = vmatprep.subr.bf16.mxu0 %v1239
    %1863 = vmatpush1.bf16.msra.mxu0 %v1238
    %1864 = vmatprep.subr.bf16.mxu0 %v1247
    %1865 = vmatpush1.bf16.msra.mxu0 %v1246
    %1866 = vmatprep.subr.bf16.mxu0 %v1255
    %1867 = vmatpush1.bf16.msra.mxu0 %v1254
    %1868 = vmatprep.subr.bf16.mxu0 %v1263
    %1869 = vmatpush1.bf16.msra.mxu0 %v1262
    %1870 = vmatprep.subr.bf16.mxu0 %v1271
    %1871 = vmatpush1.bf16.msra.mxu0 %v1270
    %1872 = vmatprep.subr.bf16.mxu0 %v1279
    %1873 = vmatpush1.bf16.msra.mxu0 %v1278
    %1874 = vmatprep.subr.bf16.mxu0 %v1287
    %1875 = vmatpush1.bf16.msra.mxu0 %v1286
    %1876 = vmatprep.subr.bf16.mxu0 %v1295
    %1877 = vmatpush1.bf16.msra.mxu0 %v1294
    %1878 = vmatprep.mubr.bf16.mxu0 %v395
    %1879 = vmatmul.mubr.bf16.gmra.mrb[0].mxu0 %v394
    %v1880 = vpop.f32.mrb[0].mxu0
    %v1881 = vadd.f32 %v348, %v1880
    %v1882 = vpop.f32.mrb[0].mxu0
    %v1883 = vadd.f32 %v352, %v1882
    %v1884 = vpop.f32.mrb[0].mxu0
    %v1885 = vpop.f32.mrb[0].mxu0
    %1886 = vdwg.mxu0
    %1887 = vmatprep.subr.bf16.mxu0 %v1303
    %1888 = vmatpush1.bf16.msra.mxu0 %v1302
    %1889 = vmatprep.subr.bf16.mxu0 %v1311
    %1890 = vmatpush1.bf16.msra.mxu0 %v1310
    %1891 = vmatprep.subr.bf16.mxu0 %v1319
    %1892 = vmatpush1.bf16.msra.mxu0 %v1318
    %1893 = vmatprep.subr.bf16.mxu0 %v1327
    %1894 = vmatpush1.bf16.msra.mxu0 %v1326
    %1895 = vmatprep.subr.bf16.mxu0 %v1335
    %1896 = vmatpush1.bf16.msra.mxu0 %v1334
    %1897 = vmatprep.subr.bf16.mxu0 %v1343
    %1898 = vmatpush1.bf16.msra.mxu0 %v1342
    %1899 = vmatprep.subr.bf16.mxu0 %v1351
    %1900 = vmatpush1.bf16.msra.mxu0 %v1350
    %1901 = vmatprep.subr.bf16.mxu0 %v1359
    %1902 = vmatpush1.bf16.msra.mxu0 %v1358
    %1903 = vmatprep.subr.bf16.mxu0 %v1367
    %1904 = vmatpush1.bf16.msra.mxu0 %v1366
    %1905 = vmatprep.subr.bf16.mxu0 %v1375
    %1906 = vmatpush1.bf16.msra.mxu0 %v1374
    %1907 = vmatprep.subr.bf16.mxu0 %v1383
    %1908 = vmatpush1.bf16.msra.mxu0 %v1382
    %1909 = vmatprep.subr.bf16.mxu0 %v1391
    %1910 = vmatpush1.bf16.msra.mxu0 %v1390
    %1911 = vmatprep.subr.bf16.mxu0 %v1399
    %1912 = vmatpush1.bf16.msra.mxu0 %v1398
    %1913 = vmatprep.subr.bf16.mxu0 %v1407
    %1914 = vmatpush1.bf16.msra.mxu0 %v1406
    %1915 = vmatprep.subr.bf16.mxu0 %v1415
    %1916 = vmatpush1.bf16.msra.mxu0 %v1414
    %1917 = vmatprep.subr.bf16.mxu0 %v1423
    %1918 = vmatpush1.bf16.msra.mxu0 %v1422
    %1919 = vmatprep.mubr.bf16.mxu0 %v397
    %1920 = vmatmul.mubr.bf16.gmra.mrb[0].mxu0 %v396
    %v1921 = vpop.f32.mrb[0].mxu0
    %v1922 = vadd.f32 %v1881, %v1921
    %v1923 = vpop.f32.mrb[0].mxu0
    %v1924 = vadd.f32 %v1883, %v1923
    %v1925 = vpop.f32.mrb[0].mxu0
    %v1926 = vpop.f32.mrb[0].mxu0
    %1927 = vdwg.mxu0
    %1928 = vmatprep.subr.bf16.mxu0 %v1177
    %1929 = vmatpush1.bf16.msra.mxu0 %v1176
    %1930 = vmatprep.subr.bf16.mxu0 %v1185
    %1931 = vmatpush1.bf16.msra.mxu0 %v1184
    %1932 = vmatprep.subr.bf16.mxu0 %v1193
    %1933 = vmatpush1.bf16.msra.mxu0 %v1192
    %1934 = vmatprep.subr.bf16.mxu0 %v1201
    %1935 = vmatpush1.bf16.msra.mxu0 %v1200
    %1936 = vmatprep.subr.bf16.mxu0 %v1209
    %1937 = vmatpush1.bf16.msra.mxu0 %v1208
    %1938 = vmatprep.subr.bf16.mxu0 %v1217
    %1939 = vmatpush1.bf16.msra.mxu0 %v1216
    %1940 = vmatprep.subr.bf16.mxu0 %v1225
    %1941 = vmatpush1.bf16.msra.mxu0 %v1224
    %1942 = vmatprep.subr.bf16.mxu0 %v1233
    %1943 = vmatpush1.bf16.msra.mxu0 %v1232
    %1944 = vmatprep.subr.bf16.mxu0 %v1241
    %1945 = vmatpush1.bf16.msra.mxu0 %v1240
    %1946 = vmatprep.subr.bf16.mxu0 %v1249
    %1947 = vmatpush1.bf16.msra.mxu0 %v1248
    %1948 = vmatprep.subr.bf16.mxu0 %v1257
    %1949 = vmatpush1.bf16.msra.mxu0 %v1256
    %1950 = vmatprep.subr.bf16.mxu0 %v1265
    %1951 = vmatpush1.bf16.msra.mxu0 %v1264
    %1952 = vmatprep.subr.bf16.mxu0 %v1273
    %1953 = vmatpush1.bf16.msra.mxu0 %v1272
    %1954 = vmatprep.subr.bf16.mxu0 %v1281
    %1955 = vmatpush1.bf16.msra.mxu0 %v1280
    %1956 = vmatprep.subr.bf16.mxu0 %v1289
    %1957 = vmatpush1.bf16.msra.mxu0 %v1288
    %1958 = vmatprep.subr.bf16.mxu0 %v1297
    %1959 = vmatpush1.bf16.msra.mxu0 %v1296
    %1960 = vmatprep.mubr.bf16.mxu0 %v395
    %1961 = vmatmul.mubr.bf16.gmra.mrb[0].mxu0 %v394
    %v1962 = vpop.f32.mrb[0].mxu0
    %v1963 = vadd.f32 %v356, %v1962
    %v1964 = vpop.f32.mrb[0].mxu0
    %v1965 = vadd.f32 %v360, %v1964
    %v1966 = vpop.f32.mrb[0].mxu0
    %v1967 = vpop.f32.mrb[0].mxu0
    %1968 = vdwg.mxu0
    %1969 = vmatprep.subr.bf16.mxu0 %v1305
    %1970 = vmatpush1.bf16.msra.mxu0 %v1304
    %1971 = vmatprep.subr.bf16.mxu0 %v1313
    %1972 = vmatpush1.bf16.msra.mxu0 %v1312
    %1973 = vmatprep.subr.bf16.mxu0 %v1321
    %1974 = vmatpush1.bf16.msra.mxu0 %v1320
    %1975 = vmatprep.subr.bf16.mxu0 %v1329
    %1976 = vmatpush1.bf16.msra.mxu0 %v1328
    %1977 = vmatprep.subr.bf16.mxu0 %v1337
    %1978 = vmatpush1.bf16.msra.mxu0 %v1336
    %1979 = vmatprep.subr.bf16.mxu0 %v1345
    %1980 = vmatpush1.bf16.msra.mxu0 %v1344
    %1981 = vmatprep.subr.bf16.mxu0 %v1353
    %1982 = vmatpush1.bf16.msra.mxu0 %v1352
    %1983 = vmatprep.subr.bf16.mxu0 %v1361
    %1984 = vmatpush1.bf16.msra.mxu0 %v1360
    %1985 = vmatprep.subr.bf16.mxu0 %v1369
    %1986 = vmatpush1.bf16.msra.mxu0 %v1368
    %1987 = vmatprep.subr.bf16.mxu0 %v1377
    %1988 = vmatpush1.bf16.msra.mxu0 %v1376
    %1989 = vmatprep.subr.bf16.mxu0 %v1385
    %1990 = vmatpush1.bf16.msra.mxu0 %v1384
    %1991 = vmatprep.subr.bf16.mxu0 %v1393
    %1992 = vmatpush1.bf16.msra.mxu0 %v1392
    %1993 = vmatprep.subr.bf16.mxu0 %v1401
    %1994 = vmatpush1.bf16.msra.mxu0 %v1400
    %1995 = vmatprep.subr.bf16.mxu0 %v1409
    %1996 = vmatpush1.bf16.msra.mxu0 %v1408
    %1997 = vmatprep.subr.bf16.mxu0 %v1417
    %1998 = vmatpush1.bf16.msra.mxu0 %v1416
    %1999 = vmatprep.subr.bf16.mxu0 %v1425
    %2000 = vmatpush1.bf16.msra.mxu0 %v1424
    %2001 = vmatprep.mubr.bf16.mxu0 %v397
    %2002 = vmatmul.mubr.bf16.gmra.mrb[0].mxu0 %v396
    %v2003 = vpop.f32.mrb[0].mxu0
    %v2004 = vadd.f32 %v1963, %v2003
    %v2005 = vpop.f32.mrb[0].mxu0
    %v2006 = vadd.f32 %v1965, %v2005
    %v2007 = vpop.f32.mrb[0].mxu0
    %v2008 = vpop.f32.mrb[0].mxu0
    %2009 = vdwg.mxu0
    %v2018 = vcombine.low %v1758, %v1760
    %v2019 = vcombine.low %v1840, %v1842
    %v2021 = vunpack.c.l.s4 1983009808
    %v2022 = vunpack.c.0.s8 %v2021
    %v2023 = vlaneseq
    %v2024 = vshrl.u32 %v2023, 7
    %v2025 = vsub.s32 %v2022, %v2024
    %v2026 = vrot.slane %v2018, %v2025
    %v2028 = vunpack.c.l.s4 1983009808
    %v2029 = vunpack.c.0.s8 %v2028
    %v2030 = vlaneseq
    %v2031 = vshrl.u32 %v2030, 7
    %v2032 = vsub.s32 %v2029, %v2031
    %v2033 = vrot.slane %v2019, %v2032
    %v2034 = vcombine.low %v2026, %v2033
    %v2035 = vcombine.low %v1922, %v1924
    %v2036 = vcombine.low %v2004, %v2006
    %v2038 = vunpack.c.l.s4 1983009808
    %v2039 = vunpack.c.0.s8 %v2038
    %v2040 = vlaneseq
    %v2041 = vshrl.u32 %v2040, 7
    %v2042 = vsub.s32 %v2039, %v2041
    %v2043 = vrot.slane %v2035, %v2042
    %v2045 = vunpack.c.l.s4 1983009808
    %v2046 = vunpack.c.0.s8 %v2045
    %v2047 = vlaneseq
    %v2048 = vshrl.u32 %v2047, 7
    %v2049 = vsub.s32 %v2046, %v2048
    %v2050 = vrot.slane %v2036, %v2049
    %v2051 = vcombine.low %v2043, %v2050
    %2054 = vst [vmem:[#allocation2] sm:$0xff] %v2034
    %2055 = vst [vmem:[#allocation2 + $0x8] sm:$0xff] %v2051
    // Predicated region
    $region14: #{_lambda_.13} parent=1 // pred_check
      _
    $region15: #{_lambda_.13} parent=1 // pred_check_branch
      %2057 = sbr.rel (0) target = $region17
    $region16: #{_lambda_.13} parent=1 // pred_region
      %s2059 = ssub.s32 256, 256
      %2060 = vsyncadd [#allocation3], %s2059
      %s2062 = sshll.u32 [#allocation2], 4
      %s2063 = int_to_ptr.vmem [resolvable:$true] %s2062
      %2065 = dma.vmem_to_hbm [thread:$0]  %s2063, 256, %s3, [#allocation3]
    $region17: #{_lambda_.13} parent=1 // pred_fallthru
      _
    // Predicated region
    $region18: #{_lambda_.13} parent=1 // pred_check
      _
    $region19: #{_lambda_.13} parent=1 // pred_check_branch
      %2067 = sbr.rel (0) target = $region21
    $region20: #{_lambda_.13} parent=1 // pred_region
      %2068 = dma.done [#allocation3], 256
    $region21: #{_lambda_.13} parent=1 // pred_fallthru
      _
    %2069 = vsyncpa [#allocation3], 1

</llo_original>
